<compile_context>
chip_gen: v5e
topology: v5e:2x2
jax: 0.10.0
libtpu: 0.0.40
codegen_flags: <defaults>
</compile_context>

<pallas_src>
from functools import partial

import numpy as np

import jax
import jax.numpy as jnp
from jax import lax
from jax.experimental import pallas as pl
from jax.experimental.pallas import tpu as pltpu

BN_EPS = 1e-5


# ---------------------------------------------------------------------------
# Host-side weight preparation: conv weights -> Toeplitz / block-diagonal
# matrices over the fused (W*C) lane dimension; pooling / padding / flatten ->
# constant 0/1 selection matrices.  Built once with numpy, outside jit.
# ---------------------------------------------------------------------------
def _toeplitz(w, w_in):
    """w: (KH, KW, Cin, Cout) -> (KH, W_in*Cin, Wo*Cout) banded matmul weights."""
    khs, kws, cin, cout = w.shape
    wo = w_in - kws + 1
    m = np.zeros((khs, w_in * cin, wo * cout), np.float32)
    w_np = np.asarray(w)
    for kh in range(khs):
        for ow in range(wo):
            for kw in range(kws):
                iw = ow + kw
                m[kh, iw * cin:(iw + 1) * cin, ow * cout:(ow + 1) * cout] = w_np[kh, kw]
    return jnp.asarray(m)


def _blockdiag(w, w_in, shift=0):
    """1x1 conv as a block-diagonal matmul.  `shift` shifts the output column
    blocks (folds the W-direction zero padding of convblock6 into the weight)."""
    w_np = np.asarray(w).reshape(w.shape[-2], w.shape[-1])
    cin, cout = w_np.shape
    w_out = w_in + 2 * shift
    m = np.zeros((w_in * cin, w_out * cout), np.float32)
    for iw in range(w_in):
        ow = iw + shift
        m[iw * cin:(iw + 1) * cin, ow * cout:(ow + 1) * cout] = w_np
    return jnp.asarray(m)


def _hpool_sel(h_real, pad):
    """Row-selection matrices for a 2x2/stride-2 pool over rows of an
    (optionally zero-padded by `pad`) activation: pooled = max(A @ x, B @ x)."""
    h_out = (h_real + 2 * pad) // 2
    a = np.zeros((h_out, h_real), np.float32)
    b = np.zeros((h_out, h_real), np.float32)
    for i in range(h_out):
        r0 = 2 * i - pad
        r1 = 2 * i + 1 - pad
        if 0 <= r0 < h_real:
            a[i, r0] = 1.0
        if 0 <= r1 < h_real:
            b[i, r1] = 1.0
    return jnp.asarray(a), jnp.asarray(b)


def _wpool_sel(w_in, c):
    """Lane-selection matrices for the W direction of the 2x2 pool:
    pooled = max(x @ E, x @ O) on the (W*C) lane dim."""
    w_out = w_in // 2
    e = np.zeros((w_in * c, w_out * c), np.float32)
    o = np.zeros((w_in * c, w_out * c), np.float32)
    for ow in range(w_out):
        for cc in range(c):
            e[(2 * ow) * c + cc, ow * c + cc] = 1.0
            o[(2 * ow + 1) * c + cc, ow * c + cc] = 1.0
    return jnp.asarray(e), jnp.asarray(o)


def _tile_affine(v, w_out):
    """Per-channel scale/shift -> per-lane (1, W_out*C) row for the fused layout."""
    return jnp.asarray(np.tile(np.asarray(v), w_out).reshape(1, -1))


def _fc_perm(fc_w, fc_b):
    """Fold the NCHW flatten (index c*9 + h*3 + w) into the FC weight for the
    kernel's (h, w*10 + c) layout: returns (3, 30, 10) weight and (1, 10) bias."""
    w_np = np.asarray(fc_w)
    m = np.zeros((3, 30, 10), np.float32)
    for h in range(3):
        for w in range(3):
            for c in range(10):
                m[h, w * 10 + c, :] = w_np[c * 9 + h * 3 + w, :]
    return jnp.asarray(m), jnp.asarray(np.asarray(fc_b).reshape(1, 10))


_ARG_ORDER = [
    "wt1", "a1", "c1", "wt2", "a2", "c2", "wb3",
    "p1ha", "p1hb", "p1we", "p1wo",
    "wt4", "a4", "c4", "wt5", "a5", "c5", "wb6",
    "p2ha", "p2hb", "p2we", "p2wo",
    "wt7", "a7", "c7", "wb8", "wfc", "bfc",
]


def prepare_kernel_params(p):
    kp = {}
    kp["wt1"] = _toeplitz(p["w1"], 28)                       # (3, 28, 208)
    kp["a1"], kp["c1"] = _tile_affine(p["s1"], 26), _tile_affine(p["b1"], 26)
    kp["wt2"] = _toeplitz(p["w2"], 26)                       # (3, 208, 384)
    kp["a2"], kp["c2"] = _tile_affine(p["s2"], 24), _tile_affine(p["b2"], 24)
    kp["wb3"] = _blockdiag(p["w3"], 24)                      # (384, 192)
    kp["p1ha"], kp["p1hb"] = _hpool_sel(24, 0)               # (12, 24)
    kp["p1we"], kp["p1wo"] = _wpool_sel(24, 8)               # (192, 96)
    kp["wt4"] = _toeplitz(p["w4"], 12)                       # (3, 96, 160)
    kp["a4"], kp["c4"] = _tile_affine(p["s4"], 10), _tile_affine(p["b4"], 10)
    kp["wt5"] = _toeplitz(p["w5"], 10)                       # (3, 160, 64)
    kp["a5"], kp["c5"] = _tile_affine(p["s5"], 8), _tile_affine(p["b5"], 8)
    kp["wb6"] = _blockdiag(p["w6"], 8, shift=1)              # (64, 160), W-pad folded
    kp["p2ha"], kp["p2hb"] = _hpool_sel(8, 1)                # (5, 8), H-pad folded
    kp["p2we"], kp["p2wo"] = _wpool_sel(10, 16)              # (160, 80)
    kp["wt7"] = _toeplitz(p["w7"], 5)                        # (3, 80, 24)
    kp["a7"], kp["c7"] = _tile_affine(p["s7"], 3), _tile_affine(p["b7"], 3)
    kp["wb8"] = _blockdiag(p["w8"], 3)                       # (24, 30)
    kp["wfc"], kp["bfc"] = _fc_perm(p["fc_w"], p["fc_b"])    # (3, 30, 10), (1, 10)
    return kp


# ---------------------------------------------------------------------------
# Fused forward kernel: one grid step == one image, everything VMEM-resident.
# Activations are (H, W*C) f32 slabs; convs/pools are plain 2-D MXU matmuls.
# ---------------------------------------------------------------------------
def _model1_fused_kernel(
        x_ref,
        wt1, a1, c1, wt2, a2, c2, wb3,
        p1ha, p1hb, p1we, p1wo,
        wt4, a4, c4, wt5, a5, c5, wb6,
        p2ha, p2hb, p2we, p2wo,
        wt7, a7, c7, wb8, wfc, bfc,
        o_ref):
    f32 = jnp.float32

    def conv3(x, wt_ref, ho):
        # 3x3 conv == 3 deep-K matmuls (one per kernel row) against Toeplitz weights.
        acc = jnp.dot(x[0:ho, :], wt_ref[0], preferred_element_type=f32)
        acc = acc + jnp.dot(x[1:ho + 1, :], wt_ref[1], preferred_element_type=f32)
        acc = acc + jnp.dot(x[2:ho + 2, :], wt_ref[2], preferred_element_type=f32)
        return acc

    def relu_bn(y, s_ref, t_ref):
        # Module order is Conv -> ReLU -> BatchNorm (eval stats folded into affine).
        return jnp.maximum(y, 0.0) * s_ref[...] + t_ref[...]

    def pool(y, ha, hb, we, wo):
        # 2x2/stride-2 max pool via constant 0/1 selection matmuls + elementwise max.
        t = jnp.maximum(jnp.dot(ha[...], y, preferred_element_type=f32),
                        jnp.dot(hb[...], y, preferred_element_type=f32))
        return jnp.maximum(jnp.dot(t, we[...], preferred_element_type=f32),
                           jnp.dot(t, wo[...], preferred_element_type=f32))

    x = x_ref[0]                                                # (28, 28)
    x = relu_bn(conv3(x, wt1, 26), a1, c1)                      # (26, 208)  c8
    x = relu_bn(conv3(x, wt2, 24), a2, c2)                      # (24, 384)  c16
    x = jnp.dot(x, wb3[...], preferred_element_type=f32)        # (24, 192)  c8 (1x1)
    x = pool(x, p1ha, p1hb, p1we, p1wo)                         # (12, 96)
    x = relu_bn(conv3(x, wt4, 10), a4, c4)                      # (10, 160)  c16
    x = relu_bn(conv3(x, wt5, 8), a5, c5)                       # (8, 64)    c8
    x = jnp.dot(x, wb6[...], preferred_element_type=f32)        # (8, 160)   1x1, W-padded
    x = pool(x, p2ha, p2hb, p2we, p2wo)                         # (5, 80)    (H-pad folded)
    x = relu_bn(conv3(x, wt7, 3), a7, c7)                       # (3, 24)    c8
    x = jnp.dot(x, wb8[...], preferred_element_type=f32)        # (3, 30)    c10 (1x1)

    # Linear(90, 10) with the NCHW flatten folded into the permuted weight.
    logits = bfc[...]                                           # (1, 10)
    for h in range(3):
        logits = logits + jnp.dot(x[h:h + 1, :], wfc[h], preferred_element_type=f32)

    # log_softmax
    m = jnp.max(logits, axis=-1, keepdims=True)
    s = logits - m
    o_ref[0] = s - jnp.log(jnp.sum(jnp.exp(s), axis=-1, keepdims=True))


def _const_index_map(ndim):
    return lambda i: (0,) * ndim


def model1_forward(kparams, x_nchw):
    n = x_nchw.shape[0]
    assert x_nchw.shape[1:] == (1, 28, 28), "Linear(90,10) implies 1x28x28 input"
    x = x_nchw.astype(jnp.float32).reshape(n, 28, 28)           # squeeze C=1 (free)

    weights = [kparams[k] for k in _ARG_ORDER]
    in_specs = [pl.BlockSpec((1, 28, 28), lambda i: (i, 0, 0))]
    in_specs += [pl.BlockSpec(a.shape, _const_index_map(a.ndim)) for a in weights]

    out = pl.pallas_call(
        _model1_fused_kernel,
        out_shape=jax.ShapeDtypeStruct((n, 1, 10), jnp.float32),
        grid=(n,),
        in_specs=in_specs,
        out_specs=pl.BlockSpec((1, 1, 10), lambda i: (i, 0, 0)),
        compiler_params=pltpu.CompilerParams(
            dimension_semantics=("parallel",)),
    )(x, *weights)
    return out.reshape(n, 10)


# ---------------------------------------------------------------------------
# Synthetic deterministic parameters + a pure-JAX reference for validation.
# ---------------------------------------------------------------------------
def _fold_bn(gamma, beta, mean, var):
    scale = gamma / jnp.sqrt(var + BN_EPS)
    shift = beta - mean * scale
    return scale, shift


def init_params(key):
    p = {}

    def conv_w(k, kh, kw, cin, cout):
        return 0.1 * jax.random.normal(k, (kh, kw, cin, cout), jnp.float32)

    def bn(k, c):
        k1, k2, k3, k4 = jax.random.split(k, 4)
        gamma = 1.0 + 0.1 * jax.random.normal(k1, (c,), jnp.float32)
        beta = 0.1 * jax.random.normal(k2, (c,), jnp.float32)
        mean = 0.1 * jax.random.normal(k3, (c,), jnp.float32)
        var = jax.random.uniform(k4, (c,), jnp.float32, 0.5, 1.5)
        return _fold_bn(gamma, beta, mean, var)

    ks = jax.random.split(key, 16)
    p["w1"] = conv_w(ks[0], 3, 3, 1, 8);   p["s1"], p["b1"] = bn(ks[1], 8)
    p["w2"] = conv_w(ks[2], 3, 3, 8, 16);  p["s2"], p["b2"] = bn(ks[3], 16)
    p["w3"] = conv_w(ks[4], 1, 1, 16, 8)
    p["w4"] = conv_w(ks[5], 3, 3, 8, 16);  p["s4"], p["b4"] = bn(ks[6], 16)
    p["w5"] = conv_w(ks[7], 3, 3, 16, 8);  p["s5"], p["b5"] = bn(ks[8], 8)
    p["w6"] = conv_w(ks[9], 1, 1, 8, 16)
    p["w7"] = conv_w(ks[10], 3, 3, 16, 8); p["s7"], p["b7"] = bn(ks[11], 8)
    p["w8"] = conv_w(ks[12], 1, 1, 8, 10)
    p["fc_w"] = 0.1 * jax.random.normal(ks[13], (90, 10), jnp.float32)
    p["fc_b"] = 0.1 * jax.random.normal(ks[14], (10,), jnp.float32)
    return p


def reference_forward(p, x_nchw):
    """Plain-JAX/XLA reference of the same module (eval mode), for validation."""
    prec = lax.Precision.HIGHEST
    x = x_nchw.astype(jnp.float32)

    def conv(x, w, padding=0):
        return lax.conv_general_dilated(
            x, w, (1, 1), [(padding, padding), (padding, padding)],
            dimension_numbers=("NCHW", "HWIO", "NCHW"), precision=prec)

    def relu_bn(x, s, b):
        x = jnp.maximum(x, 0.0)
        return x * s[None, :, None, None] + b[None, :, None, None]

    def pool(x):
        return lax.reduce_window(x, -jnp.inf, lax.max,
                                 (1, 1, 2, 2), (1, 1, 2, 2), "VALID")

    x = relu_bn(conv(x, p["w1"]), p["s1"], p["b1"])
    x = relu_bn(conv(x, p["w2"]), p["s2"], p["b2"])
    x = conv(x, p["w3"])
    x = pool(x)
    x = relu_bn(conv(x, p["w4"]), p["s4"], p["b4"])
    x = relu_bn(conv(x, p["w5"]), p["s5"], p["b5"])
    x = conv(x, p["w6"], padding=1)
    x = pool(x)
    x = relu_bn(conv(x, p["w7"]), p["s7"], p["b7"])
    x = conv(x, p["w8"])
    flat = x.reshape(x.shape[0], -1)
    logits = jnp.dot(flat, p["fc_w"], precision=prec) + p["fc_b"]
    return jax.nn.log_softmax(logits, axis=-1)


if __name__ == "__main__":
    key = jax.random.PRNGKey(0)
    k_param, k_x = jax.random.split(key)
    params = init_params(k_param)
    kparams = prepare_kernel_params(params)

    # Linear(90, 10) implies a 28x28 single-channel input (MNIST-sized).
    x = jax.random.normal(k_x, (2, 1, 28, 28), jnp.float32)

    out = jax.jit(model1_forward)(kparams, x)
    out = jax.block_until_ready(out)
    assert out.shape == (2, 10)

    ref = jax.block_until_ready(jax.jit(reference_forward)(params, x))

    # log_softmax rows should sum (in prob space) to ~1, and match the reference.
    assert bool(jnp.all(jnp.abs(jnp.sum(jnp.exp(out), axis=-1) - 1.0) < 1e-4))
    assert bool(jnp.allclose(out, ref, atol=1e-2, rtol=1e-2)), (
        "max abs diff vs reference: " + str(float(jnp.max(jnp.abs(out - ref)))))
    print("KERNEL_OK")
</pallas_src>

<mosaic_0001>
module attributes {stable_mosaic.version = 11 : i64} {
  func.func @_model1_fused_kernel(%arg0: i32, %arg1: memref<1x28x28xf32, #tpu.memory_space<vmem>>, %arg2: memref<3x28x208xf32, #tpu.memory_space<vmem>>, %arg3: memref<1x208xf32, #tpu.memory_space<vmem>>, %arg4: memref<1x208xf32, #tpu.memory_space<vmem>>, %arg5: memref<3x208x384xf32, #tpu.memory_space<vmem>>, %arg6: memref<1x384xf32, #tpu.memory_space<vmem>>, %arg7: memref<1x384xf32, #tpu.memory_space<vmem>>, %arg8: memref<384x192xf32, #tpu.memory_space<vmem>>, %arg9: memref<12x24xf32, #tpu.memory_space<vmem>>, %arg10: memref<12x24xf32, #tpu.memory_space<vmem>>, %arg11: memref<192x96xf32, #tpu.memory_space<vmem>>, %arg12: memref<192x96xf32, #tpu.memory_space<vmem>>, %arg13: memref<3x96x160xf32, #tpu.memory_space<vmem>>, %arg14: memref<1x160xf32, #tpu.memory_space<vmem>>, %arg15: memref<1x160xf32, #tpu.memory_space<vmem>>, %arg16: memref<3x160x64xf32, #tpu.memory_space<vmem>>, %arg17: memref<1x64xf32, #tpu.memory_space<vmem>>, %arg18: memref<1x64xf32, #tpu.memory_space<vmem>>, %arg19: memref<64x160xf32, #tpu.memory_space<vmem>>, %arg20: memref<5x8xf32, #tpu.memory_space<vmem>>, %arg21: memref<5x8xf32, #tpu.memory_space<vmem>>, %arg22: memref<160x80xf32, #tpu.memory_space<vmem>>, %arg23: memref<160x80xf32, #tpu.memory_space<vmem>>, %arg24: memref<3x80x24xf32, #tpu.memory_space<vmem>>, %arg25: memref<1x24xf32, #tpu.memory_space<vmem>>, %arg26: memref<1x24xf32, #tpu.memory_space<vmem>>, %arg27: memref<24x30xf32, #tpu.memory_space<vmem>>, %arg28: memref<3x30x10xf32, #tpu.memory_space<vmem>>, %arg29: memref<1x10xf32, #tpu.memory_space<vmem>>, %arg30: memref<1x1x10xf32, #tpu.memory_space<vmem>>) attributes {dimension_semantics = [#tpu.dimension_semantics<parallel>], iteration_bounds = array<i64: 2>, scalar_prefetch = 0 : i64, scratch_operands = 0 : i64, tpu.core_type = #tpu.core_type<tc>, window_params = [{transform_indices = @transform_0, window_bounds = array<i64: 1, 28, 28>}, {pipeline_mode = #tpu.pipeline_mode<synchronous>, transform_indices = @transform_1, window_bounds = array<i64: 3, 28, 208>}, {pipeline_mode = #tpu.pipeline_mode<synchronous>, transform_indices = @transform_2, window_bounds = array<i64: 1, 208>}, {pipeline_mode = #tpu.pipeline_mode<synchronous>, transform_indices = @transform_3, window_bounds = array<i64: 1, 208>}, {pipeline_mode = #tpu.pipeline_mode<synchronous>, transform_indices = @transform_4, window_bounds = array<i64: 3, 208, 384>}, {pipeline_mode = #tpu.pipeline_mode<synchronous>, transform_indices = @transform_5, window_bounds = array<i64: 1, 384>}, {pipeline_mode = #tpu.pipeline_mode<synchronous>, transform_indices = @transform_6, window_bounds = array<i64: 1, 384>}, {pipeline_mode = #tpu.pipeline_mode<synchronous>, transform_indices = @transform_7, window_bounds = array<i64: 384, 192>}, {pipeline_mode = #tpu.pipeline_mode<synchronous>, transform_indices = @transform_8, window_bounds = array<i64: 12, 24>}, {pipeline_mode = #tpu.pipeline_mode<synchronous>, transform_indices = @transform_9, window_bounds = array<i64: 12, 24>}, {pipeline_mode = #tpu.pipeline_mode<synchronous>, transform_indices = @transform_10, window_bounds = array<i64: 192, 96>}, {pipeline_mode = #tpu.pipeline_mode<synchronous>, transform_indices = @transform_11, window_bounds = array<i64: 192, 96>}, {pipeline_mode = #tpu.pipeline_mode<synchronous>, transform_indices = @transform_12, window_bounds = array<i64: 3, 96, 160>}, {pipeline_mode = #tpu.pipeline_mode<synchronous>, transform_indices = @transform_13, window_bounds = array<i64: 1, 160>}, {pipeline_mode = #tpu.pipeline_mode<synchronous>, transform_indices = @transform_14, window_bounds = array<i64: 1, 160>}, {pipeline_mode = #tpu.pipeline_mode<synchronous>, transform_indices = @transform_15, window_bounds = array<i64: 3, 160, 64>}, {pipeline_mode = #tpu.pipeline_mode<synchronous>, transform_indices = @transform_16, window_bounds = array<i64: 1, 64>}, {pipeline_mode = #tpu.pipeline_mode<synchronous>, transform_indices = @transform_17, window_bounds = array<i64: 1, 64>}, {pipeline_mode = #tpu.pipeline_mode<synchronous>, transform_indices = @transform_18, window_bounds = array<i64: 64, 160>}, {pipeline_mode = #tpu.pipeline_mode<synchronous>, transform_indices = @transform_19, window_bounds = array<i64: 5, 8>}, {pipeline_mode = #tpu.pipeline_mode<synchronous>, transform_indices = @transform_20, window_bounds = array<i64: 5, 8>}, {pipeline_mode = #tpu.pipeline_mode<synchronous>, transform_indices = @transform_21, window_bounds = array<i64: 160, 80>}, {pipeline_mode = #tpu.pipeline_mode<synchronous>, transform_indices = @transform_22, window_bounds = array<i64: 160, 80>}, {pipeline_mode = #tpu.pipeline_mode<synchronous>, transform_indices = @transform_23, window_bounds = array<i64: 3, 80, 24>}, {pipeline_mode = #tpu.pipeline_mode<synchronous>, transform_indices = @transform_24, window_bounds = array<i64: 1, 24>}, {pipeline_mode = #tpu.pipeline_mode<synchronous>, transform_indices = @transform_25, window_bounds = array<i64: 1, 24>}, {pipeline_mode = #tpu.pipeline_mode<synchronous>, transform_indices = @transform_26, window_bounds = array<i64: 24, 30>}, {pipeline_mode = #tpu.pipeline_mode<synchronous>, transform_indices = @transform_27, window_bounds = array<i64: 3, 30, 10>}, {pipeline_mode = #tpu.pipeline_mode<synchronous>, transform_indices = @transform_28, window_bounds = array<i64: 1, 10>}, {transform_indices = @transform_29, window_bounds = array<i64: 1, 1, 10>}]} {
    %c0 = arith.constant 0 : index
    %c0_0 = arith.constant 0 : index
    %c0_1 = arith.constant 0 : index
    %0 = vector.load %arg1[%c0, %c0_0, %c0_1] : memref<1x28x28xf32, #tpu.memory_space<vmem>>, vector<1x28x28xf32>
    %1 = vector.shape_cast %0 : vector<1x28x28xf32> to vector<28x28xf32>
    %2 = vector.extract_strided_slice %1 {offsets = [0, 0], sizes = [26, 28], strides = [1, 1]} : vector<28x28xf32> to vector<26x28xf32>
    %c0_2 = arith.constant 0 : index
    %c0_3 = arith.constant 0 : index
    %c0_4 = arith.constant 0 : index
    %3 = vector.load %arg2[%c0_2, %c0_3, %c0_4] : memref<3x28x208xf32, #tpu.memory_space<vmem>>, vector<1x28x208xf32>
    %4 = vector.shape_cast %3 : vector<1x28x208xf32> to vector<28x208xf32>
    %cst = arith.constant dense<0.000000e+00> : vector<26x208xf32>
    %5 = tpu.matmul %2, %4, %cst {dimension_numbers = #tpu.dot_dimension_numbers<[1], [0], [0], [1], [0, 0, 1, 1], [], []>} : vector<26x28xf32>, vector<28x208xf32>, vector<26x208xf32> -> vector<26x208xf32>
    %6 = vector.extract_strided_slice %1 {offsets = [1, 0], sizes = [26, 28], strides = [1, 1]} : vector<28x28xf32> to vector<26x28xf32>
    %c1 = arith.constant 1 : index
    %c0_5 = arith.constant 0 : index
    %c0_6 = arith.constant 0 : index
    %7 = vector.load %arg2[%c1, %c0_5, %c0_6] : memref<3x28x208xf32, #tpu.memory_space<vmem>>, vector<1x28x208xf32>
    %8 = vector.shape_cast %7 : vector<1x28x208xf32> to vector<28x208xf32>
    %cst_7 = arith.constant dense<0.000000e+00> : vector<26x208xf32>
    %9 = tpu.matmul %6, %8, %cst_7 {dimension_numbers = #tpu.dot_dimension_numbers<[1], [0], [0], [1], [0, 0, 1, 1], [], []>} : vector<26x28xf32>, vector<28x208xf32>, vector<26x208xf32> -> vector<26x208xf32>
    %10 = arith.addf %5, %9 : vector<26x208xf32>
    %11 = vector.extract_strided_slice %1 {offsets = [2, 0], sizes = [26, 28], strides = [1, 1]} : vector<28x28xf32> to vector<26x28xf32>
    %c2 = arith.constant 2 : index
    %c0_8 = arith.constant 0 : index
    %c0_9 = arith.constant 0 : index
    %12 = vector.load %arg2[%c2, %c0_8, %c0_9] : memref<3x28x208xf32, #tpu.memory_space<vmem>>, vector<1x28x208xf32>
    %13 = vector.shape_cast %12 : vector<1x28x208xf32> to vector<28x208xf32>
    %cst_10 = arith.constant dense<0.000000e+00> : vector<26x208xf32>
    %14 = tpu.matmul %11, %13, %cst_10 {dimension_numbers = #tpu.dot_dimension_numbers<[1], [0], [0], [1], [0, 0, 1, 1], [], []>} : vector<26x28xf32>, vector<28x208xf32>, vector<26x208xf32> -> vector<26x208xf32>
    %15 = arith.addf %10, %14 : vector<26x208xf32>
    %cst_11 = arith.constant 0.000000e+00 : f32
    %16 = vector.broadcast %cst_11 : f32 to vector<26x208xf32>
    %17 = arith.maximumf %15, %16 : vector<26x208xf32>
    %c0_12 = arith.constant 0 : index
    %c0_13 = arith.constant 0 : index
    %18 = vector.load %arg3[%c0_12, %c0_13] : memref<1x208xf32, #tpu.memory_space<vmem>>, vector<1x208xf32>
    %19 = vector.broadcast %18 : vector<1x208xf32> to vector<26x208xf32>
    %20 = arith.mulf %17, %19 : vector<26x208xf32>
    %c0_14 = arith.constant 0 : index
    %c0_15 = arith.constant 0 : index
    %21 = vector.load %arg4[%c0_14, %c0_15] : memref<1x208xf32, #tpu.memory_space<vmem>>, vector<1x208xf32>
    %22 = vector.broadcast %21 : vector<1x208xf32> to vector<26x208xf32>
    %23 = arith.addf %20, %22 : vector<26x208xf32>
    %24 = vector.extract_strided_slice %23 {offsets = [0, 0], sizes = [24, 208], strides = [1, 1]} : vector<26x208xf32> to vector<24x208xf32>
    %c0_16 = arith.constant 0 : index
    %c0_17 = arith.constant 0 : index
    %c0_18 = arith.constant 0 : index
    %25 = vector.load %arg5[%c0_16, %c0_17, %c0_18] : memref<3x208x384xf32, #tpu.memory_space<vmem>>, vector<1x208x384xf32>
    %26 = vector.shape_cast %25 : vector<1x208x384xf32> to vector<208x384xf32>
    %cst_19 = arith.constant dense<0.000000e+00> : vector<24x384xf32>
    %27 = tpu.matmul %24, %26, %cst_19 {dimension_numbers = #tpu.dot_dimension_numbers<[1], [0], [0], [1], [0, 0, 1, 1], [], []>} : vector<24x208xf32>, vector<208x384xf32>, vector<24x384xf32> -> vector<24x384xf32>
    %28 = vector.extract_strided_slice %23 {offsets = [1, 0], sizes = [24, 208], strides = [1, 1]} : vector<26x208xf32> to vector<24x208xf32>
    %c1_20 = arith.constant 1 : index
    %c0_21 = arith.constant 0 : index
    %c0_22 = arith.constant 0 : index
    %29 = vector.load %arg5[%c1_20, %c0_21, %c0_22] : memref<3x208x384xf32, #tpu.memory_space<vmem>>, vector<1x208x384xf32>
    %30 = vector.shape_cast %29 : vector<1x208x384xf32> to vector<208x384xf32>
    %cst_23 = arith.constant dense<0.000000e+00> : vector<24x384xf32>
    %31 = tpu.matmul %28, %30, %cst_23 {dimension_numbers = #tpu.dot_dimension_numbers<[1], [0], [0], [1], [0, 0, 1, 1], [], []>} : vector<24x208xf32>, vector<208x384xf32>, vector<24x384xf32> -> vector<24x384xf32>
    %32 = arith.addf %27, %31 : vector<24x384xf32>
    %33 = vector.extract_strided_slice %23 {offsets = [2, 0], sizes = [24, 208], strides = [1, 1]} : vector<26x208xf32> to vector<24x208xf32>
    %c2_24 = arith.constant 2 : index
    %c0_25 = arith.constant 0 : index
    %c0_26 = arith.constant 0 : index
    %34 = vector.load %arg5[%c2_24, %c0_25, %c0_26] : memref<3x208x384xf32, #tpu.memory_space<vmem>>, vector<1x208x384xf32>
    %35 = vector.shape_cast %34 : vector<1x208x384xf32> to vector<208x384xf32>
    %cst_27 = arith.constant dense<0.000000e+00> : vector<24x384xf32>
    %36 = tpu.matmul %33, %35, %cst_27 {dimension_numbers = #tpu.dot_dimension_numbers<[1], [0], [0], [1], [0, 0, 1, 1], [], []>} : vector<24x208xf32>, vector<208x384xf32>, vector<24x384xf32> -> vector<24x384xf32>
    %37 = arith.addf %32, %36 : vector<24x384xf32>
    %cst_28 = arith.constant 0.000000e+00 : f32
    %38 = vector.broadcast %cst_28 : f32 to vector<24x384xf32>
    %39 = arith.maximumf %37, %38 : vector<24x384xf32>
    %c0_29 = arith.constant 0 : index
    %c0_30 = arith.constant 0 : index
    %40 = vector.load %arg6[%c0_29, %c0_30] : memref<1x384xf32, #tpu.memory_space<vmem>>, vector<1x384xf32>
    %41 = vector.broadcast %40 : vector<1x384xf32> to vector<24x384xf32>
    %42 = arith.mulf %39, %41 : vector<24x384xf32>
    %c0_31 = arith.constant 0 : index
    %c0_32 = arith.constant 0 : index
    %43 = vector.load %arg7[%c0_31, %c0_32] : memref<1x384xf32, #tpu.memory_space<vmem>>, vector<1x384xf32>
    %44 = vector.broadcast %43 : vector<1x384xf32> to vector<24x384xf32>
    %45 = arith.addf %42, %44 : vector<24x384xf32>
    %c0_33 = arith.constant 0 : index
    %c0_34 = arith.constant 0 : index
    %46 = vector.load %arg8[%c0_33, %c0_34] : memref<384x192xf32, #tpu.memory_space<vmem>>, vector<384x192xf32>
    %cst_35 = arith.constant dense<0.000000e+00> : vector<24x192xf32>
    %47 = tpu.matmul %45, %46, %cst_35 {dimension_numbers = #tpu.dot_dimension_numbers<[1], [0], [0], [1], [0, 0, 1, 1], [], []>} : vector<24x384xf32>, vector<384x192xf32>, vector<24x192xf32> -> vector<24x192xf32>
    %c0_36 = arith.constant 0 : index
    %c0_37 = arith.constant 0 : index
    %48 = vector.load %arg9[%c0_36, %c0_37] : memref<12x24xf32, #tpu.memory_space<vmem>>, vector<12x24xf32>
    %cst_38 = arith.constant dense<0.000000e+00> : vector<12x192xf32>
    %49 = tpu.matmul %48, %47, %cst_38 {dimension_numbers = #tpu.dot_dimension_numbers<[1], [0], [0], [1], [0, 0, 1, 1], [], []>} : vector<12x24xf32>, vector<24x192xf32>, vector<12x192xf32> -> vector<12x192xf32>
    %c0_39 = arith.constant 0 : index
    %c0_40 = arith.constant 0 : index
    %50 = vector.load %arg10[%c0_39, %c0_40] : memref<12x24xf32, #tpu.memory_space<vmem>>, vector<12x24xf32>
    %cst_41 = arith.constant dense<0.000000e+00> : vector<12x192xf32>
    %51 = tpu.matmul %50, %47, %cst_41 {dimension_numbers = #tpu.dot_dimension_numbers<[1], [0], [0], [1], [0, 0, 1, 1], [], []>} : vector<12x24xf32>, vector<24x192xf32>, vector<12x192xf32> -> vector<12x192xf32>
    %52 = arith.maximumf %49, %51 : vector<12x192xf32>
    %c0_42 = arith.constant 0 : index
    %c0_43 = arith.constant 0 : index
    %53 = vector.load %arg11[%c0_42, %c0_43] : memref<192x96xf32, #tpu.memory_space<vmem>>, vector<192x96xf32>
    %cst_44 = arith.constant dense<0.000000e+00> : vector<12x96xf32>
    %54 = tpu.matmul %52, %53, %cst_44 {dimension_numbers = #tpu.dot_dimension_numbers<[1], [0], [0], [1], [0, 0, 1, 1], [], []>} : vector<12x192xf32>, vector<192x96xf32>, vector<12x96xf32> -> vector<12x96xf32>
    %c0_45 = arith.constant 0 : index
    %c0_46 = arith.constant 0 : index
    %55 = vector.load %arg12[%c0_45, %c0_46] : memref<192x96xf32, #tpu.memory_space<vmem>>, vector<192x96xf32>
    %cst_47 = arith.constant dense<0.000000e+00> : vector<12x96xf32>
    %56 = tpu.matmul %52, %55, %cst_47 {dimension_numbers = #tpu.dot_dimension_numbers<[1], [0], [0], [1], [0, 0, 1, 1], [], []>} : vector<12x192xf32>, vector<192x96xf32>, vector<12x96xf32> -> vector<12x96xf32>
    %57 = arith.maximumf %54, %56 : vector<12x96xf32>
    %58 = vector.extract_strided_slice %57 {offsets = [0, 0], sizes = [10, 96], strides = [1, 1]} : vector<12x96xf32> to vector<10x96xf32>
    %c0_48 = arith.constant 0 : index
    %c0_49 = arith.constant 0 : index
    %c0_50 = arith.constant 0 : index
    %59 = vector.load %arg13[%c0_48, %c0_49, %c0_50] : memref<3x96x160xf32, #tpu.memory_space<vmem>>, vector<1x96x160xf32>
    %60 = vector.shape_cast %59 : vector<1x96x160xf32> to vector<96x160xf32>
    %cst_51 = arith.constant dense<0.000000e+00> : vector<10x160xf32>
    %61 = tpu.matmul %58, %60, %cst_51 {dimension_numbers = #tpu.dot_dimension_numbers<[1], [0], [0], [1], [0, 0, 1, 1], [], []>} : vector<10x96xf32>, vector<96x160xf32>, vector<10x160xf32> -> vector<10x160xf32>
    %62 = vector.extract_strided_slice %57 {offsets = [1, 0], sizes = [10, 96], strides = [1, 1]} : vector<12x96xf32> to vector<10x96xf32>
    %c1_52 = arith.constant 1 : index
    %c0_53 = arith.constant 0 : index
    %c0_54 = arith.constant 0 : index
    %63 = vector.load %arg13[%c1_52, %c0_53, %c0_54] : memref<3x96x160xf32, #tpu.memory_space<vmem>>, vector<1x96x160xf32>
    %64 = vector.shape_cast %63 : vector<1x96x160xf32> to vector<96x160xf32>
    %cst_55 = arith.constant dense<0.000000e+00> : vector<10x160xf32>
    %65 = tpu.matmul %62, %64, %cst_55 {dimension_numbers = #tpu.dot_dimension_numbers<[1], [0], [0], [1], [0, 0, 1, 1], [], []>} : vector<10x96xf32>, vector<96x160xf32>, vector<10x160xf32> -> vector<10x160xf32>
    %66 = arith.addf %61, %65 : vector<10x160xf32>
    %67 = vector.extract_strided_slice %57 {offsets = [2, 0], sizes = [10, 96], strides = [1, 1]} : vector<12x96xf32> to vector<10x96xf32>
    %c2_56 = arith.constant 2 : index
    %c0_57 = arith.constant 0 : index
    %c0_58 = arith.constant 0 : index
    %68 = vector.load %arg13[%c2_56, %c0_57, %c0_58] : memref<3x96x160xf32, #tpu.memory_space<vmem>>, vector<1x96x160xf32>
    %69 = vector.shape_cast %68 : vector<1x96x160xf32> to vector<96x160xf32>
    %cst_59 = arith.constant dense<0.000000e+00> : vector<10x160xf32>
    %70 = tpu.matmul %67, %69, %cst_59 {dimension_numbers = #tpu.dot_dimension_numbers<[1], [0], [0], [1], [0, 0, 1, 1], [], []>} : vector<10x96xf32>, vector<96x160xf32>, vector<10x160xf32> -> vector<10x160xf32>
    %71 = arith.addf %66, %70 : vector<10x160xf32>
    %cst_60 = arith.constant 0.000000e+00 : f32
    %72 = vector.broadcast %cst_60 : f32 to vector<10x160xf32>
    %73 = arith.maximumf %71, %72 : vector<10x160xf32>
    %c0_61 = arith.constant 0 : index
    %c0_62 = arith.constant 0 : index
    %74 = vector.load %arg14[%c0_61, %c0_62] : memref<1x160xf32, #tpu.memory_space<vmem>>, vector<1x160xf32>
    %75 = vector.broadcast %74 : vector<1x160xf32> to vector<10x160xf32>
    %76 = arith.mulf %73, %75 : vector<10x160xf32>
    %c0_63 = arith.constant 0 : index
    %c0_64 = arith.constant 0 : index
    %77 = vector.load %arg15[%c0_63, %c0_64] : memref<1x160xf32, #tpu.memory_space<vmem>>, vector<1x160xf32>
    %78 = vector.broadcast %77 : vector<1x160xf32> to vector<10x160xf32>
    %79 = arith.addf %76, %78 : vector<10x160xf32>
    %80 = vector.extract_strided_slice %79 {offsets = [0, 0], sizes = [8, 160], strides = [1, 1]} : vector<10x160xf32> to vector<8x160xf32>
    %c0_65 = arith.constant 0 : index
    %c0_66 = arith.constant 0 : index
    %c0_67 = arith.constant 0 : index
    %81 = vector.load %arg16[%c0_65, %c0_66, %c0_67] : memref<3x160x64xf32, #tpu.memory_space<vmem>>, vector<1x160x64xf32>
    %82 = vector.shape_cast %81 : vector<1x160x64xf32> to vector<160x64xf32>
    %cst_68 = arith.constant dense<0.000000e+00> : vector<8x64xf32>
    %83 = tpu.matmul %80, %82, %cst_68 {dimension_numbers = #tpu.dot_dimension_numbers<[1], [0], [0], [1], [0, 0, 1, 1], [], []>} : vector<8x160xf32>, vector<160x64xf32>, vector<8x64xf32> -> vector<8x64xf32>
    %84 = vector.extract_strided_slice %79 {offsets = [1, 0], sizes = [8, 160], strides = [1, 1]} : vector<10x160xf32> to vector<8x160xf32>
    %c1_69 = arith.constant 1 : index
    %c0_70 = arith.constant 0 : index
    %c0_71 = arith.constant 0 : index
    %85 = vector.load %arg16[%c1_69, %c0_70, %c0_71] : memref<3x160x64xf32, #tpu.memory_space<vmem>>, vector<1x160x64xf32>
    %86 = vector.shape_cast %85 : vector<1x160x64xf32> to vector<160x64xf32>
    %cst_72 = arith.constant dense<0.000000e+00> : vector<8x64xf32>
    %87 = tpu.matmul %84, %86, %cst_72 {dimension_numbers = #tpu.dot_dimension_numbers<[1], [0], [0], [1], [0, 0, 1, 1], [], []>} : vector<8x160xf32>, vector<160x64xf32>, vector<8x64xf32> -> vector<8x64xf32>
    %88 = arith.addf %83, %87 : vector<8x64xf32>
    %89 = vector.extract_strided_slice %79 {offsets = [2, 0], sizes = [8, 160], strides = [1, 1]} : vector<10x160xf32> to vector<8x160xf32>
    %c2_73 = arith.constant 2 : index
    %c0_74 = arith.constant 0 : index
    %c0_75 = arith.constant 0 : index
    %90 = vector.load %arg16[%c2_73, %c0_74, %c0_75] : memref<3x160x64xf32, #tpu.memory_space<vmem>>, vector<1x160x64xf32>
    %91 = vector.shape_cast %90 : vector<1x160x64xf32> to vector<160x64xf32>
    %cst_76 = arith.constant dense<0.000000e+00> : vector<8x64xf32>
    %92 = tpu.matmul %89, %91, %cst_76 {dimension_numbers = #tpu.dot_dimension_numbers<[1], [0], [0], [1], [0, 0, 1, 1], [], []>} : vector<8x160xf32>, vector<160x64xf32>, vector<8x64xf32> -> vector<8x64xf32>
    %93 = arith.addf %88, %92 : vector<8x64xf32>
    %cst_77 = arith.constant 0.000000e+00 : f32
    %94 = vector.broadcast %cst_77 : f32 to vector<8x64xf32>
    %95 = arith.maximumf %93, %94 : vector<8x64xf32>
    %c0_78 = arith.constant 0 : index
    %c0_79 = arith.constant 0 : index
    %96 = vector.load %arg17[%c0_78, %c0_79] : memref<1x64xf32, #tpu.memory_space<vmem>>, vector<1x64xf32>
    %97 = vector.broadcast %96 : vector<1x64xf32> to vector<8x64xf32>
    %98 = arith.mulf %95, %97 : vector<8x64xf32>
    %c0_80 = arith.constant 0 : index
    %c0_81 = arith.constant 0 : index
    %99 = vector.load %arg18[%c0_80, %c0_81] : memref<1x64xf32, #tpu.memory_space<vmem>>, vector<1x64xf32>
    %100 = vector.broadcast %99 : vector<1x64xf32> to vector<8x64xf32>
    %101 = arith.addf %98, %100 : vector<8x64xf32>
    %c0_82 = arith.constant 0 : index
    %c0_83 = arith.constant 0 : index
    %102 = vector.load %arg19[%c0_82, %c0_83] : memref<64x160xf32, #tpu.memory_space<vmem>>, vector<64x160xf32>
    %cst_84 = arith.constant dense<0.000000e+00> : vector<8x160xf32>
    %103 = tpu.matmul %101, %102, %cst_84 {dimension_numbers = #tpu.dot_dimension_numbers<[1], [0], [0], [1], [0, 0, 1, 1], [], []>} : vector<8x64xf32>, vector<64x160xf32>, vector<8x160xf32> -> vector<8x160xf32>
    %c0_85 = arith.constant 0 : index
    %c0_86 = arith.constant 0 : index
    %104 = vector.load %arg20[%c0_85, %c0_86] : memref<5x8xf32, #tpu.memory_space<vmem>>, vector<5x8xf32>
    %cst_87 = arith.constant dense<0.000000e+00> : vector<5x160xf32>
    %105 = tpu.matmul %104, %103, %cst_87 {dimension_numbers = #tpu.dot_dimension_numbers<[1], [0], [0], [1], [0, 0, 1, 1], [], []>} : vector<5x8xf32>, vector<8x160xf32>, vector<5x160xf32> -> vector<5x160xf32>
    %c0_88 = arith.constant 0 : index
    %c0_89 = arith.constant 0 : index
    %106 = vector.load %arg21[%c0_88, %c0_89] : memref<5x8xf32, #tpu.memory_space<vmem>>, vector<5x8xf32>
    %cst_90 = arith.constant dense<0.000000e+00> : vector<5x160xf32>
    %107 = tpu.matmul %106, %103, %cst_90 {dimension_numbers = #tpu.dot_dimension_numbers<[1], [0], [0], [1], [0, 0, 1, 1], [], []>} : vector<5x8xf32>, vector<8x160xf32>, vector<5x160xf32> -> vector<5x160xf32>
    %108 = arith.maximumf %105, %107 : vector<5x160xf32>
    %c0_91 = arith.constant 0 : index
    %c0_92 = arith.constant 0 : index
    %109 = vector.load %arg22[%c0_91, %c0_92] : memref<160x80xf32, #tpu.memory_space<vmem>>, vector<160x80xf32>
    %cst_93 = arith.constant dense<0.000000e+00> : vector<5x80xf32>
    %110 = tpu.matmul %108, %109, %cst_93 {dimension_numbers = #tpu.dot_dimension_numbers<[1], [0], [0], [1], [0, 0, 1, 1], [], []>} : vector<5x160xf32>, vector<160x80xf32>, vector<5x80xf32> -> vector<5x80xf32>
    %c0_94 = arith.constant 0 : index
    %c0_95 = arith.constant 0 : index
    %111 = vector.load %arg23[%c0_94, %c0_95] : memref<160x80xf32, #tpu.memory_space<vmem>>, vector<160x80xf32>
    %cst_96 = arith.constant dense<0.000000e+00> : vector<5x80xf32>
    %112 = tpu.matmul %108, %111, %cst_96 {dimension_numbers = #tpu.dot_dimension_numbers<[1], [0], [0], [1], [0, 0, 1, 1], [], []>} : vector<5x160xf32>, vector<160x80xf32>, vector<5x80xf32> -> vector<5x80xf32>
    %113 = arith.maximumf %110, %112 : vector<5x80xf32>
    %114 = vector.extract_strided_slice %113 {offsets = [0, 0], sizes = [3, 80], strides = [1, 1]} : vector<5x80xf32> to vector<3x80xf32>
    %c0_97 = arith.constant 0 : index
    %c0_98 = arith.constant 0 : index
    %c0_99 = arith.constant 0 : index
    %115 = vector.load %arg24[%c0_97, %c0_98, %c0_99] : memref<3x80x24xf32, #tpu.memory_space<vmem>>, vector<1x80x24xf32>
    %116 = vector.shape_cast %115 : vector<1x80x24xf32> to vector<80x24xf32>
    %cst_100 = arith.constant dense<0.000000e+00> : vector<3x24xf32>
    %117 = tpu.matmul %114, %116, %cst_100 {dimension_numbers = #tpu.dot_dimension_numbers<[1], [0], [0], [1], [0, 0, 1, 1], [], []>} : vector<3x80xf32>, vector<80x24xf32>, vector<3x24xf32> -> vector<3x24xf32>
    %118 = vector.extract_strided_slice %113 {offsets = [1, 0], sizes = [3, 80], strides = [1, 1]} : vector<5x80xf32> to vector<3x80xf32>
    %c1_101 = arith.constant 1 : index
    %c0_102 = arith.constant 0 : index
    %c0_103 = arith.constant 0 : index
    %119 = vector.load %arg24[%c1_101, %c0_102, %c0_103] : memref<3x80x24xf32, #tpu.memory_space<vmem>>, vector<1x80x24xf32>
    %120 = vector.shape_cast %119 : vector<1x80x24xf32> to vector<80x24xf32>
    %cst_104 = arith.constant dense<0.000000e+00> : vector<3x24xf32>
    %121 = tpu.matmul %118, %120, %cst_104 {dimension_numbers = #tpu.dot_dimension_numbers<[1], [0], [0], [1], [0, 0, 1, 1], [], []>} : vector<3x80xf32>, vector<80x24xf32>, vector<3x24xf32> -> vector<3x24xf32>
    %122 = arith.addf %117, %121 : vector<3x24xf32>
    %123 = vector.extract_strided_slice %113 {offsets = [2, 0], sizes = [3, 80], strides = [1, 1]} : vector<5x80xf32> to vector<3x80xf32>
    %c2_105 = arith.constant 2 : index
    %c0_106 = arith.constant 0 : index
    %c0_107 = arith.constant 0 : index
    %124 = vector.load %arg24[%c2_105, %c0_106, %c0_107] : memref<3x80x24xf32, #tpu.memory_space<vmem>>, vector<1x80x24xf32>
    %125 = vector.shape_cast %124 : vector<1x80x24xf32> to vector<80x24xf32>
    %cst_108 = arith.constant dense<0.000000e+00> : vector<3x24xf32>
    %126 = tpu.matmul %123, %125, %cst_108 {dimension_numbers = #tpu.dot_dimension_numbers<[1], [0], [0], [1], [0, 0, 1, 1], [], []>} : vector<3x80xf32>, vector<80x24xf32>, vector<3x24xf32> -> vector<3x24xf32>
    %127 = arith.addf %122, %126 : vector<3x24xf32>
    %cst_109 = arith.constant 0.000000e+00 : f32
    %128 = vector.broadcast %cst_109 : f32 to vector<3x24xf32>
    %129 = arith.maximumf %127, %128 : vector<3x24xf32>
    %c0_110 = arith.constant 0 : index
    %c0_111 = arith.constant 0 : index
    %130 = vector.load %arg25[%c0_110, %c0_111] : memref<1x24xf32, #tpu.memory_space<vmem>>, vector<1x24xf32>
    %131 = vector.broadcast %130 : vector<1x24xf32> to vector<3x24xf32>
    %132 = arith.mulf %129, %131 : vector<3x24xf32>
    %c0_112 = arith.constant 0 : index
    %c0_113 = arith.constant 0 : index
    %133 = vector.load %arg26[%c0_112, %c0_113] : memref<1x24xf32, #tpu.memory_space<vmem>>, vector<1x24xf32>
    %134 = vector.broadcast %133 : vector<1x24xf32> to vector<3x24xf32>
    %135 = arith.addf %132, %134 : vector<3x24xf32>
    %c0_114 = arith.constant 0 : index
    %c0_115 = arith.constant 0 : index
    %136 = vector.load %arg27[%c0_114, %c0_115] : memref<24x30xf32, #tpu.memory_space<vmem>>, vector<24x30xf32>
    %cst_116 = arith.constant dense<0.000000e+00> : vector<3x30xf32>
    %137 = tpu.matmul %135, %136, %cst_116 {dimension_numbers = #tpu.dot_dimension_numbers<[1], [0], [0], [1], [0, 0, 1, 1], [], []>} : vector<3x24xf32>, vector<24x30xf32>, vector<3x30xf32> -> vector<3x30xf32>
    %c0_117 = arith.constant 0 : index
    %c0_118 = arith.constant 0 : index
    %138 = vector.load %arg29[%c0_117, %c0_118] : memref<1x10xf32, #tpu.memory_space<vmem>>, vector<1x10xf32>
    %139 = vector.extract_strided_slice %137 {offsets = [0, 0], sizes = [1, 30], strides = [1, 1]} : vector<3x30xf32> to vector<1x30xf32>
    %c0_119 = arith.constant 0 : index
    %c0_120 = arith.constant 0 : index
    %c0_121 = arith.constant 0 : index
    %140 = vector.load %arg28[%c0_119, %c0_120, %c0_121] : memref<3x30x10xf32, #tpu.memory_space<vmem>>, vector<1x30x10xf32>
    %141 = vector.shape_cast %140 : vector<1x30x10xf32> to vector<30x10xf32>
    %cst_122 = arith.constant dense<0.000000e+00> : vector<1x10xf32>
    %142 = tpu.matmul %139, %141, %cst_122 {dimension_numbers = #tpu.dot_dimension_numbers<[1], [0], [0], [1], [0, 0, 1, 1], [], []>} : vector<1x30xf32>, vector<30x10xf32>, vector<1x10xf32> -> vector<1x10xf32>
    %143 = arith.addf %138, %142 : vector<1x10xf32>
    %144 = vector.extract_strided_slice %137 {offsets = [1, 0], sizes = [1, 30], strides = [1, 1]} : vector<3x30xf32> to vector<1x30xf32>
    %c1_123 = arith.constant 1 : index
    %c0_124 = arith.constant 0 : index
    %c0_125 = arith.constant 0 : index
    %145 = vector.load %arg28[%c1_123, %c0_124, %c0_125] : memref<3x30x10xf32, #tpu.memory_space<vmem>>, vector<1x30x10xf32>
    %146 = vector.shape_cast %145 : vector<1x30x10xf32> to vector<30x10xf32>
    %cst_126 = arith.constant dense<0.000000e+00> : vector<1x10xf32>
    %147 = tpu.matmul %144, %146, %cst_126 {dimension_numbers = #tpu.dot_dimension_numbers<[1], [0], [0], [1], [0, 0, 1, 1], [], []>} : vector<1x30xf32>, vector<30x10xf32>, vector<1x10xf32> -> vector<1x10xf32>
    %148 = arith.addf %143, %147 : vector<1x10xf32>
    %149 = vector.extract_strided_slice %137 {offsets = [2, 0], sizes = [1, 30], strides = [1, 1]} : vector<3x30xf32> to vector<1x30xf32>
    %c2_127 = arith.constant 2 : index
    %c0_128 = arith.constant 0 : index
    %c0_129 = arith.constant 0 : index
    %150 = vector.load %arg28[%c2_127, %c0_128, %c0_129] : memref<3x30x10xf32, #tpu.memory_space<vmem>>, vector<1x30x10xf32>
    %151 = vector.shape_cast %150 : vector<1x30x10xf32> to vector<30x10xf32>
    %cst_130 = arith.constant dense<0.000000e+00> : vector<1x10xf32>
    %152 = tpu.matmul %149, %151, %cst_130 {dimension_numbers = #tpu.dot_dimension_numbers<[1], [0], [0], [1], [0, 0, 1, 1], [], []>} : vector<1x30xf32>, vector<30x10xf32>, vector<1x10xf32> -> vector<1x10xf32>
    %153 = arith.addf %148, %152 : vector<1x10xf32>
    %cst_131 = arith.constant dense<0xFF800000> : vector<1xf32>
    %154 = vector.multi_reduction <maximumf>, %153, %cst_131 [1] : vector<1x10xf32> to vector<1xf32>
    %155 = vector.shape_cast %154 : vector<1xf32> to vector<1x1xf32>
    %156 = vector.broadcast %155 : vector<1x1xf32> to vector<1x10xf32>
    %157 = arith.subf %153, %156 : vector<1x10xf32>
    %158 = math.exp %157 : vector<1x10xf32>
    %cst_132 = arith.constant dense<0.000000e+00> : vector<1xf32>
    %159 = vector.multi_reduction <add>, %158, %cst_132 [1] : vector<1x10xf32> to vector<1xf32>
    %160 = vector.shape_cast %159 : vector<1xf32> to vector<1x1xf32>
    %161 = math.log %160 : vector<1x1xf32>
    %162 = vector.broadcast %161 : vector<1x1xf32> to vector<1x10xf32>
    %163 = arith.subf %157, %162 : vector<1x10xf32>
    %c0_133 = arith.constant 0 : index
    %c0_134 = arith.constant 0 : index
    %c0_135 = arith.constant 0 : index
    %164 = vector.load %arg30[%c0_133, %c0_134, %c0_135] : memref<1x1x10xf32, #tpu.memory_space<vmem>>, vector<1x1x10xf32>
    %165 = vector.shape_cast %164 : vector<1x1x10xf32> to vector<1x10xf32>
    %166 = vector.shape_cast %163 : vector<1x10xf32> to vector<1x1x10xf32>
    tpu.vector_store %arg30[%c0_133, %c0_134, %c0_135], %166 {strides = array<i32>} : memref<1x1x10xf32, #tpu.memory_space<vmem>>, vector<1x1x10xf32>,
    return
  }
  func.func @transform_0(%arg0: i32) -> (i32, i32, i32) {
    %c0_i32 = arith.constant 0 : i32
    %c0_i32_0 = arith.constant 0 : i32
    %c0_i32_1 = arith.constant 0 : i32
    return %arg0, %c0_i32, %c0_i32_0 : i32, i32, i32
  }
  func.func @transform_1(%arg0: i32) -> (i32, i32, i32) {
    %c0_i32 = arith.constant 0 : i32
    %c0_i32_0 = arith.constant 0 : i32
    %c0_i32_1 = arith.constant 0 : i32
    %c0_i32_2 = arith.constant 0 : i32
    return %c0_i32, %c0_i32_0, %c0_i32_1 : i32, i32, i32
  }
  func.func @transform_2(%arg0: i32) -> (i32, i32) {
    %c0_i32 = arith.constant 0 : i32
    %c0_i32_0 = arith.constant 0 : i32
    %c0_i32_1 = arith.constant 0 : i32
    return %c0_i32, %c0_i32_0 : i32, i32
  }
  func.func @transform_3(%arg0: i32) -> (i32, i32) {
    %c0_i32 = arith.constant 0 : i32
    %c0_i32_0 = arith.constant 0 : i32
    %c0_i32_1 = arith.constant 0 : i32
    return %c0_i32, %c0_i32_0 : i32, i32
  }
  func.func @transform_4(%arg0: i32) -> (i32, i32, i32) {
    %c0_i32 = arith.constant 0 : i32
    %c0_i32_0 = arith.constant 0 : i32
    %c0_i32_1 = arith.constant 0 : i32
    %c0_i32_2 = arith.constant 0 : i32
    return %c0_i32, %c0_i32_0, %c0_i32_1 : i32, i32, i32
  }
  func.func @transform_5(%arg0: i32) -> (i32, i32) {
    %c0_i32 = arith.constant 0 : i32
    %c0_i32_0 = arith.constant 0 : i32
    %c0_i32_1 = arith.constant 0 : i32
    return %c0_i32, %c0_i32_0 : i32, i32
  }
  func.func @transform_6(%arg0: i32) -> (i32, i32) {
    %c0_i32 = arith.constant 0 : i32
    %c0_i32_0 = arith.constant 0 : i32
    %c0_i32_1 = arith.constant 0 : i32
    return %c0_i32, %c0_i32_0 : i32, i32
  }
  func.func @transform_7(%arg0: i32) -> (i32, i32) {
    %c0_i32 = arith.constant 0 : i32
    %c0_i32_0 = arith.constant 0 : i32
    %c0_i32_1 = arith.constant 0 : i32
    return %c0_i32, %c0_i32_0 : i32, i32
  }
  func.func @transform_8(%arg0: i32) -> (i32, i32) {
    %c0_i32 = arith.constant 0 : i32
    %c0_i32_0 = arith.constant 0 : i32
    %c0_i32_1 = arith.constant 0 : i32
    return %c0_i32, %c0_i32_0 : i32, i32
  }
  func.func @transform_9(%arg0: i32) -> (i32, i32) {
    %c0_i32 = arith.constant 0 : i32
    %c0_i32_0 = arith.constant 0 : i32
    %c0_i32_1 = arith.constant 0 : i32
    return %c0_i32, %c0_i32_0 : i32, i32
  }
  func.func @transform_10(%arg0: i32) -> (i32, i32) {
    %c0_i32 = arith.constant 0 : i32
    %c0_i32_0 = arith.constant 0 : i32
    %c0_i32_1 = arith.constant 0 : i32
    return %c0_i32, %c0_i32_0 : i32, i32
  }
  func.func @transform_11(%arg0: i32) -> (i32, i32) {
    %c0_i32 = arith.constant 0 : i32
    %c0_i32_0 = arith.constant 0 : i32
    %c0_i32_1 = arith.constant 0 : i32
    return %c0_i32, %c0_i32_0 : i32, i32
  }
  func.func @transform_12(%arg0: i32) -> (i32, i32, i32) {
    %c0_i32 = arith.constant 0 : i32
    %c0_i32_0 = arith.constant 0 : i32
    %c0_i32_1 = arith.constant 0 : i32
    %c0_i32_2 = arith.constant 0 : i32
    return %c0_i32, %c0_i32_0, %c0_i32_1 : i32, i32, i32
  }
  func.func @transform_13(%arg0: i32) -> (i32, i32) {
    %c0_i32 = arith.constant 0 : i32
    %c0_i32_0 = arith.constant 0 : i32
    %c0_i32_1 = arith.constant 0 : i32
    return %c0_i32, %c0_i32_0 : i32, i32
  }
  func.func @transform_14(%arg0: i32) -> (i32, i32) {
    %c0_i32 = arith.constant 0 : i32
    %c0_i32_0 = arith.constant 0 : i32
    %c0_i32_1 = arith.constant 0 : i32
    return %c0_i32, %c0_i32_0 : i32, i32
  }
  func.func @transform_15(%arg0: i32) -> (i32, i32, i32) {
    %c0_i32 = arith.constant 0 : i32
    %c0_i32_0 = arith.constant 0 : i32
    %c0_i32_1 = arith.constant 0 : i32
    %c0_i32_2 = arith.constant 0 : i32
    return %c0_i32, %c0_i32_0, %c0_i32_1 : i32, i32, i32
  }
  func.func @transform_16(%arg0: i32) -> (i32, i32) {
    %c0_i32 = arith.constant 0 : i32
    %c0_i32_0 = arith.constant 0 : i32
    %c0_i32_1 = arith.constant 0 : i32
    return %c0_i32, %c0_i32_0 : i32, i32
  }
  func.func @transform_17(%arg0: i32) -> (i32, i32) {
    %c0_i32 = arith.constant 0 : i32
    %c0_i32_0 = arith.constant 0 : i32
    %c0_i32_1 = arith.constant 0 : i32
    return %c0_i32, %c0_i32_0 : i32, i32
  }
  func.func @transform_18(%arg0: i32) -> (i32, i32) {
    %c0_i32 = arith.constant 0 : i32
    %c0_i32_0 = arith.constant 0 : i32
    %c0_i32_1 = arith.constant 0 : i32
    return %c0_i32, %c0_i32_0 : i32, i32
  }
  func.func @transform_19(%arg0: i32) -> (i32, i32) {
    %c0_i32 = arith.constant 0 : i32
    %c0_i32_0 = arith.constant 0 : i32
    %c0_i32_1 = arith.constant 0 : i32
    return %c0_i32, %c0_i32_0 : i32, i32
  }
  func.func @transform_20(%arg0: i32) -> (i32, i32) {
    %c0_i32 = arith.constant 0 : i32
    %c0_i32_0 = arith.constant 0 : i32
    %c0_i32_1 = arith.constant 0 : i32
    return %c0_i32, %c0_i32_0 : i32, i32
  }
  func.func @transform_21(%arg0: i32) -> (i32, i32) {
    %c0_i32 = arith.constant 0 : i32
    %c0_i32_0 = arith.constant 0 : i32
    %c0_i32_1 = arith.constant 0 : i32
    return %c0_i32, %c0_i32_0 : i32, i32
  }
  func.func @transform_22(%arg0: i32) -> (i32, i32) {
    %c0_i32 = arith.constant 0 : i32
    %c0_i32_0 = arith.constant 0 : i32
    %c0_i32_1 = arith.constant 0 : i32
    return %c0_i32, %c0_i32_0 : i32, i32
  }
  func.func @transform_23(%arg0: i32) -> (i32, i32, i32) {
    %c0_i32 = arith.constant 0 : i32
    %c0_i32_0 = arith.constant 0 : i32
    %c0_i32_1 = arith.constant 0 : i32
    %c0_i32_2 = arith.constant 0 : i32
    return %c0_i32, %c0_i32_0, %c0_i32_1 : i32, i32, i32
  }
  func.func @transform_24(%arg0: i32) -> (i32, i32) {
    %c0_i32 = arith.constant 0 : i32
    %c0_i32_0 = arith.constant 0 : i32
    %c0_i32_1 = arith.constant 0 : i32
    return %c0_i32, %c0_i32_0 : i32, i32
  }
  func.func @transform_25(%arg0: i32) -> (i32, i32) {
    %c0_i32 = arith.constant 0 : i32
    %c0_i32_0 = arith.constant 0 : i32
    %c0_i32_1 = arith.constant 0 : i32
    return %c0_i32, %c0_i32_0 : i32, i32
  }
  func.func @transform_26(%arg0: i32) -> (i32, i32) {
    %c0_i32 = arith.constant 0 : i32
    %c0_i32_0 = arith.constant 0 : i32
    %c0_i32_1 = arith.constant 0 : i32
    return %c0_i32, %c0_i32_0 : i32, i32
  }
  func.func @transform_27(%arg0: i32) -> (i32, i32, i32) {
    %c0_i32 = arith.constant 0 : i32
    %c0_i32_0 = arith.constant 0 : i32
    %c0_i32_1 = arith.constant 0 : i32
    %c0_i32_2 = arith.constant 0 : i32
    return %c0_i32, %c0_i32_0, %c0_i32_1 : i32, i32, i32
  }
  func.func @transform_28(%arg0: i32) -> (i32, i32) {
    %c0_i32 = arith.constant 0 : i32
    %c0_i32_0 = arith.constant 0 : i32
    %c0_i32_1 = arith.constant 0 : i32
    return %c0_i32, %c0_i32_0 : i32, i32
  }
  func.func @transform_29(%arg0: i32) -> (i32, i32, i32) {
    %c0_i32 = arith.constant 0 : i32
    %c0_i32_0 = arith.constant 0 : i32
    %c0_i32_1 = arith.constant 0 : i32
    return %arg0, %c0_i32, %c0_i32_0 : i32, i32, i32
  }
}

</mosaic_0001>

<llo_original>
// kernel: model1_forward.1
$region0: #{model1_forward.1}
  #allocation0 [shape = 'u32[]', space=smem, size = 0x4, offset = 0x4, fixed_abs, tag = 'smem constant byte address 0x4 - core index']
  #allocation1 [shape = 'u32[72,128]{1,0:T(1,128)}', space=vmem, size = 0x9000, scoped, tag = 'internal scratch']
  %s0 = inlined_call_operand.smem [shape: u32[30], index: -1, kind: input, shape index: {}]
  %s1 = sld [smem:[%s0]]
  %s2 = scalar_lea.smem %s0, 1
  %s3 = sld [smem:[%s2]]
  %s4 = scalar_lea.smem %s0, 2
  %s5 = sld [smem:[%s4]]
  %s6 = scalar_lea.smem %s0, 3
  %s7 = sld [smem:[%s6]]
  %s8 = scalar_lea.smem %s0, 4
  %s9 = sld [smem:[%s8]]
  %s10 = scalar_lea.smem %s0, 5
  %s11 = sld [smem:[%s10]]
  %s12 = scalar_lea.smem %s0, 6
  %s13 = sld [smem:[%s12]]
  %s14 = scalar_lea.smem %s0, 7
  %s15 = sld [smem:[%s14]]
  %s16 = scalar_lea.smem %s0, 8
  %s17 = sld [smem:[%s16]]
  %s18 = scalar_lea.smem %s0, 9
  %s19 = sld [smem:[%s18]]
  %s20 = scalar_lea.smem %s0, 10
  %s21 = sld [smem:[%s20]]
  %s22 = scalar_lea.smem %s0, 11
  %s23 = sld [smem:[%s22]]
  %s24 = scalar_lea.smem %s0, 12
  %s25 = sld [smem:[%s24]]
  %s26 = scalar_lea.smem %s0, 13
  %s27 = sld [smem:[%s26]]
  %s28 = scalar_lea.smem %s0, 14
  %s29 = sld [smem:[%s28]]
  %s30 = scalar_lea.smem %s0, 15
  %s31 = sld [smem:[%s30]]
  %s32 = scalar_lea.smem %s0, 16
  %s33 = sld [smem:[%s32]]
  %s34 = scalar_lea.smem %s0, 17
  %s35 = sld [smem:[%s34]]
  %s36 = scalar_lea.smem %s0, 18
  %s37 = sld [smem:[%s36]]
  %s38 = scalar_lea.smem %s0, 19
  %s39 = sld [smem:[%s38]]
  %s40 = scalar_lea.smem %s0, 20
  %s41 = sld [smem:[%s40]]
  %s42 = scalar_lea.smem %s0, 21
  %s43 = sld [smem:[%s42]]
  %s44 = scalar_lea.smem %s0, 22
  %s45 = sld [smem:[%s44]]
  %s46 = scalar_lea.smem %s0, 23
  %s47 = sld [smem:[%s46]]
  %s48 = scalar_lea.smem %s0, 24
  %s49 = sld [smem:[%s48]]
  %s50 = scalar_lea.smem %s0, 25
  %s51 = sld [smem:[%s50]]
  %s52 = scalar_lea.smem %s0, 26
  %s53 = sld [smem:[%s52]]
  %s54 = scalar_lea.smem %s0, 27
  %s55 = sld [smem:[%s54]]
  %s56 = scalar_lea.smem %s0, 28
  %s57 = sld [smem:[%s56]]
  %s58 = scalar_lea.smem %s0, 29
  %s59 = sld [smem:[%s58]]
  %s60 = sld [smem:[#allocation0]]
  $region153: #{model1_forward.1} parent=0
    _
  %s62 = ssub.s32 1, %s60
  %s63 = scalar_select 0, %s62, %s60
  $region1: #{model1_forward.1} parent=0
    #allocation2 [shape = 'u8[958464]{0}', space=vmem, size = 0xea000, scoped, tag = 'input window, operand 4, single buffered']
    #allocation3 [shape = 's32[2]{0}', space=sflag, size = 0x8, scoped, tag = 'scoped memory for model1_forward.1']
    #allocation4 [shape = 's32[2]{0}', space=sflag, size = 0x8, scoped, tag = 'scoped memory for model1_forward.1']
    #allocation5 [shape = 'u8[1024]{0}', space=vmem, size = 0x400, scoped, tag = 'output window, operand 0']
    %64 = vsyncpa [#allocation3], 0
    %65 = vsyncpa [#allocation4], 0
    %s66 = scalar_lea.sflag [#allocation4], 1
    %67 = vsyncpa %s66, 0
    loop: start=0, step=1, limit=4
    $region2: #{model1_forward.1} parent=1 // loop_pre_header
      _
    $region3: #{model1_forward.1} parent=1 // loop_header
      %s69 = sphi 0, %s73
      %p70 = scmp.ge.s32.totalorder %s69, 4
      %s79 = sphi 0, %s81
      %s82 = sphi 0, %s79
      %s83 = sphi 0, %s82
      %s99 = sphi 0, %s83
      %s103 = sphi 0, %s103
      %s105 = sphi 0, %s103
      %s106 = sphi 0, %s105
      %s120 = sphi 0, %s106
      %s124 = sphi 0, %s124
      %s126 = sphi 0, %s124
      %s127 = sphi 0, %s126
      %s141 = sphi 0, %s127
      %s145 = sphi 0, %s145
      %s147 = sphi 0, %s145
      %s148 = sphi 0, %s147
      %s162 = sphi 0, %s148
      %s166 = sphi 0, %s166
      %s168 = sphi 0, %s166
      %s169 = sphi 0, %s168
      %s183 = sphi 0, %s169
      %s187 = sphi 0, %s187
      %s189 = sphi 0, %s187
      %s190 = sphi 0, %s189
      %s204 = sphi 0, %s190
      %s208 = sphi 0, %s208
      %s210 = sphi 0, %s208
      %s211 = sphi 0, %s210
      %s225 = sphi 0, %s211
      %s229 = sphi 0, %s229
      %s231 = sphi 0, %s229
      %s232 = sphi 0, %s231
      %s246 = sphi 0, %s232
      %s250 = sphi 0, %s250
      %s252 = sphi 0, %s250
      %s253 = sphi 0, %s252
      %s267 = sphi 0, %s253
      %s271 = sphi 0, %s271
      %s273 = sphi 0, %s271
      %s274 = sphi 0, %s273
      %s288 = sphi 0, %s274
      %s292 = sphi 0, %s292
      %s294 = sphi 0, %s292
      %s295 = sphi 0, %s294
      %s309 = sphi 0, %s295
      %s313 = sphi 0, %s313
      %s315 = sphi 0, %s313
      %s316 = sphi 0, %s315
      %s330 = sphi 0, %s316
      %s334 = sphi 0, %s334
      %s336 = sphi 0, %s334
      %s337 = sphi 0, %s336
      %s351 = sphi 0, %s337
      %s355 = sphi 0, %s355
      %s357 = sphi 0, %s355
      %s358 = sphi 0, %s357
      %s372 = sphi 0, %s358
      %s376 = sphi 0, %s376
      %s378 = sphi 0, %s376
      %s379 = sphi 0, %s378
      %s393 = sphi 0, %s379
      %s397 = sphi 0, %s397
      %s399 = sphi 0, %s397
      %s400 = sphi 0, %s399
      %s414 = sphi 0, %s400
      %s418 = sphi 0, %s418
      %s420 = sphi 0, %s418
      %s421 = sphi 0, %s420
      %s435 = sphi 0, %s421
      %s439 = sphi 0, %s439
      %s441 = sphi 0, %s439
      %s442 = sphi 0, %s441
      %s456 = sphi 0, %s442
      %s460 = sphi 0, %s460
      %s462 = sphi 0, %s460
      %s463 = sphi 0, %s462
      %s477 = sphi 0, %s463
      %s481 = sphi 0, %s481
      %s483 = sphi 0, %s481
      %s484 = sphi 0, %s483
      %s498 = sphi 0, %s484
      %s502 = sphi 0, %s502
      %s504 = sphi 0, %s502
      %s505 = sphi 0, %s504
      %s519 = sphi 0, %s505
      %s523 = sphi 0, %s523
      %s525 = sphi 0, %s523
      %s526 = sphi 0, %s525
      %s540 = sphi 0, %s526
      %s544 = sphi 0, %s544
      %s546 = sphi 0, %s544
      %s547 = sphi 0, %s546
      %s561 = sphi 0, %s547
      %s565 = sphi 0, %s565
      %s567 = sphi 0, %s565
      %s568 = sphi 0, %s567
      %s582 = sphi 0, %s568
      %s586 = sphi 0, %s586
      %s588 = sphi 0, %s586
      %s589 = sphi 0, %s588
      %s603 = sphi 0, %s589
      %s607 = sphi 0, %s607
      %s609 = sphi 0, %s607
      %s610 = sphi 0, %s609
      %s624 = sphi 0, %s610
      %s628 = sphi 0, %s628
      %s630 = sphi 0, %s628
      %s631 = sphi 0, %s630
      %s645 = sphi 0, %s631
      %s649 = sphi 0, %s649
      %s651 = sphi 0, %s649
      %s652 = sphi 0, %s651
      %s666 = sphi 0, %s652
      %s670 = sphi 0, %s670
      %s672 = sphi 0, %s670
      %s673 = sphi 0, %s672
      %s687 = sphi 0, %s673
      %s693 = sphi 0, %s695
      %s696 = sphi 0, %s693
      %s697 = sphi 0, %s696
      %s713 = sphi 0, %s697
    $region4: #{model1_forward.1} parent=1 // loop_header_branch
      %72 = sbr.rel (%p70) target = $region8
    $region5: #{model1_forward.1} parent=1 // loop_body
      %s74 = ssub.s32 %s69, 1
      %s75 = ssub.s32 %s69, 2
      %s76 = sadd.s32 %s69, 1
      %s77 = ssub.s32 %s69, %s76
      %p78 = scmp.eq.s32.totalorder %s77, 0
      %s80 = sadd.s32 %s79, 1
      %s81 = scalar_select %p78, %s79, %s80
      %p84 = pneg %p78
      %p85 = scmp.eq.s32.totalorder %s69, 1
      %p86 = por %p84, %p85
      %p87 = scmp.ne.s32.totalorder %s79, %s82
      %p88 = scmp.eq.s32.totalorder %s69, 0
      %p89 = por %p87, %p88
      %p90 = scmp.ne.s32.totalorder %s79, %s82
      %p91 = scmp.eq.s32.totalorder %s74, 1
      %p92 = por %p90, %p91
      %p93 = scmp.ne.s32.totalorder %s82, %s83
      %p94 = scmp.eq.s32.totalorder %s74, 0
      %p95 = por %p93, %p94
      %p96 = scmp.ne.s32.totalorder %s82, %s83
      %p97 = scmp.eq.s32.totalorder %s75, 1
      %p98 = por %p96, %p97
      %p100 = scmp.ne.s32.totalorder %s83, %s99
      %p101 = scmp.eq.s32.totalorder %s75, 0
      %p102 = por %p100, %p101
      %s104 = sadd.s32 %s103, 1
      %p107 = scmp.eq.s32.totalorder %s69, 1
      %p108 = scmp.ne.s32.totalorder %s103, %s105
      %p109 = scmp.eq.s32.totalorder %s69, 0
      %p110 = por %p108, %p109
      %p111 = scmp.ne.s32.totalorder %s103, %s105
      %p112 = scmp.eq.s32.totalorder %s74, 1
      %p113 = por %p111, %p112
      %p114 = scmp.ne.s32.totalorder %s105, %s106
      %p115 = scmp.eq.s32.totalorder %s74, 0
      %p116 = por %p114, %p115
      %p117 = scmp.ne.s32.totalorder %s105, %s106
      %p118 = scmp.eq.s32.totalorder %s75, 1
      %p119 = por %p117, %p118
      %p121 = scmp.ne.s32.totalorder %s106, %s120
      %p122 = scmp.eq.s32.totalorder %s75, 0
      %p123 = por %p121, %p122
      %s125 = sadd.s32 %s124, 1
      %p128 = scmp.eq.s32.totalorder %s69, 1
      %p129 = scmp.ne.s32.totalorder %s124, %s126
      %p130 = scmp.eq.s32.totalorder %s69, 0
      %p131 = por %p129, %p130
      %p132 = scmp.ne.s32.totalorder %s124, %s126
      %p133 = scmp.eq.s32.totalorder %s74, 1
      %p134 = por %p132, %p133
      %p135 = scmp.ne.s32.totalorder %s126, %s127
      %p136 = scmp.eq.s32.totalorder %s74, 0
      %p137 = por %p135, %p136
      %p138 = scmp.ne.s32.totalorder %s126, %s127
      %p139 = scmp.eq.s32.totalorder %s75, 1
      %p140 = por %p138, %p139
      %p142 = scmp.ne.s32.totalorder %s127, %s141
      %p143 = scmp.eq.s32.totalorder %s75, 0
      %p144 = por %p142, %p143
      %s146 = sadd.s32 %s145, 1
      %p149 = scmp.eq.s32.totalorder %s69, 1
      %p150 = scmp.ne.s32.totalorder %s145, %s147
      %p151 = scmp.eq.s32.totalorder %s69, 0
      %p152 = por %p150, %p151
      %p153 = scmp.ne.s32.totalorder %s145, %s147
      %p154 = scmp.eq.s32.totalorder %s74, 1
      %p155 = por %p153, %p154
      %p156 = scmp.ne.s32.totalorder %s147, %s148
      %p157 = scmp.eq.s32.totalorder %s74, 0
      %p158 = por %p156, %p157
      %p159 = scmp.ne.s32.totalorder %s147, %s148
      %p160 = scmp.eq.s32.totalorder %s75, 1
      %p161 = por %p159, %p160
      %p163 = scmp.ne.s32.totalorder %s148, %s162
      %p164 = scmp.eq.s32.totalorder %s75, 0
      %p165 = por %p163, %p164
      %s167 = sadd.s32 %s166, 1
      %p170 = scmp.eq.s32.totalorder %s69, 1
      %p171 = scmp.ne.s32.totalorder %s166, %s168
      %p172 = scmp.eq.s32.totalorder %s69, 0
      %p173 = por %p171, %p172
      %p174 = scmp.ne.s32.totalorder %s166, %s168
      %p175 = scmp.eq.s32.totalorder %s74, 1
      %p176 = por %p174, %p175
      %p177 = scmp.ne.s32.totalorder %s168, %s169
      %p178 = scmp.eq.s32.totalorder %s74, 0
      %p179 = por %p177, %p178
      %p180 = scmp.ne.s32.totalorder %s168, %s169
      %p181 = scmp.eq.s32.totalorder %s75, 1
      %p182 = por %p180, %p181
      %p184 = scmp.ne.s32.totalorder %s169, %s183
      %p185 = scmp.eq.s32.totalorder %s75, 0
      %p186 = por %p184, %p185
      %s188 = sadd.s32 %s187, 1
      %p191 = scmp.eq.s32.totalorder %s69, 1
      %p192 = scmp.ne.s32.totalorder %s187, %s189
      %p193 = scmp.eq.s32.totalorder %s69, 0
      %p194 = por %p192, %p193
      %p195 = scmp.ne.s32.totalorder %s187, %s189
      %p196 = scmp.eq.s32.totalorder %s74, 1
      %p197 = por %p195, %p196
      %p198 = scmp.ne.s32.totalorder %s189, %s190
      %p199 = scmp.eq.s32.totalorder %s74, 0
      %p200 = por %p198, %p199
      %p201 = scmp.ne.s32.totalorder %s189, %s190
      %p202 = scmp.eq.s32.totalorder %s75, 1
      %p203 = por %p201, %p202
      %p205 = scmp.ne.s32.totalorder %s190, %s204
      %p206 = scmp.eq.s32.totalorder %s75, 0
      %p207 = por %p205, %p206
      %s209 = sadd.s32 %s208, 1
      %p212 = scmp.eq.s32.totalorder %s69, 1
      %p213 = scmp.ne.s32.totalorder %s208, %s210
      %p214 = scmp.eq.s32.totalorder %s69, 0
      %p215 = por %p213, %p214
      %p216 = scmp.ne.s32.totalorder %s208, %s210
      %p217 = scmp.eq.s32.totalorder %s74, 1
      %p218 = por %p216, %p217
      %p219 = scmp.ne.s32.totalorder %s210, %s211
      %p220 = scmp.eq.s32.totalorder %s74, 0
      %p221 = por %p219, %p220
      %p222 = scmp.ne.s32.totalorder %s210, %s211
      %p223 = scmp.eq.s32.totalorder %s75, 1
      %p224 = por %p222, %p223
      %p226 = scmp.ne.s32.totalorder %s211, %s225
      %p227 = scmp.eq.s32.totalorder %s75, 0
      %p228 = por %p226, %p227
      %s230 = sadd.s32 %s229, 1
      %p233 = scmp.eq.s32.totalorder %s69, 1
      %p234 = scmp.ne.s32.totalorder %s229, %s231
      %p235 = scmp.eq.s32.totalorder %s69, 0
      %p236 = por %p234, %p235
      %p237 = scmp.ne.s32.totalorder %s229, %s231
      %p238 = scmp.eq.s32.totalorder %s74, 1
      %p239 = por %p237, %p238
      %p240 = scmp.ne.s32.totalorder %s231, %s232
      %p241 = scmp.eq.s32.totalorder %s74, 0
      %p242 = por %p240, %p241
      %p243 = scmp.ne.s32.totalorder %s231, %s232
      %p244 = scmp.eq.s32.totalorder %s75, 1
      %p245 = por %p243, %p244
      %p247 = scmp.ne.s32.totalorder %s232, %s246
      %p248 = scmp.eq.s32.totalorder %s75, 0
      %p249 = por %p247, %p248
      %s251 = sadd.s32 %s250, 1
      %p254 = scmp.eq.s32.totalorder %s69, 1
      %p255 = scmp.ne.s32.totalorder %s250, %s252
      %p256 = scmp.eq.s32.totalorder %s69, 0
      %p257 = por %p255, %p256
      %p258 = scmp.ne.s32.totalorder %s250, %s252
      %p259 = scmp.eq.s32.totalorder %s74, 1
      %p260 = por %p258, %p259
      %p261 = scmp.ne.s32.totalorder %s252, %s253
      %p262 = scmp.eq.s32.totalorder %s74, 0
      %p263 = por %p261, %p262
      %p264 = scmp.ne.s32.totalorder %s252, %s253
      %p265 = scmp.eq.s32.totalorder %s75, 1
      %p266 = por %p264, %p265
      %p268 = scmp.ne.s32.totalorder %s253, %s267
      %p269 = scmp.eq.s32.totalorder %s75, 0
      %p270 = por %p268, %p269
      %s272 = sadd.s32 %s271, 1
      %p275 = scmp.eq.s32.totalorder %s69, 1
      %p276 = scmp.ne.s32.totalorder %s271, %s273
      %p277 = scmp.eq.s32.totalorder %s69, 0
      %p278 = por %p276, %p277
      %p279 = scmp.ne.s32.totalorder %s271, %s273
      %p280 = scmp.eq.s32.totalorder %s74, 1
      %p281 = por %p279, %p280
      %p282 = scmp.ne.s32.totalorder %s273, %s274
      %p283 = scmp.eq.s32.totalorder %s74, 0
      %p284 = por %p282, %p283
      %p285 = scmp.ne.s32.totalorder %s273, %s274
      %p286 = scmp.eq.s32.totalorder %s75, 1
      %p287 = por %p285, %p286
      %p289 = scmp.ne.s32.totalorder %s274, %s288
      %p290 = scmp.eq.s32.totalorder %s75, 0
      %p291 = por %p289, %p290
      %s293 = sadd.s32 %s292, 1
      %p296 = scmp.eq.s32.totalorder %s69, 1
      %p297 = scmp.ne.s32.totalorder %s292, %s294
      %p298 = scmp.eq.s32.totalorder %s69, 0
      %p299 = por %p297, %p298
      %p300 = scmp.ne.s32.totalorder %s292, %s294
      %p301 = scmp.eq.s32.totalorder %s74, 1
      %p302 = por %p300, %p301
      %p303 = scmp.ne.s32.totalorder %s294, %s295
      %p304 = scmp.eq.s32.totalorder %s74, 0
      %p305 = por %p303, %p304
      %p306 = scmp.ne.s32.totalorder %s294, %s295
      %p307 = scmp.eq.s32.totalorder %s75, 1
      %p308 = por %p306, %p307
      %p310 = scmp.ne.s32.totalorder %s295, %s309
      %p311 = scmp.eq.s32.totalorder %s75, 0
      %p312 = por %p310, %p311
      %s314 = sadd.s32 %s313, 1
      %p317 = scmp.eq.s32.totalorder %s69, 1
      %p318 = scmp.ne.s32.totalorder %s313, %s315
      %p319 = scmp.eq.s32.totalorder %s69, 0
      %p320 = por %p318, %p319
      %p321 = scmp.ne.s32.totalorder %s313, %s315
      %p322 = scmp.eq.s32.totalorder %s74, 1
      %p323 = por %p321, %p322
      %p324 = scmp.ne.s32.totalorder %s315, %s316
      %p325 = scmp.eq.s32.totalorder %s74, 0
      %p326 = por %p324, %p325
      %p327 = scmp.ne.s32.totalorder %s315, %s316
      %p328 = scmp.eq.s32.totalorder %s75, 1
      %p329 = por %p327, %p328
      %p331 = scmp.ne.s32.totalorder %s316, %s330
      %p332 = scmp.eq.s32.totalorder %s75, 0
      %p333 = por %p331, %p332
      %s335 = sadd.s32 %s334, 1
      %p338 = scmp.eq.s32.totalorder %s69, 1
      %p339 = scmp.ne.s32.totalorder %s334, %s336
      %p340 = scmp.eq.s32.totalorder %s69, 0
      %p341 = por %p339, %p340
      %p342 = scmp.ne.s32.totalorder %s334, %s336
      %p343 = scmp.eq.s32.totalorder %s74, 1
      %p344 = por %p342, %p343
      %p345 = scmp.ne.s32.totalorder %s336, %s337
      %p346 = scmp.eq.s32.totalorder %s74, 0
      %p347 = por %p345, %p346
      %p348 = scmp.ne.s32.totalorder %s336, %s337
      %p349 = scmp.eq.s32.totalorder %s75, 1
      %p350 = por %p348, %p349
      %p352 = scmp.ne.s32.totalorder %s337, %s351
      %p353 = scmp.eq.s32.totalorder %s75, 0
      %p354 = por %p352, %p353
      %s356 = sadd.s32 %s355, 1
      %p359 = scmp.eq.s32.totalorder %s69, 1
      %p360 = scmp.ne.s32.totalorder %s355, %s357
      %p361 = scmp.eq.s32.totalorder %s69, 0
      %p362 = por %p360, %p361
      %p363 = scmp.ne.s32.totalorder %s355, %s357
      %p364 = scmp.eq.s32.totalorder %s74, 1
      %p365 = por %p363, %p364
      %p366 = scmp.ne.s32.totalorder %s357, %s358
      %p367 = scmp.eq.s32.totalorder %s74, 0
      %p368 = por %p366, %p367
      %p369 = scmp.ne.s32.totalorder %s357, %s358
      %p370 = scmp.eq.s32.totalorder %s75, 1
      %p371 = por %p369, %p370
      %p373 = scmp.ne.s32.totalorder %s358, %s372
      %p374 = scmp.eq.s32.totalorder %s75, 0
      %p375 = por %p373, %p374
      %s377 = sadd.s32 %s376, 1
      %p380 = scmp.eq.s32.totalorder %s69, 1
      %p381 = scmp.ne.s32.totalorder %s376, %s378
      %p382 = scmp.eq.s32.totalorder %s69, 0
      %p383 = por %p381, %p382
      %p384 = scmp.ne.s32.totalorder %s376, %s378
      %p385 = scmp.eq.s32.totalorder %s74, 1
      %p386 = por %p384, %p385
      %p387 = scmp.ne.s32.totalorder %s378, %s379
      %p388 = scmp.eq.s32.totalorder %s74, 0
      %p389 = por %p387, %p388
      %p390 = scmp.ne.s32.totalorder %s378, %s379
      %p391 = scmp.eq.s32.totalorder %s75, 1
      %p392 = por %p390, %p391
      %p394 = scmp.ne.s32.totalorder %s379, %s393
      %p395 = scmp.eq.s32.totalorder %s75, 0
      %p396 = por %p394, %p395
      %s398 = sadd.s32 %s397, 1
      %p401 = scmp.eq.s32.totalorder %s69, 1
      %p402 = scmp.ne.s32.totalorder %s397, %s399
      %p403 = scmp.eq.s32.totalorder %s69, 0
      %p404 = por %p402, %p403
      %p405 = scmp.ne.s32.totalorder %s397, %s399
      %p406 = scmp.eq.s32.totalorder %s74, 1
      %p407 = por %p405, %p406
      %p408 = scmp.ne.s32.totalorder %s399, %s400
      %p409 = scmp.eq.s32.totalorder %s74, 0
      %p410 = por %p408, %p409
      %p411 = scmp.ne.s32.totalorder %s399, %s400
      %p412 = scmp.eq.s32.totalorder %s75, 1
      %p413 = por %p411, %p412
      %p415 = scmp.ne.s32.totalorder %s400, %s414
      %p416 = scmp.eq.s32.totalorder %s75, 0
      %p417 = por %p415, %p416
      %s419 = sadd.s32 %s418, 1
      %p422 = scmp.eq.s32.totalorder %s69, 1
      %p423 = scmp.ne.s32.totalorder %s418, %s420
      %p424 = scmp.eq.s32.totalorder %s69, 0
      %p425 = por %p423, %p424
      %p426 = scmp.ne.s32.totalorder %s418, %s420
      %p427 = scmp.eq.s32.totalorder %s74, 1
      %p428 = por %p426, %p427
      %p429 = scmp.ne.s32.totalorder %s420, %s421
      %p430 = scmp.eq.s32.totalorder %s74, 0
      %p431 = por %p429, %p430
      %p432 = scmp.ne.s32.totalorder %s420, %s421
      %p433 = scmp.eq.s32.totalorder %s75, 1
      %p434 = por %p432, %p433
      %p436 = scmp.ne.s32.totalorder %s421, %s435
      %p437 = scmp.eq.s32.totalorder %s75, 0
      %p438 = por %p436, %p437
      %s440 = sadd.s32 %s439, 1
      %p443 = scmp.eq.s32.totalorder %s69, 1
      %p444 = scmp.ne.s32.totalorder %s439, %s441
      %p445 = scmp.eq.s32.totalorder %s69, 0
      %p446 = por %p444, %p445
      %p447 = scmp.ne.s32.totalorder %s439, %s441
      %p448 = scmp.eq.s32.totalorder %s74, 1
      %p449 = por %p447, %p448
      %p450 = scmp.ne.s32.totalorder %s441, %s442
      %p451 = scmp.eq.s32.totalorder %s74, 0
      %p452 = por %p450, %p451
      %p453 = scmp.ne.s32.totalorder %s441, %s442
      %p454 = scmp.eq.s32.totalorder %s75, 1
      %p455 = por %p453, %p454
      %p457 = scmp.ne.s32.totalorder %s442, %s456
      %p458 = scmp.eq.s32.totalorder %s75, 0
      %p459 = por %p457, %p458
      %s461 = sadd.s32 %s460, 1
      %p464 = scmp.eq.s32.totalorder %s69, 1
      %p465 = scmp.ne.s32.totalorder %s460, %s462
      %p466 = scmp.eq.s32.totalorder %s69, 0
      %p467 = por %p465, %p466
      %p468 = scmp.ne.s32.totalorder %s460, %s462
      %p469 = scmp.eq.s32.totalorder %s74, 1
      %p470 = por %p468, %p469
      %p471 = scmp.ne.s32.totalorder %s462, %s463
      %p472 = scmp.eq.s32.totalorder %s74, 0
      %p473 = por %p471, %p472
      %p474 = scmp.ne.s32.totalorder %s462, %s463
      %p475 = scmp.eq.s32.totalorder %s75, 1
      %p476 = por %p474, %p475
      %p478 = scmp.ne.s32.totalorder %s463, %s477
      %p479 = scmp.eq.s32.totalorder %s75, 0
      %p480 = por %p478, %p479
      %s482 = sadd.s32 %s481, 1
      %p485 = scmp.eq.s32.totalorder %s69, 1
      %p486 = scmp.ne.s32.totalorder %s481, %s483
      %p487 = scmp.eq.s32.totalorder %s69, 0
      %p488 = por %p486, %p487
      %p489 = scmp.ne.s32.totalorder %s481, %s483
      %p490 = scmp.eq.s32.totalorder %s74, 1
      %p491 = por %p489, %p490
      %p492 = scmp.ne.s32.totalorder %s483, %s484
      %p493 = scmp.eq.s32.totalorder %s74, 0
      %p494 = por %p492, %p493
      %p495 = scmp.ne.s32.totalorder %s483, %s484
      %p496 = scmp.eq.s32.totalorder %s75, 1
      %p497 = por %p495, %p496
      %p499 = scmp.ne.s32.totalorder %s484, %s498
      %p500 = scmp.eq.s32.totalorder %s75, 0
      %p501 = por %p499, %p500
      %s503 = sadd.s32 %s502, 1
      %p506 = scmp.eq.s32.totalorder %s69, 1
      %p507 = scmp.ne.s32.totalorder %s502, %s504
      %p508 = scmp.eq.s32.totalorder %s69, 0
      %p509 = por %p507, %p508
      %p510 = scmp.ne.s32.totalorder %s502, %s504
      %p511 = scmp.eq.s32.totalorder %s74, 1
      %p512 = por %p510, %p511
      %p513 = scmp.ne.s32.totalorder %s504, %s505
      %p514 = scmp.eq.s32.totalorder %s74, 0
      %p515 = por %p513, %p514
      %p516 = scmp.ne.s32.totalorder %s504, %s505
      %p517 = scmp.eq.s32.totalorder %s75, 1
      %p518 = por %p516, %p517
      %p520 = scmp.ne.s32.totalorder %s505, %s519
      %p521 = scmp.eq.s32.totalorder %s75, 0
      %p522 = por %p520, %p521
      %s524 = sadd.s32 %s523, 1
      %p527 = scmp.eq.s32.totalorder %s69, 1
      %p528 = scmp.ne.s32.totalorder %s523, %s525
      %p529 = scmp.eq.s32.totalorder %s69, 0
      %p530 = por %p528, %p529
      %p531 = scmp.ne.s32.totalorder %s523, %s525
      %p532 = scmp.eq.s32.totalorder %s74, 1
      %p533 = por %p531, %p532
      %p534 = scmp.ne.s32.totalorder %s525, %s526
      %p535 = scmp.eq.s32.totalorder %s74, 0
      %p536 = por %p534, %p535
      %p537 = scmp.ne.s32.totalorder %s525, %s526
      %p538 = scmp.eq.s32.totalorder %s75, 1
      %p539 = por %p537, %p538
      %p541 = scmp.ne.s32.totalorder %s526, %s540
      %p542 = scmp.eq.s32.totalorder %s75, 0
      %p543 = por %p541, %p542
      %s545 = sadd.s32 %s544, 1
      %p548 = scmp.eq.s32.totalorder %s69, 1
      %p549 = scmp.ne.s32.totalorder %s544, %s546
      %p550 = scmp.eq.s32.totalorder %s69, 0
      %p551 = por %p549, %p550
      %p552 = scmp.ne.s32.totalorder %s544, %s546
      %p553 = scmp.eq.s32.totalorder %s74, 1
      %p554 = por %p552, %p553
      %p555 = scmp.ne.s32.totalorder %s546, %s547
      %p556 = scmp.eq.s32.totalorder %s74, 0
      %p557 = por %p555, %p556
      %p558 = scmp.ne.s32.totalorder %s546, %s547
      %p559 = scmp.eq.s32.totalorder %s75, 1
      %p560 = por %p558, %p559
      %p562 = scmp.ne.s32.totalorder %s547, %s561
      %p563 = scmp.eq.s32.totalorder %s75, 0
      %p564 = por %p562, %p563
      %s566 = sadd.s32 %s565, 1
      %p569 = scmp.eq.s32.totalorder %s69, 1
      %p570 = scmp.ne.s32.totalorder %s565, %s567
      %p571 = scmp.eq.s32.totalorder %s69, 0
      %p572 = por %p570, %p571
      %p573 = scmp.ne.s32.totalorder %s565, %s567
      %p574 = scmp.eq.s32.totalorder %s74, 1
      %p575 = por %p573, %p574
      %p576 = scmp.ne.s32.totalorder %s567, %s568
      %p577 = scmp.eq.s32.totalorder %s74, 0
      %p578 = por %p576, %p577
      %p579 = scmp.ne.s32.totalorder %s567, %s568
      %p580 = scmp.eq.s32.totalorder %s75, 1
      %p581 = por %p579, %p580
      %p583 = scmp.ne.s32.totalorder %s568, %s582
      %p584 = scmp.eq.s32.totalorder %s75, 0
      %p585 = por %p583, %p584
      %s587 = sadd.s32 %s586, 1
      %p590 = scmp.eq.s32.totalorder %s69, 1
      %p591 = scmp.ne.s32.totalorder %s586, %s588
      %p592 = scmp.eq.s32.totalorder %s69, 0
      %p593 = por %p591, %p592
      %p594 = scmp.ne.s32.totalorder %s586, %s588
      %p595 = scmp.eq.s32.totalorder %s74, 1
      %p596 = por %p594, %p595
      %p597 = scmp.ne.s32.totalorder %s588, %s589
      %p598 = scmp.eq.s32.totalorder %s74, 0
      %p599 = por %p597, %p598
      %p600 = scmp.ne.s32.totalorder %s588, %s589
      %p601 = scmp.eq.s32.totalorder %s75, 1
      %p602 = por %p600, %p601
      %p604 = scmp.ne.s32.totalorder %s589, %s603
      %p605 = scmp.eq.s32.totalorder %s75, 0
      %p606 = por %p604, %p605
      %s608 = sadd.s32 %s607, 1
      %p611 = scmp.eq.s32.totalorder %s69, 1
      %p612 = scmp.ne.s32.totalorder %s607, %s609
      %p613 = scmp.eq.s32.totalorder %s69, 0
      %p614 = por %p612, %p613
      %p615 = scmp.ne.s32.totalorder %s607, %s609
      %p616 = scmp.eq.s32.totalorder %s74, 1
      %p617 = por %p615, %p616
      %p618 = scmp.ne.s32.totalorder %s609, %s610
      %p619 = scmp.eq.s32.totalorder %s74, 0
      %p620 = por %p618, %p619
      %p621 = scmp.ne.s32.totalorder %s609, %s610
      %p622 = scmp.eq.s32.totalorder %s75, 1
      %p623 = por %p621, %p622
      %p625 = scmp.ne.s32.totalorder %s610, %s624
      %p626 = scmp.eq.s32.totalorder %s75, 0
      %p627 = por %p625, %p626
      %s629 = sadd.s32 %s628, 1
      %p632 = scmp.eq.s32.totalorder %s69, 1
      %p633 = scmp.ne.s32.totalorder %s628, %s630
      %p634 = scmp.eq.s32.totalorder %s69, 0
      %p635 = por %p633, %p634
      %p636 = scmp.ne.s32.totalorder %s628, %s630
      %p637 = scmp.eq.s32.totalorder %s74, 1
      %p638 = por %p636, %p637
      %p639 = scmp.ne.s32.totalorder %s630, %s631
      %p640 = scmp.eq.s32.totalorder %s74, 0
      %p641 = por %p639, %p640
      %p642 = scmp.ne.s32.totalorder %s630, %s631
      %p643 = scmp.eq.s32.totalorder %s75, 1
      %p644 = por %p642, %p643
      %p646 = scmp.ne.s32.totalorder %s631, %s645
      %p647 = scmp.eq.s32.totalorder %s75, 0
      %p648 = por %p646, %p647
      %s650 = sadd.s32 %s649, 1
      %p653 = scmp.eq.s32.totalorder %s69, 1
      %p654 = scmp.ne.s32.totalorder %s649, %s651
      %p655 = scmp.eq.s32.totalorder %s69, 0
      %p656 = por %p654, %p655
      %p657 = scmp.ne.s32.totalorder %s649, %s651
      %p658 = scmp.eq.s32.totalorder %s74, 1
      %p659 = por %p657, %p658
      %p660 = scmp.ne.s32.totalorder %s651, %s652
      %p661 = scmp.eq.s32.totalorder %s74, 0
      %p662 = por %p660, %p661
      %p663 = scmp.ne.s32.totalorder %s651, %s652
      %p664 = scmp.eq.s32.totalorder %s75, 1
      %p665 = por %p663, %p664
      %p667 = scmp.ne.s32.totalorder %s652, %s666
      %p668 = scmp.eq.s32.totalorder %s75, 0
      %p669 = por %p667, %p668
      %s671 = sadd.s32 %s670, 1
      %p674 = scmp.eq.s32.totalorder %s69, 1
      %p675 = scmp.ne.s32.totalorder %s670, %s672
      %p676 = scmp.eq.s32.totalorder %s69, 0
      %p677 = por %p675, %p676
      %p678 = scmp.ne.s32.totalorder %s670, %s672
      %p679 = scmp.eq.s32.totalorder %s74, 1
      %p680 = por %p678, %p679
      %p681 = scmp.ne.s32.totalorder %s672, %s673
      %p682 = scmp.eq.s32.totalorder %s74, 0
      %p683 = por %p681, %p682
      %p684 = scmp.ne.s32.totalorder %s672, %s673
      %p685 = scmp.eq.s32.totalorder %s75, 1
      %p686 = por %p684, %p685
      %p688 = scmp.ne.s32.totalorder %s673, %s687
      %p689 = scmp.eq.s32.totalorder %s75, 0
      %p690 = por %p688, %p689
      %s691 = ssub.s32 %s69, %s76
      %p692 = scmp.eq.s32.totalorder %s691, 0
      %s694 = sadd.s32 %s693, 1
      %s695 = scalar_select %p692, %s693, %s694
      %p698 = pneg %p692
      %p699 = scmp.eq.s32.totalorder %s69, 1
      %p700 = por %p698, %p699
      %p701 = scmp.ne.s32.totalorder %s693, %s696
      %p702 = scmp.eq.s32.totalorder %s69, 0
      %p703 = por %p701, %p702
      %p704 = scmp.ne.s32.totalorder %s693, %s696
      %p705 = scmp.eq.s32.totalorder %s74, 1
      %p706 = por %p704, %p705
      %p707 = scmp.ne.s32.totalorder %s696, %s697
      %p708 = scmp.eq.s32.totalorder %s74, 0
      %p709 = por %p707, %p708
      %p710 = scmp.ne.s32.totalorder %s696, %s697
      %p711 = scmp.eq.s32.totalorder %s75, 1
      %p712 = por %p710, %p711
      %p714 = scmp.ne.s32.totalorder %s697, %s713
      %p715 = scmp.eq.s32.totalorder %s75, 0
      %p716 = por %p714, %p715
      %p717 = scmp.le.s32.totalorder 1, %s69
      %p718 = scmp.lt.s32.totalorder %s69, 3
      %p719 = pnand %p717, %p718
      %p720 = pneg %p719
      // Predicated region
      $region9: #{model1_forward.1} parent=5 // pred_check
        _
      $region10: #{model1_forward.1} parent=5 // pred_check_branch
        %722 = sbr.rel (%p719) target = $region12
      $region11: #{model1_forward.1} parent=5 // pred_region
        %s723 = ssub.s32 %s69, 1
        // Predicated region
        $region13: #{model1_forward.1} parent=11 // pred_check
          %p724 = pneg %p116
        $region14: #{model1_forward.1} parent=11 // pred_check_branch
          %726 = sbr.rel (%p724) target = $region16
        $region15: #{model1_forward.1} parent=11 // pred_region
          _
        $region16: #{model1_forward.1} parent=11 // pred_fallthru
          _
        // Predicated region
        $region17: #{model1_forward.1} parent=11 // pred_check
          %p727 = pneg %p137
        $region18: #{model1_forward.1} parent=11 // pred_check_branch
          %729 = sbr.rel (%p727) target = $region20
        $region19: #{model1_forward.1} parent=11 // pred_region
          _
        $region20: #{model1_forward.1} parent=11 // pred_fallthru
          _
        // Predicated region
        $region21: #{model1_forward.1} parent=11 // pred_check
          %p730 = pneg %p158
        $region22: #{model1_forward.1} parent=11 // pred_check_branch
          %732 = sbr.rel (%p730) target = $region24
        $region23: #{model1_forward.1} parent=11 // pred_region
          _
        $region24: #{model1_forward.1} parent=11 // pred_fallthru
          _
        // Predicated region
        $region25: #{model1_forward.1} parent=11 // pred_check
          %p733 = pneg %p179
        $region26: #{model1_forward.1} parent=11 // pred_check_branch
          %735 = sbr.rel (%p733) target = $region28
        $region27: #{model1_forward.1} parent=11 // pred_region
          %737 = vsyncadd [#allocation3], 0
          %s738 = sshll.u32 %s9, 4
          %s739 = int_to_ptr.hbm [resolvable:$true] %s738
          %s740 = sshll.u32 [#allocation2], 4
          %s741 = int_to_ptr.vmem [resolvable:$true] %s740
          %746 = dma.hbm_to_vmem [thread:$0]  %s739, 29952, %s741, [#allocation3], 384, 384, 24
        $region28: #{model1_forward.1} parent=11 // pred_fallthru
          _
        // Predicated region
        $region29: #{model1_forward.1} parent=11 // pred_check
          %p747 = pneg %p200
        $region30: #{model1_forward.1} parent=11 // pred_check_branch
          %749 = sbr.rel (%p747) target = $region32
        $region31: #{model1_forward.1} parent=11 // pred_region
          _
        $region32: #{model1_forward.1} parent=11 // pred_fallthru
          _
        // Predicated region
        $region33: #{model1_forward.1} parent=11 // pred_check
          %p750 = pneg %p221
        $region34: #{model1_forward.1} parent=11 // pred_check_branch
          %752 = sbr.rel (%p750) target = $region36
        $region35: #{model1_forward.1} parent=11 // pred_region
          _
        $region36: #{model1_forward.1} parent=11 // pred_fallthru
          _
        // Predicated region
        $region37: #{model1_forward.1} parent=11 // pred_check
          %p753 = pneg %p242
        $region38: #{model1_forward.1} parent=11 // pred_check_branch
          %755 = sbr.rel (%p753) target = $region40
        $region39: #{model1_forward.1} parent=11 // pred_region
          _
        $region40: #{model1_forward.1} parent=11 // pred_fallthru
          _
        // Predicated region
        $region41: #{model1_forward.1} parent=11 // pred_check
          %p756 = pneg %p263
        $region42: #{model1_forward.1} parent=11 // pred_check_branch
          %758 = sbr.rel (%p756) target = $region44
        $region43: #{model1_forward.1} parent=11 // pred_region
          _
        $region44: #{model1_forward.1} parent=11 // pred_fallthru
          _
        // Predicated region
        $region45: #{model1_forward.1} parent=11 // pred_check
          %p759 = pneg %p284
        $region46: #{model1_forward.1} parent=11 // pred_check_branch
          %761 = sbr.rel (%p759) target = $region48
        $region47: #{model1_forward.1} parent=11 // pred_region
          _
        $region48: #{model1_forward.1} parent=11 // pred_fallthru
          _
        // Predicated region
        $region49: #{model1_forward.1} parent=11 // pred_check
          %p762 = pneg %p305
        $region50: #{model1_forward.1} parent=11 // pred_check_branch
          %764 = sbr.rel (%p762) target = $region52
        $region51: #{model1_forward.1} parent=11 // pred_region
          _
        $region52: #{model1_forward.1} parent=11 // pred_fallthru
          _
        // Predicated region
        $region53: #{model1_forward.1} parent=11 // pred_check
          %p765 = pneg %p326
        $region54: #{model1_forward.1} parent=11 // pred_check_branch
          %767 = sbr.rel (%p765) target = $region56
        $region55: #{model1_forward.1} parent=11 // pred_region
          _
        $region56: #{model1_forward.1} parent=11 // pred_fallthru
          _
        // Predicated region
        $region57: #{model1_forward.1} parent=11 // pred_check
          %p768 = pneg %p347
        $region58: #{model1_forward.1} parent=11 // pred_check_branch
          %770 = sbr.rel (%p768) target = $region60
        $region59: #{model1_forward.1} parent=11 // pred_region
          _
        $region60: #{model1_forward.1} parent=11 // pred_fallthru
          _
        // Predicated region
        $region61: #{model1_forward.1} parent=11 // pred_check
          %p771 = pneg %p368
        $region62: #{model1_forward.1} parent=11 // pred_check_branch
          %773 = sbr.rel (%p771) target = $region64
        $region63: #{model1_forward.1} parent=11 // pred_region
          _
        $region64: #{model1_forward.1} parent=11 // pred_fallthru
          _
        // Predicated region
        $region65: #{model1_forward.1} parent=11 // pred_check
          %p774 = pneg %p389
        $region66: #{model1_forward.1} parent=11 // pred_check_branch
          %776 = sbr.rel (%p774) target = $region68
        $region67: #{model1_forward.1} parent=11 // pred_region
          _
        $region68: #{model1_forward.1} parent=11 // pred_fallthru
          _
        // Predicated region
        $region69: #{model1_forward.1} parent=11 // pred_check
          %p777 = pneg %p410
        $region70: #{model1_forward.1} parent=11 // pred_check_branch
          %779 = sbr.rel (%p777) target = $region72
        $region71: #{model1_forward.1} parent=11 // pred_region
          _
        $region72: #{model1_forward.1} parent=11 // pred_fallthru
          _
        // Predicated region
        $region73: #{model1_forward.1} parent=11 // pred_check
          %p780 = pneg %p431
        $region74: #{model1_forward.1} parent=11 // pred_check_branch
          %782 = sbr.rel (%p780) target = $region76
        $region75: #{model1_forward.1} parent=11 // pred_region
          _
        $region76: #{model1_forward.1} parent=11 // pred_fallthru
          _
        // Predicated region
        $region77: #{model1_forward.1} parent=11 // pred_check
          %p783 = pneg %p452
        $region78: #{model1_forward.1} parent=11 // pred_check_branch
          %785 = sbr.rel (%p783) target = $region80
        $region79: #{model1_forward.1} parent=11 // pred_region
          _
        $region80: #{model1_forward.1} parent=11 // pred_fallthru
          _
        // Predicated region
        $region81: #{model1_forward.1} parent=11 // pred_check
          %p786 = pneg %p473
        $region82: #{model1_forward.1} parent=11 // pred_check_branch
          %788 = sbr.rel (%p786) target = $region84
        $region83: #{model1_forward.1} parent=11 // pred_region
          _
        $region84: #{model1_forward.1} parent=11 // pred_fallthru
          _
        // Predicated region
        $region85: #{model1_forward.1} parent=11 // pred_check
          %p789 = pneg %p494
        $region86: #{model1_forward.1} parent=11 // pred_check_branch
          %791 = sbr.rel (%p789) target = $region88
        $region87: #{model1_forward.1} parent=11 // pred_region
          _
        $region88: #{model1_forward.1} parent=11 // pred_fallthru
          _
        // Predicated region
        $region89: #{model1_forward.1} parent=11 // pred_check
          %p792 = pneg %p515
        $region90: #{model1_forward.1} parent=11 // pred_check_branch
          %794 = sbr.rel (%p792) target = $region92
        $region91: #{model1_forward.1} parent=11 // pred_region
          _
        $region92: #{model1_forward.1} parent=11 // pred_fallthru
          _
        // Predicated region
        $region93: #{model1_forward.1} parent=11 // pred_check
          %p795 = pneg %p536
        $region94: #{model1_forward.1} parent=11 // pred_check_branch
          %797 = sbr.rel (%p795) target = $region96
        $region95: #{model1_forward.1} parent=11 // pred_region
          _
        $region96: #{model1_forward.1} parent=11 // pred_fallthru
          _
        // Predicated region
        $region97: #{model1_forward.1} parent=11 // pred_check
          %p798 = pneg %p557
        $region98: #{model1_forward.1} parent=11 // pred_check_branch
          %800 = sbr.rel (%p798) target = $region100
        $region99: #{model1_forward.1} parent=11 // pred_region
          _
        $region100: #{model1_forward.1} parent=11 // pred_fallthru
          _
        // Predicated region
        $region101: #{model1_forward.1} parent=11 // pred_check
          %p801 = pneg %p578
        $region102: #{model1_forward.1} parent=11 // pred_check_branch
          %803 = sbr.rel (%p801) target = $region104
        $region103: #{model1_forward.1} parent=11 // pred_region
          _
        $region104: #{model1_forward.1} parent=11 // pred_fallthru
          _
        // Predicated region
        $region105: #{model1_forward.1} parent=11 // pred_check
          %p804 = pneg %p599
        $region106: #{model1_forward.1} parent=11 // pred_check_branch
          %806 = sbr.rel (%p804) target = $region108
        $region107: #{model1_forward.1} parent=11 // pred_region
          _
        $region108: #{model1_forward.1} parent=11 // pred_fallthru
          _
        // Predicated region
        $region109: #{model1_forward.1} parent=11 // pred_check
          %p807 = pneg %p620
        $region110: #{model1_forward.1} parent=11 // pred_check_branch
          %809 = sbr.rel (%p807) target = $region112
        $region111: #{model1_forward.1} parent=11 // pred_region
          _
        $region112: #{model1_forward.1} parent=11 // pred_fallthru
          _
        // Predicated region
        $region113: #{model1_forward.1} parent=11 // pred_check
          %p810 = pneg %p641
        $region114: #{model1_forward.1} parent=11 // pred_check_branch
          %812 = sbr.rel (%p810) target = $region116
        $region115: #{model1_forward.1} parent=11 // pred_region
          _
        $region116: #{model1_forward.1} parent=11 // pred_fallthru
          _
        // Predicated region
        $region117: #{model1_forward.1} parent=11 // pred_check
          %p813 = pneg %p662
        $region118: #{model1_forward.1} parent=11 // pred_check_branch
          %815 = sbr.rel (%p813) target = $region120
        $region119: #{model1_forward.1} parent=11 // pred_region
          _
        $region120: #{model1_forward.1} parent=11 // pred_fallthru
          _
        // Predicated region
        $region121: #{model1_forward.1} parent=11 // pred_check
          %p816 = pneg %p683
        $region122: #{model1_forward.1} parent=11 // pred_check_branch
          %818 = sbr.rel (%p816) target = $region124
        $region123: #{model1_forward.1} parent=11 // pred_region
          _
        $region124: #{model1_forward.1} parent=11 // pred_fallthru
          _
      $region12: #{model1_forward.1} parent=5 // pred_fallthru
        _
      %p819 = scmp.lt.s32.totalorder %s69, 2
      // Predicated region
      $region125: #{model1_forward.1} parent=5 // pred_check
        %p820 = pneg %p819
      $region126: #{model1_forward.1} parent=5 // pred_check_branch
        %822 = sbr.rel (%p820) target = $region128
      $region127: #{model1_forward.1} parent=5 // pred_region
        // Predicated region
        $region129: #{model1_forward.1} parent=127 // pred_check
          %p823 = pneg %p89
        $region130: #{model1_forward.1} parent=127 // pred_check_branch
          %825 = sbr.rel (%p823) target = $region132
        $region131: #{model1_forward.1} parent=127 // pred_region
          %p826 = scmp.lt.s32.totalorder %s69, 1
          %s827 = scalar_select %p826, %s69, 1
          %s828 = smul.addr %s827, 4
          %s829 = smul.addr %s828, 8
          %s830 = scalar_lea.vmem %s1, %s829
        $region132: #{model1_forward.1} parent=127 // pred_fallthru
          _
      $region128: #{model1_forward.1} parent=5 // pred_fallthru
        _
      %p831 = scmp.le.s32.totalorder 1, %s69
      %p832 = scmp.lt.s32.totalorder %s69, 3
      %p833 = pnand %p831, %p832
      %p834 = pneg %p833
      // Predicated region
      $region133: #{model1_forward.1} parent=5 // pred_check
        _
      $region134: #{model1_forward.1} parent=5 // pred_check_branch
        %836 = sbr.rel (%p833) target = $region136
      $region135: #{model1_forward.1} parent=5 // pred_region
        %s837 = ssub.s32 %s69, 1
        // Predicated region
        $region137: #{model1_forward.1} parent=135 // pred_check
          %p838 = pneg %p179
        $region138: #{model1_forward.1} parent=135 // pred_check_branch
          %840 = sbr.rel (%p838) target = $region140
        $region139: #{model1_forward.1} parent=135 // pred_region
          %842 = dma.done [#allocation3], 29952
        $region140: #{model1_forward.1} parent=135 // pred_fallthru
          _
        %p843 = scmp.lt.s32.totalorder %s74, 1
        %s844 = scalar_select %p843, %s74, 1
        %s845 = smul.addr %s844, 4
        %s846 = smul.addr %s845, 8
        %s847 = scalar_lea.vmem %s1, %s846
        %p848 = pneg %p95
        %p849 = pneg %p92
        %p850 = pneg %p116
        %p851 = pneg %p113
        %p852 = pneg %p137
        %p853 = pneg %p134
        %p854 = pneg %p158
        %p855 = pneg %p155
        %p856 = pneg %p179
        %p857 = pneg %p176
        %p858 = pneg %p200
        %p859 = pneg %p197
        %p860 = pneg %p221
        %p861 = pneg %p218
        %p862 = pneg %p242
        %p863 = pneg %p239
        %p864 = pneg %p263
        %p865 = pneg %p260
        %p866 = pneg %p284
        %p867 = pneg %p281
        %p868 = pneg %p305
        %p869 = pneg %p302
        %p870 = pneg %p326
        %p871 = pneg %p323
        %p872 = pneg %p347
        %p873 = pneg %p344
        %p874 = pneg %p368
        %p875 = pneg %p365
        %p876 = pneg %p389
        %p877 = pneg %p386
        %p878 = pneg %p410
        %p879 = pneg %p407
        %p880 = pneg %p431
        %p881 = pneg %p428
        %p882 = pneg %p452
        %p883 = pneg %p449
        %p884 = pneg %p473
        %p885 = pneg %p470
        %p886 = pneg %p494
        %p887 = pneg %p491
        %p888 = pneg %p515
        %p889 = pneg %p512
        %p890 = pneg %p536
        %p891 = pneg %p533
        %p892 = pneg %p557
        %p893 = pneg %p554
        %p894 = pneg %p578
        %p895 = pneg %p575
        %p896 = pneg %p599
        %p897 = pneg %p596
        %p898 = pneg %p620
        %p899 = pneg %p617
        %p900 = pneg %p641
        %p901 = pneg %p638
        %p902 = pneg %p662
        %p903 = pneg %p659
        %p904 = pneg %p683
        %p905 = pneg %p680
        %p906 = pneg %p709
        %p907 = pneg %p706
        %s908 = sand.u32 %s696, 1
        %s909 = scalar_lea.sflag [#allocation4], %s908
        %s910 = sand.u32 %s696, 1
        %s911 = scalar_lea.vmem [#allocation5], %s910
        %p912 = scmp.lt.s32.totalorder %s74, 1
        %s913 = scalar_select %p912, %s74, 1
        %s914 = smul.addr %s913, 4
        %s915 = smul.addr %s914, 8
        %s916 = scalar_lea.vmem %s1, %s915
        %v917 = vld [vmem:[%s916] sm:$0xff]
        %v918 = vld [vmem:[%s916 + $0x8] sm:$0xff]
        %v919 = vld [vmem:[%s916 + $0x10] sm:$0xff]
        %v920 = vld [vmem:[%s916 + $0x18] sm:$0xf]
        %v921 = vld [vmem:[%s3] sm:$0xff]
        %v922 = vld [vmem:[%s3 + $0x8] sm:$0xff]
        %v923 = vld [vmem:[%s3 + $0x10] sm:$0xff]
        %v924 = vld [vmem:[%s3 + $0x18] sm:$0xff]
        %v925 = vld [vmem:[%s3 + $0x20] sm:$0xff]
        %v926 = vld [vmem:[%s3 + $0x28] sm:$0xff]
        %v927 = vld [vmem:[%s3 + $0x30] sm:$0xf]
        %v928 = vld [vmem:[%s3 + $0x38] sm:$0xf]
        %s929 = scalar_lea.vmem %s3, 64
        %v930 = vld [vmem:[%s929] sm:$0xff]
        %v931 = vld [vmem:[%s929 + $0x8] sm:$0xff]
        %v932 = vld [vmem:[%s929 + $0x10] sm:$0xff]
        %v933 = vld [vmem:[%s929 + $0x18] sm:$0xff]
        %v934 = vld [vmem:[%s929 + $0x20] sm:$0xff]
        %v935 = vld [vmem:[%s929 + $0x28] sm:$0xff]
        %v936 = vld [vmem:[%s929 + $0x30] sm:$0xf]
        %v937 = vld [vmem:[%s929 + $0x38] sm:$0xf]
        %vm942 = vcmask 1046528
        %v943 = vrot.slane %v917, 1
        %v944 = vrot.slane %v918, 1
        %v945 = vsel %vm942, %v943, %v944
        %v946 = vrot.slane %v919, 1
        %v947 = vsel %vm942, %v944, %v946
        %v948 = vrot.slane %v920, 1
        %v949 = vsel %vm942, %v946, %v948
        %vm950 = vcmask 228352
        %v951 = vsel %vm950, %v945, 0
        %v953 = vsel %vm950, %v947, 0
        %v955 = vsel %vm950, %v949, 0
        %v957 = vsel %vm950, %v948, 0
        %vm959 = vcmask 1043456
        %v961 = vsel %vm959, %v936, 0
        %v964 = vsel %vm959, %v937, 0
        %966 = vmatpush.msra.mxu0 0.0
        %967 = vmatpush.msra.mxu0 0.0
        %968 = vmatpush.msra.mxu0 0.0
        %969 = vmatpush.msra.mxu0 0.0
        %970 = vmatpush.msra.mxu0 0.0
        %971 = vmatpush.msra.mxu0 0.0
        %972 = vmatpush.msra.mxu0 0.0
        %973 = vmatpush.msra.mxu0 0.0
        %974 = vmatpush.msra.mxu0 0.0
        %975 = vmatpush.msra.mxu0 0.0
        %976 = vmatpush.msra.mxu0 0.0
        %977 = vmatpush.msra.mxu0 0.0
        %978 = vmatpush.msra.mxu0 %v961
        %979 = vmatpush.msra.mxu0 %v934
        %980 = vmatpush.msra.mxu0 %v932
        %981 = vmatpush.msra.mxu0 %v930
        %982 = vmatmul.f32.gmra.mxu0 %v951
        %v983 = vpop.f32.mrf.mxu0
        %v984 = vadd.f32 0.0, %v983
        %985 = vmatmul.f32.gmra.mxu0 %v953
        %v986 = vpop.f32.mrf.mxu0
        %v987 = vadd.f32 0.0, %v986
        %988 = vmatmul.f32.gmra.mxu0 %v955
        %v989 = vpop.f32.mrf.mxu0
        %v990 = vadd.f32 0.0, %v989
        %991 = vmatmul.f32.gmra.mxu0 %v957
        %v992 = vpop.f32.mrf.mxu0
        %v993 = vadd.f32 0.0, %v992
        %994 = vdwg.mxu0
        %995 = vmatpush.msra.mxu0 0.0
        %996 = vmatpush.msra.mxu0 0.0
        %997 = vmatpush.msra.mxu0 0.0
        %998 = vmatpush.msra.mxu0 0.0
        %999 = vmatpush.msra.mxu0 0.0
        %1000 = vmatpush.msra.mxu0 0.0
        %1001 = vmatpush.msra.mxu0 0.0
        %1002 = vmatpush.msra.mxu0 0.0
        %1003 = vmatpush.msra.mxu0 0.0
        %1004 = vmatpush.msra.mxu0 0.0
        %1005 = vmatpush.msra.mxu0 0.0
        %1006 = vmatpush.msra.mxu0 0.0
        %1007 = vmatpush.msra.mxu0 %v964
        %1008 = vmatpush.msra.mxu0 %v935
        %1009 = vmatpush.msra.mxu0 %v933
        %1010 = vmatpush.msra.mxu0 %v931
        %1011 = vmatmul.f32.gmra.mxu0 %v951
        %v1012 = vpop.f32.mrf.mxu0
        %v1013 = vadd.f32 0.0, %v1012
        %1014 = vmatmul.f32.gmra.mxu0 %v953
        %v1015 = vpop.f32.mrf.mxu0
        %v1016 = vadd.f32 0.0, %v1015
        %1017 = vmatmul.f32.gmra.mxu0 %v955
        %v1018 = vpop.f32.mrf.mxu0
        %v1019 = vadd.f32 0.0, %v1018
        %1020 = vmatmul.f32.gmra.mxu0 %v957
        %v1021 = vpop.f32.mrf.mxu0
        %v1022 = vadd.f32 0.0, %v1021
        %1023 = vdwg.mxu0
        %v1024 = vsel %vm950, %v917, 0
        %v1026 = vsel %vm950, %v918, 0
        %v1028 = vsel %vm950, %v919, 0
        %v1030 = vsel %vm950, %v920, 0
        %v1033 = vsel %vm959, %v927, 0
        %v1036 = vsel %vm959, %v928, 0
        %1038 = vmatpush.msra.mxu0 0.0
        %1039 = vmatpush.msra.mxu0 0.0
        %1040 = vmatpush.msra.mxu0 0.0
        %1041 = vmatpush.msra.mxu0 0.0
        %1042 = vmatpush.msra.mxu0 0.0
        %1043 = vmatpush.msra.mxu0 0.0
        %1044 = vmatpush.msra.mxu0 0.0
        %1045 = vmatpush.msra.mxu0 0.0
        %1046 = vmatpush.msra.mxu0 0.0
        %1047 = vmatpush.msra.mxu0 0.0
        %1048 = vmatpush.msra.mxu0 0.0
        %1049 = vmatpush.msra.mxu0 0.0
        %1050 = vmatpush.msra.mxu0 %v1033
        %1051 = vmatpush.msra.mxu0 %v925
        %1052 = vmatpush.msra.mxu0 %v923
        %1053 = vmatpush.msra.mxu0 %v921
        %1054 = vmatmul.f32.gmra.mxu0 %v1024
        %v1055 = vpop.f32.mrf.mxu0
        %v1056 = vadd.f32 %v984, %v1055
        %1057 = vmatmul.f32.gmra.mxu0 %v1026
        %v1058 = vpop.f32.mrf.mxu0
        %v1059 = vadd.f32 %v987, %v1058
        %1060 = vmatmul.f32.gmra.mxu0 %v1028
        %v1061 = vpop.f32.mrf.mxu0
        %v1062 = vadd.f32 %v990, %v1061
        %1063 = vmatmul.f32.gmra.mxu0 %v1030
        %v1064 = vpop.f32.mrf.mxu0
        %v1065 = vadd.f32 %v993, %v1064
        %1066 = vdwg.mxu0
        %1067 = vmatpush.msra.mxu0 0.0
        %1068 = vmatpush.msra.mxu0 0.0
        %1069 = vmatpush.msra.mxu0 0.0
        %1070 = vmatpush.msra.mxu0 0.0
        %1071 = vmatpush.msra.mxu0 0.0
        %1072 = vmatpush.msra.mxu0 0.0
        %1073 = vmatpush.msra.mxu0 0.0
        %1074 = vmatpush.msra.mxu0 0.0
        %1075 = vmatpush.msra.mxu0 0.0
        %1076 = vmatpush.msra.mxu0 0.0
        %1077 = vmatpush.msra.mxu0 0.0
        %1078 = vmatpush.msra.mxu0 0.0
        %1079 = vmatpush.msra.mxu0 %v1036
        %1080 = vmatpush.msra.mxu0 %v926
        %1081 = vmatpush.msra.mxu0 %v924
        %1082 = vmatpush.msra.mxu0 %v922
        %1083 = vmatmul.f32.gmra.mxu0 %v1024
        %v1084 = vpop.f32.mrf.mxu0
        %v1085 = vadd.f32 %v1013, %v1084
        %1086 = vmatmul.f32.gmra.mxu0 %v1026
        %v1087 = vpop.f32.mrf.mxu0
        %v1088 = vadd.f32 %v1016, %v1087
        %1089 = vmatmul.f32.gmra.mxu0 %v1028
        %v1090 = vpop.f32.mrf.mxu0
        %v1091 = vadd.f32 %v1019, %v1090
        %1092 = vmatmul.f32.gmra.mxu0 %v1030
        %v1093 = vpop.f32.mrf.mxu0
        %v1094 = vadd.f32 %v1022, %v1093
        %1095 = vdwg.mxu0
        %s1096 = scalar_lea.vmem %s3, 128
        %v1097 = vld [vmem:[%s1096] sm:$0xff]
        %v1098 = vld [vmem:[%s1096 + $0x8] sm:$0xff]
        %v1099 = vld [vmem:[%s1096 + $0x10] sm:$0xff]
        %v1100 = vld [vmem:[%s1096 + $0x18] sm:$0xff]
        %v1101 = vld [vmem:[%s1096 + $0x20] sm:$0xff]
        %v1102 = vld [vmem:[%s1096 + $0x28] sm:$0xff]
        %v1103 = vld [vmem:[%s1096 + $0x30] sm:$0xf]
        %v1104 = vld [vmem:[%s1096 + $0x38] sm:$0xf]
        %vm1105 = vcmask 1045504
        %v1106 = vrot.slane %v917, 2
        %v1107 = vrot.slane %v918, 2
        %v1108 = vsel %vm1105, %v1106, %v1107
        %v1109 = vrot.slane %v919, 2
        %v1110 = vsel %vm1105, %v1107, %v1109
        %v1111 = vrot.slane %v920, 2
        %v1112 = vsel %vm1105, %v1109, %v1111
        %v1113 = vsel %vm950, %v1108, 0
        %v1115 = vsel %vm950, %v1110, 0
        %v1117 = vsel %vm950, %v1112, 0
        %v1119 = vsel %vm950, %v1111, 0
        %v1122 = vsel %vm959, %v1103, 0
        %v1125 = vsel %vm959, %v1104, 0
        %1127 = vmatpush.msra.mxu0 0.0
        %1128 = vmatpush.msra.mxu0 0.0
        %1129 = vmatpush.msra.mxu0 0.0
        %1130 = vmatpush.msra.mxu0 0.0
        %1131 = vmatpush.msra.mxu0 0.0
        %1132 = vmatpush.msra.mxu0 0.0
        %1133 = vmatpush.msra.mxu0 0.0
        %1134 = vmatpush.msra.mxu0 0.0
        %1135 = vmatpush.msra.mxu0 0.0
        %1136 = vmatpush.msra.mxu0 0.0
        %1137 = vmatpush.msra.mxu0 0.0
        %1138 = vmatpush.msra.mxu0 0.0
        %1139 = vmatpush.msra.mxu0 %v1122
        %1140 = vmatpush.msra.mxu0 %v1101
        %1141 = vmatpush.msra.mxu0 %v1099
        %1142 = vmatpush.msra.mxu0 %v1097
        %1143 = vmatmul.f32.gmra.mxu0 %v1113
        %v1144 = vpop.f32.mrf.mxu0
        %v1145 = vadd.f32 0.0, %v1144
        %1146 = vmatmul.f32.gmra.mxu0 %v1115
        %v1147 = vpop.f32.mrf.mxu0
        %v1148 = vadd.f32 0.0, %v1147
        %1149 = vmatmul.f32.gmra.mxu0 %v1117
        %v1150 = vpop.f32.mrf.mxu0
        %v1151 = vadd.f32 0.0, %v1150
        %1152 = vmatmul.f32.gmra.mxu0 %v1119
        %v1153 = vpop.f32.mrf.mxu0
        %v1154 = vadd.f32 0.0, %v1153
        %1155 = vdwg.mxu0
        %1156 = vmatpush.msra.mxu0 0.0
        %1157 = vmatpush.msra.mxu0 0.0
        %1158 = vmatpush.msra.mxu0 0.0
        %1159 = vmatpush.msra.mxu0 0.0
        %1160 = vmatpush.msra.mxu0 0.0
        %1161 = vmatpush.msra.mxu0 0.0
        %1162 = vmatpush.msra.mxu0 0.0
        %1163 = vmatpush.msra.mxu0 0.0
        %1164 = vmatpush.msra.mxu0 0.0
        %1165 = vmatpush.msra.mxu0 0.0
        %1166 = vmatpush.msra.mxu0 0.0
        %1167 = vmatpush.msra.mxu0 0.0
        %1168 = vmatpush.msra.mxu0 %v1125
        %1169 = vmatpush.msra.mxu0 %v1102
        %1170 = vmatpush.msra.mxu0 %v1100
        %1171 = vmatpush.msra.mxu0 %v1098
        %1172 = vmatmul.f32.gmra.mxu0 %v1113
        %v1173 = vpop.f32.mrf.mxu0
        %v1174 = vadd.f32 0.0, %v1173
        %1175 = vmatmul.f32.gmra.mxu0 %v1115
        %v1176 = vpop.f32.mrf.mxu0
        %v1177 = vadd.f32 0.0, %v1176
        %1178 = vmatmul.f32.gmra.mxu0 %v1117
        %v1179 = vpop.f32.mrf.mxu0
        %v1180 = vadd.f32 0.0, %v1179
        %1181 = vmatmul.f32.gmra.mxu0 %v1119
        %v1182 = vpop.f32.mrf.mxu0
        %v1183 = vadd.f32 0.0, %v1182
        %1184 = vdwg.mxu0
        %v1185 = vadd.f32 %v1056, %v1145
        %v1186 = vadd.f32 %v1085, %v1174
        %v1187 = vadd.f32 %v1059, %v1148
        %v1188 = vadd.f32 %v1088, %v1177
        %v1189 = vadd.f32 %v1062, %v1151
        %v1190 = vadd.f32 %v1091, %v1180
        %v1191 = vadd.f32 %v1065, %v1154
        %v1192 = vadd.f32 %v1094, %v1183
        %v1193 = vmax.f32 %v1185, 0.0
        %v1194 = vmax.f32 %v1186, 0.0
        %v1195 = vmax.f32 %v1187, 0.0
        %v1196 = vmax.f32 %v1188, 0.0
        %v1197 = vmax.f32 %v1189, 0.0
        %v1198 = vmax.f32 %v1190, 0.0
        %v1199 = vmax.f32 %v1191, 0.0
        %v1200 = vmax.f32 %v1192, 0.0
        %v1201 = vld [vmem:[%s5] sm:$0x3]
        %v1203 = vperm.slane %v1201, 0
        %v1204 = vperm.slane %v1201, 1
        %v1207 = vmul.f32 %v1193, %v1203
        %v1208 = vmul.f32 %v1194, %v1204
        %v1209 = vmul.f32 %v1195, %v1203
        %v1210 = vmul.f32 %v1196, %v1204
        %v1211 = vmul.f32 %v1197, %v1203
        %v1212 = vmul.f32 %v1198, %v1204
        %v1213 = vmul.f32 %v1199, %v1203
        %v1214 = vmul.f32 %v1200, %v1204
        %v1215 = vld [vmem:[%s7] sm:$0x3]
        %v1217 = vperm.slane %v1215, 0
        %v1218 = vperm.slane %v1215, 1
        %v1221 = vadd.f32 %v1207, %v1217
        %v1222 = vadd.f32 %v1208, %v1218
        %v1223 = vadd.f32 %v1209, %v1217
        %v1224 = vadd.f32 %v1210, %v1218
        %v1225 = vadd.f32 %v1211, %v1217
        %v1226 = vadd.f32 %v1212, %v1218
        %v1227 = vadd.f32 %v1213, %v1217
        %v1228 = vadd.f32 %v1214, %v1218
        %v1229 = vld [vmem:[#allocation2] sm:$0xff]
        %v1230 = vld [vmem:[#allocation2 + $0x8] sm:$0xff]
        %v1231 = vld [vmem:[#allocation2 + $0x10] sm:$0xff]
        %v1232 = vld [vmem:[#allocation2 + $0x18] sm:$0xff]
        %v1233 = vld [vmem:[#allocation2 + $0x20] sm:$0xff]
        %v1234 = vld [vmem:[#allocation2 + $0x28] sm:$0xff]
        %v1235 = vld [vmem:[#allocation2 + $0x30] sm:$0xff]
        %v1236 = vld [vmem:[#allocation2 + $0x38] sm:$0xff]
        %v1237 = vld [vmem:[#allocation2 + $0x40] sm:$0xff]
        %v1238 = vld [vmem:[#allocation2 + $0x48] sm:$0xff]
        %v1239 = vld [vmem:[#allocation2 + $0x50] sm:$0xff]
        %v1240 = vld [vmem:[#allocation2 + $0x58] sm:$0xff]
        %v1241 = vld [vmem:[#allocation2 + $0x60] sm:$0xff]
        %v1242 = vld [vmem:[#allocation2 + $0x68] sm:$0xff]
        %v1243 = vld [vmem:[#allocation2 + $0x70] sm:$0xff]
        %v1244 = vld [vmem:[#allocation2 + $0x78] sm:$0xff]
        %v1245 = vld [vmem:[#allocation2 + $0x80] sm:$0xff]
        %v1246 = vld [vmem:[#allocation2 + $0x88] sm:$0xff]
        %v1247 = vld [vmem:[#allocation2 + $0x90] sm:$0xff]
        %v1248 = vld [vmem:[#allocation2 + $0x98] sm:$0xff]
        %v1249 = vld [vmem:[#allocation2 + $0xa0] sm:$0xff]
        %v1250 = vld [vmem:[#allocation2 + $0xa8] sm:$0xff]
        %v1251 = vld [vmem:[#allocation2 + $0xb0] sm:$0xff]
        %v1252 = vld [vmem:[#allocation2 + $0xb8] sm:$0xff]
        %v1253 = vld [vmem:[#allocation2 + $0xc0] sm:$0xff]
        %v1254 = vld [vmem:[#allocation2 + $0xc8] sm:$0xff]
        %v1255 = vld [vmem:[#allocation2 + $0xd0] sm:$0xff]
        %v1256 = vld [vmem:[#allocation2 + $0xd8] sm:$0xff]
        %v1257 = vld [vmem:[#allocation2 + $0xe0] sm:$0xff]
        %v1258 = vld [vmem:[#allocation2 + $0xe8] sm:$0xff]
        %v1259 = vld [vmem:[#allocation2 + $0xf0] sm:$0xff]
        %v1260 = vld [vmem:[#allocation2 + $0xf8] sm:$0xff]
        %v1261 = vld [vmem:[#allocation2 + $0x100] sm:$0xff]
        %v1262 = vld [vmem:[#allocation2 + $0x108] sm:$0xff]
        %v1263 = vld [vmem:[#allocation2 + $0x110] sm:$0xff]
        %v1264 = vld [vmem:[#allocation2 + $0x118] sm:$0xff]
        %v1265 = vld [vmem:[#allocation2 + $0x120] sm:$0xff]
        %v1266 = vld [vmem:[#allocation2 + $0x128] sm:$0xff]
        %v1267 = vld [vmem:[#allocation2 + $0x130] sm:$0xff]
        %v1268 = vld [vmem:[#allocation2 + $0x138] sm:$0xff]
        %v1269 = vld [vmem:[#allocation2 + $0x140] sm:$0xff]
        %v1270 = vld [vmem:[#allocation2 + $0x148] sm:$0xff]
        %v1271 = vld [vmem:[#allocation2 + $0x150] sm:$0xff]
        %v1272 = vld [vmem:[#allocation2 + $0x158] sm:$0xff]
        %v1273 = vld [vmem:[#allocation2 + $0x160] sm:$0xff]
        %v1274 = vld [vmem:[#allocation2 + $0x168] sm:$0xff]
        %v1275 = vld [vmem:[#allocation2 + $0x170] sm:$0xff]
        %v1276 = vld [vmem:[#allocation2 + $0x178] sm:$0xff]
        %v1277 = vld [vmem:[#allocation2 + $0x180] sm:$0xff]
        %v1278 = vld [vmem:[#allocation2 + $0x188] sm:$0xff]
        %v1279 = vld [vmem:[#allocation2 + $0x190] sm:$0xff]
        %v1280 = vld [vmem:[#allocation2 + $0x198] sm:$0xff]
        %v1281 = vld [vmem:[#allocation2 + $0x1a0] sm:$0xff]
        %v1282 = vld [vmem:[#allocation2 + $0x1a8] sm:$0xff]
        %v1283 = vld [vmem:[#allocation2 + $0x1b0] sm:$0xff]
        %v1284 = vld [vmem:[#allocation2 + $0x1b8] sm:$0xff]
        %v1285 = vld [vmem:[#allocation2 + $0x1c0] sm:$0xff]
        %v1286 = vld [vmem:[#allocation2 + $0x1c8] sm:$0xff]
        %v1287 = vld [vmem:[#allocation2 + $0x1d0] sm:$0xff]
        %v1288 = vld [vmem:[#allocation2 + $0x1d8] sm:$0xff]
        %v1289 = vld [vmem:[#allocation2 + $0x1e0] sm:$0xff]
        %v1290 = vld [vmem:[#allocation2 + $0x1e8] sm:$0xff]
        %v1291 = vld [vmem:[#allocation2 + $0x1f0] sm:$0xff]
        %v1292 = vld [vmem:[#allocation2 + $0x1f8] sm:$0xff]
        %v1293 = vld [vmem:[#allocation2 + $0x200] sm:$0xff]
        %v1294 = vld [vmem:[#allocation2 + $0x208] sm:$0xff]
        %v1295 = vld [vmem:[#allocation2 + $0x210] sm:$0xff]
        %v1296 = vld [vmem:[#allocation2 + $0x218] sm:$0xff]
        %v1297 = vld [vmem:[#allocation2 + $0x220] sm:$0xff]
        %v1298 = vld [vmem:[#allocation2 + $0x228] sm:$0xff]
        %v1299 = vld [vmem:[#allocation2 + $0x230] sm:$0xff]
        %v1300 = vld [vmem:[#allocation2 + $0x238] sm:$0xff]
        %v1301 = vld [vmem:[#allocation2 + $0x240] sm:$0xff]
        %v1302 = vld [vmem:[#allocation2 + $0x248] sm:$0xff]
        %v1303 = vld [vmem:[#allocation2 + $0x250] sm:$0xff]
        %v1304 = vld [vmem:[#allocation2 + $0x258] sm:$0xff]
        %v1305 = vld [vmem:[#allocation2 + $0x260] sm:$0xff]
        %v1306 = vld [vmem:[#allocation2 + $0x268] sm:$0xff]
        %s1307 = scalar_lea.vmem [#allocation2], 624
        %v1308 = vld [vmem:[%s1307] sm:$0xff]
        %v1309 = vld [vmem:[%s1307 + $0x8] sm:$0xff]
        %v1310 = vld [vmem:[%s1307 + $0x10] sm:$0xff]
        %v1311 = vld [vmem:[%s1307 + $0x18] sm:$0xff]
        %v1312 = vld [vmem:[%s1307 + $0x20] sm:$0xff]
        %v1313 = vld [vmem:[%s1307 + $0x28] sm:$0xff]
        %v1314 = vld [vmem:[%s1307 + $0x30] sm:$0xff]
        %v1315 = vld [vmem:[%s1307 + $0x38] sm:$0xff]
        %v1316 = vld [vmem:[%s1307 + $0x40] sm:$0xff]
        %v1317 = vld [vmem:[%s1307 + $0x48] sm:$0xff]
        %v1318 = vld [vmem:[%s1307 + $0x50] sm:$0xff]
        %v1319 = vld [vmem:[%s1307 + $0x58] sm:$0xff]
        %v1320 = vld [vmem:[%s1307 + $0x60] sm:$0xff]
        %v1321 = vld [vmem:[%s1307 + $0x68] sm:$0xff]
        %v1322 = vld [vmem:[%s1307 + $0x70] sm:$0xff]
        %v1323 = vld [vmem:[%s1307 + $0x78] sm:$0xff]
        %v1324 = vld [vmem:[%s1307 + $0x80] sm:$0xff]
        %v1325 = vld [vmem:[%s1307 + $0x88] sm:$0xff]
        %v1326 = vld [vmem:[%s1307 + $0x90] sm:$0xff]
        %v1327 = vld [vmem:[%s1307 + $0x98] sm:$0xff]
        %v1328 = vld [vmem:[%s1307 + $0xa0] sm:$0xff]
        %v1329 = vld [vmem:[%s1307 + $0xa8] sm:$0xff]
        %v1330 = vld [vmem:[%s1307 + $0xb0] sm:$0xff]
        %v1331 = vld [vmem:[%s1307 + $0xb8] sm:$0xff]
        %v1332 = vld [vmem:[%s1307 + $0xc0] sm:$0xff]
        %v1333 = vld [vmem:[%s1307 + $0xc8] sm:$0xff]
        %v1334 = vld [vmem:[%s1307 + $0xd0] sm:$0xff]
        %v1335 = vld [vmem:[%s1307 + $0xd8] sm:$0xff]
        %v1336 = vld [vmem:[%s1307 + $0xe0] sm:$0xff]
        %v1337 = vld [vmem:[%s1307 + $0xe8] sm:$0xff]
        %v1338 = vld [vmem:[%s1307 + $0xf0] sm:$0xff]
        %v1339 = vld [vmem:[%s1307 + $0xf8] sm:$0xff]
        %v1340 = vld [vmem:[%s1307 + $0x100] sm:$0xff]
        %v1341 = vld [vmem:[%s1307 + $0x108] sm:$0xff]
        %v1342 = vld [vmem:[%s1307 + $0x110] sm:$0xff]
        %v1343 = vld [vmem:[%s1307 + $0x118] sm:$0xff]
        %v1344 = vld [vmem:[%s1307 + $0x120] sm:$0xff]
        %v1345 = vld [vmem:[%s1307 + $0x128] sm:$0xff]
        %v1346 = vld [vmem:[%s1307 + $0x130] sm:$0xff]
        %v1347 = vld [vmem:[%s1307 + $0x138] sm:$0xff]
        %v1348 = vld [vmem:[%s1307 + $0x140] sm:$0xff]
        %v1349 = vld [vmem:[%s1307 + $0x148] sm:$0xff]
        %v1350 = vld [vmem:[%s1307 + $0x150] sm:$0xff]
        %v1351 = vld [vmem:[%s1307 + $0x158] sm:$0xff]
        %v1352 = vld [vmem:[%s1307 + $0x160] sm:$0xff]
        %v1353 = vld [vmem:[%s1307 + $0x168] sm:$0xff]
        %v1354 = vld [vmem:[%s1307 + $0x170] sm:$0xff]
        %v1355 = vld [vmem:[%s1307 + $0x178] sm:$0xff]
        %v1356 = vld [vmem:[%s1307 + $0x180] sm:$0xff]
        %v1357 = vld [vmem:[%s1307 + $0x188] sm:$0xff]
        %v1358 = vld [vmem:[%s1307 + $0x190] sm:$0xff]
        %v1359 = vld [vmem:[%s1307 + $0x198] sm:$0xff]
        %v1360 = vld [vmem:[%s1307 + $0x1a0] sm:$0xff]
        %v1361 = vld [vmem:[%s1307 + $0x1a8] sm:$0xff]
        %v1362 = vld [vmem:[%s1307 + $0x1b0] sm:$0xff]
        %v1363 = vld [vmem:[%s1307 + $0x1b8] sm:$0xff]
        %v1364 = vld [vmem:[%s1307 + $0x1c0] sm:$0xff]
        %v1365 = vld [vmem:[%s1307 + $0x1c8] sm:$0xff]
        %v1366 = vld [vmem:[%s1307 + $0x1d0] sm:$0xff]
        %v1367 = vld [vmem:[%s1307 + $0x1d8] sm:$0xff]
        %v1368 = vld [vmem:[%s1307 + $0x1e0] sm:$0xff]
        %v1369 = vld [vmem:[%s1307 + $0x1e8] sm:$0xff]
        %v1370 = vld [vmem:[%s1307 + $0x1f0] sm:$0xff]
        %v1371 = vld [vmem:[%s1307 + $0x1f8] sm:$0xff]
        %v1372 = vld [vmem:[%s1307 + $0x200] sm:$0xff]
        %v1373 = vld [vmem:[%s1307 + $0x208] sm:$0xff]
        %v1374 = vld [vmem:[%s1307 + $0x210] sm:$0xff]
        %v1375 = vld [vmem:[%s1307 + $0x218] sm:$0xff]
        %v1376 = vld [vmem:[%s1307 + $0x220] sm:$0xff]
        %v1377 = vld [vmem:[%s1307 + $0x228] sm:$0xff]
        %v1378 = vld [vmem:[%s1307 + $0x230] sm:$0xff]
        %v1379 = vld [vmem:[%s1307 + $0x238] sm:$0xff]
        %v1380 = vld [vmem:[%s1307 + $0x240] sm:$0xff]
        %v1381 = vld [vmem:[%s1307 + $0x248] sm:$0xff]
        %v1382 = vld [vmem:[%s1307 + $0x250] sm:$0xff]
        %v1383 = vld [vmem:[%s1307 + $0x258] sm:$0xff]
        %v1384 = vld [vmem:[%s1307 + $0x260] sm:$0xff]
        %v1385 = vld [vmem:[%s1307 + $0x268] sm:$0xff]
        %v1394 = vrot.slane %v1221, 1
        %v1395 = vrot.slane %v1223, 1
        %v1396 = vsel %vm942, %v1394, %v1395
        %v1397 = vrot.slane %v1222, 1
        %v1398 = vrot.slane %v1224, 1
        %v1399 = vsel %vm942, %v1397, %v1398
        %v1400 = vrot.slane %v1225, 1
        %v1401 = vsel %vm942, %v1395, %v1400
        %v1402 = vrot.slane %v1226, 1
        %v1403 = vsel %vm942, %v1398, %v1402
        %v1404 = vrot.slane %v1227, 1
        %v1405 = vsel %vm942, %v1400, %v1404
        %v1406 = vrot.slane %v1228, 1
        %v1407 = vsel %vm942, %v1402, %v1406
        %vm1411 = vcmask 654336
        %v1412 = vsel %vm1411, %v1399, 0
        %v1414 = vsel %vm1411, %v1403, 0
        %v1416 = vsel %vm1411, %v1407, 0
        %1418 = vmatpush.msra.mxu0 %v1353
        %1419 = vmatpush.msra.mxu0 %v1350
        %1420 = vmatpush.msra.mxu0 %v1347
        %1421 = vmatpush.msra.mxu0 %v1344
        %1422 = vmatpush.msra.mxu0 %v1341
        %1423 = vmatpush.msra.mxu0 %v1338
        %1424 = vmatpush.msra.mxu0 %v1335
        %1425 = vmatpush.msra.mxu0 %v1332
        %1426 = vmatpush.msra.mxu0 %v1329
        %1427 = vmatpush.msra.mxu0 %v1326
        %1428 = vmatpush.msra.mxu0 %v1323
        %1429 = vmatpush.msra.mxu0 %v1320
        %1430 = vmatpush.msra.mxu0 %v1317
        %1431 = vmatpush.msra.mxu0 %v1314
        %1432 = vmatpush.msra.mxu0 %v1311
        %1433 = vmatpush.msra.mxu0 %v1308
        %1434 = vmatmul.f32.gmra.mxu0 %v1396
        %v1435 = vpop.f32.mrf.mxu0
        %v1436 = vadd.f32 0.0, %v1435
        %1437 = vmatmul.f32.gmra.mxu0 %v1401
        %v1438 = vpop.f32.mrf.mxu0
        %v1439 = vadd.f32 0.0, %v1438
        %1440 = vmatmul.f32.gmra.mxu0 %v1405
        %v1441 = vpop.f32.mrf.mxu0
        %v1442 = vadd.f32 0.0, %v1441
        %1443 = vdwg.mxu0
        %1444 = vmatpush.msra.mxu0 0.0
        %1445 = vmatpush.msra.mxu0 0.0
        %1446 = vmatpush.msra.mxu0 0.0
        %1447 = vmatpush.msra.mxu0 0.0
        %1448 = vmatpush.msra.mxu0 0.0
        %1449 = vmatpush.msra.mxu0 0.0
        %1450 = vmatpush.msra.mxu0 %v1383
        %1451 = vmatpush.msra.mxu0 %v1380
        %1452 = vmatpush.msra.mxu0 %v1377
        %1453 = vmatpush.msra.mxu0 %v1374
        %1454 = vmatpush.msra.mxu0 %v1371
        %1455 = vmatpush.msra.mxu0 %v1368
        %1456 = vmatpush.msra.mxu0 %v1365
        %1457 = vmatpush.msra.mxu0 %v1362
        %1458 = vmatpush.msra.mxu0 %v1359
        %1459 = vmatpush.msra.mxu0 %v1356
        %1460 = vmatmul.f32.gmra.mxu0 %v1412
        %v1461 = vpop.f32.mrf.mxu0
        %v1462 = vadd.f32 %v1436, %v1461
        %1463 = vmatmul.f32.gmra.mxu0 %v1414
        %v1464 = vpop.f32.mrf.mxu0
        %v1465 = vadd.f32 %v1439, %v1464
        %1466 = vmatmul.f32.gmra.mxu0 %v1416
        %v1467 = vpop.f32.mrf.mxu0
        %v1468 = vadd.f32 %v1442, %v1467
        %1469 = vdwg.mxu0
        %1470 = vmatpush.msra.mxu0 %v1354
        %1471 = vmatpush.msra.mxu0 %v1351
        %1472 = vmatpush.msra.mxu0 %v1348
        %1473 = vmatpush.msra.mxu0 %v1345
        %1474 = vmatpush.msra.mxu0 %v1342
        %1475 = vmatpush.msra.mxu0 %v1339
        %1476 = vmatpush.msra.mxu0 %v1336
        %1477 = vmatpush.msra.mxu0 %v1333
        %1478 = vmatpush.msra.mxu0 %v1330
        %1479 = vmatpush.msra.mxu0 %v1327
        %1480 = vmatpush.msra.mxu0 %v1324
        %1481 = vmatpush.msra.mxu0 %v1321
        %1482 = vmatpush.msra.mxu0 %v1318
        %1483 = vmatpush.msra.mxu0 %v1315
        %1484 = vmatpush.msra.mxu0 %v1312
        %1485 = vmatpush.msra.mxu0 %v1309
        %1486 = vmatmul.f32.gmra.mxu0 %v1396
        %v1487 = vpop.f32.mrf.mxu0
        %v1488 = vadd.f32 0.0, %v1487
        %1489 = vmatmul.f32.gmra.mxu0 %v1401
        %v1490 = vpop.f32.mrf.mxu0
        %v1491 = vadd.f32 0.0, %v1490
        %1492 = vmatmul.f32.gmra.mxu0 %v1405
        %v1493 = vpop.f32.mrf.mxu0
        %v1494 = vadd.f32 0.0, %v1493
        %1495 = vdwg.mxu0
        %1496 = vmatpush.msra.mxu0 0.0
        %1497 = vmatpush.msra.mxu0 0.0
        %1498 = vmatpush.msra.mxu0 0.0
        %1499 = vmatpush.msra.mxu0 0.0
        %1500 = vmatpush.msra.mxu0 0.0
        %1501 = vmatpush.msra.mxu0 0.0
        %1502 = vmatpush.msra.mxu0 %v1384
        %1503 = vmatpush.msra.mxu0 %v1381
        %1504 = vmatpush.msra.mxu0 %v1378
        %1505 = vmatpush.msra.mxu0 %v1375
        %1506 = vmatpush.msra.mxu0 %v1372
        %1507 = vmatpush.msra.mxu0 %v1369
        %1508 = vmatpush.msra.mxu0 %v1366
        %1509 = vmatpush.msra.mxu0 %v1363
        %1510 = vmatpush.msra.mxu0 %v1360
        %1511 = vmatpush.msra.mxu0 %v1357
        %1512 = vmatmul.f32.gmra.mxu0 %v1412
        %v1513 = vpop.f32.mrf.mxu0
        %v1514 = vadd.f32 %v1488, %v1513
        %1515 = vmatmul.f32.gmra.mxu0 %v1414
        %v1516 = vpop.f32.mrf.mxu0
        %v1517 = vadd.f32 %v1491, %v1516
        %1518 = vmatmul.f32.gmra.mxu0 %v1416
        %v1519 = vpop.f32.mrf.mxu0
        %v1520 = vadd.f32 %v1494, %v1519
        %1521 = vdwg.mxu0
        %1522 = vmatpush.msra.mxu0 %v1355
        %1523 = vmatpush.msra.mxu0 %v1352
        %1524 = vmatpush.msra.mxu0 %v1349
        %1525 = vmatpush.msra.mxu0 %v1346
        %1526 = vmatpush.msra.mxu0 %v1343
        %1527 = vmatpush.msra.mxu0 %v1340
        %1528 = vmatpush.msra.mxu0 %v1337
        %1529 = vmatpush.msra.mxu0 %v1334
        %1530 = vmatpush.msra.mxu0 %v1331
        %1531 = vmatpush.msra.mxu0 %v1328
        %1532 = vmatpush.msra.mxu0 %v1325
        %1533 = vmatpush.msra.mxu0 %v1322
        %1534 = vmatpush.msra.mxu0 %v1319
        %1535 = vmatpush.msra.mxu0 %v1316
        %1536 = vmatpush.msra.mxu0 %v1313
        %1537 = vmatpush.msra.mxu0 %v1310
        %1538 = vmatmul.f32.gmra.mxu0 %v1396
        %v1539 = vpop.f32.mrf.mxu0
        %v1540 = vadd.f32 0.0, %v1539
        %1541 = vmatmul.f32.gmra.mxu0 %v1401
        %v1542 = vpop.f32.mrf.mxu0
        %v1543 = vadd.f32 0.0, %v1542
        %1544 = vmatmul.f32.gmra.mxu0 %v1405
        %v1545 = vpop.f32.mrf.mxu0
        %v1546 = vadd.f32 0.0, %v1545
        %1547 = vdwg.mxu0
        %1548 = vmatpush.msra.mxu0 0.0
        %1549 = vmatpush.msra.mxu0 0.0
        %1550 = vmatpush.msra.mxu0 0.0
        %1551 = vmatpush.msra.mxu0 0.0
        %1552 = vmatpush.msra.mxu0 0.0
        %1553 = vmatpush.msra.mxu0 0.0
        %1554 = vmatpush.msra.mxu0 %v1385
        %1555 = vmatpush.msra.mxu0 %v1382
        %1556 = vmatpush.msra.mxu0 %v1379
        %1557 = vmatpush.msra.mxu0 %v1376
        %1558 = vmatpush.msra.mxu0 %v1373
        %1559 = vmatpush.msra.mxu0 %v1370
        %1560 = vmatpush.msra.mxu0 %v1367
        %1561 = vmatpush.msra.mxu0 %v1364
        %1562 = vmatpush.msra.mxu0 %v1361
        %1563 = vmatpush.msra.mxu0 %v1358
        %1564 = vmatmul.f32.gmra.mxu0 %v1412
        %v1565 = vpop.f32.mrf.mxu0
        %v1566 = vadd.f32 %v1540, %v1565
        %1567 = vmatmul.f32.gmra.mxu0 %v1414
        %v1568 = vpop.f32.mrf.mxu0
        %v1569 = vadd.f32 %v1543, %v1568
        %1570 = vmatmul.f32.gmra.mxu0 %v1416
        %v1571 = vpop.f32.mrf.mxu0
        %v1572 = vadd.f32 %v1546, %v1571
        %1573 = vdwg.mxu0
        %v1574 = vsel %vm1411, %v1222, 0
        %v1576 = vsel %vm1411, %v1224, 0
        %v1578 = vsel %vm1411, %v1226, 0
        %1580 = vmatpush.msra.mxu0 %v1274
        %1581 = vmatpush.msra.mxu0 %v1271
        %1582 = vmatpush.msra.mxu0 %v1268
        %1583 = vmatpush.msra.mxu0 %v1265
        %1584 = vmatpush.msra.mxu0 %v1262
        %1585 = vmatpush.msra.mxu0 %v1259
        %1586 = vmatpush.msra.mxu0 %v1256
        %1587 = vmatpush.msra.mxu0 %v1253
        %1588 = vmatpush.msra.mxu0 %v1250
        %1589 = vmatpush.msra.mxu0 %v1247
        %1590 = vmatpush.msra.mxu0 %v1244
        %1591 = vmatpush.msra.mxu0 %v1241
        %1592 = vmatpush.msra.mxu0 %v1238
        %1593 = vmatpush.msra.mxu0 %v1235
        %1594 = vmatpush.msra.mxu0 %v1232
        %1595 = vmatpush.msra.mxu0 %v1229
        %1596 = vmatmul.f32.gmra.mxu0 %v1221
        %v1597 = vpop.f32.mrf.mxu0
        %v1598 = vadd.f32 %v1462, %v1597
        %1599 = vmatmul.f32.gmra.mxu0 %v1223
        %v1600 = vpop.f32.mrf.mxu0
        %v1601 = vadd.f32 %v1465, %v1600
        %1602 = vmatmul.f32.gmra.mxu0 %v1225
        %v1603 = vpop.f32.mrf.mxu0
        %v1604 = vadd.f32 %v1468, %v1603
        %1605 = vdwg.mxu0
        %1606 = vmatpush.msra.mxu0 0.0
        %1607 = vmatpush.msra.mxu0 0.0
        %1608 = vmatpush.msra.mxu0 0.0
        %1609 = vmatpush.msra.mxu0 0.0
        %1610 = vmatpush.msra.mxu0 0.0
        %1611 = vmatpush.msra.mxu0 0.0
        %1612 = vmatpush.msra.mxu0 %v1304
        %1613 = vmatpush.msra.mxu0 %v1301
        %1614 = vmatpush.msra.mxu0 %v1298
        %1615 = vmatpush.msra.mxu0 %v1295
        %1616 = vmatpush.msra.mxu0 %v1292
        %1617 = vmatpush.msra.mxu0 %v1289
        %1618 = vmatpush.msra.mxu0 %v1286
        %1619 = vmatpush.msra.mxu0 %v1283
        %1620 = vmatpush.msra.mxu0 %v1280
        %1621 = vmatpush.msra.mxu0 %v1277
        %1622 = vmatmul.f32.gmra.mxu0 %v1574
        %v1623 = vpop.f32.mrf.mxu0
        %v1624 = vadd.f32 %v1598, %v1623
        %1625 = vmatmul.f32.gmra.mxu0 %v1576
        %v1626 = vpop.f32.mrf.mxu0
        %v1627 = vadd.f32 %v1601, %v1626
        %1628 = vmatmul.f32.gmra.mxu0 %v1578
        %v1629 = vpop.f32.mrf.mxu0
        %v1630 = vadd.f32 %v1604, %v1629
        %1631 = vdwg.mxu0
        %1632 = vmatpush.msra.mxu0 %v1275
        %1633 = vmatpush.msra.mxu0 %v1272
        %1634 = vmatpush.msra.mxu0 %v1269
        %1635 = vmatpush.msra.mxu0 %v1266
        %1636 = vmatpush.msra.mxu0 %v1263
        %1637 = vmatpush.msra.mxu0 %v1260
        %1638 = vmatpush.msra.mxu0 %v1257
        %1639 = vmatpush.msra.mxu0 %v1254
        %1640 = vmatpush.msra.mxu0 %v1251
        %1641 = vmatpush.msra.mxu0 %v1248
        %1642 = vmatpush.msra.mxu0 %v1245
        %1643 = vmatpush.msra.mxu0 %v1242
        %1644 = vmatpush.msra.mxu0 %v1239
        %1645 = vmatpush.msra.mxu0 %v1236
        %1646 = vmatpush.msra.mxu0 %v1233
        %1647 = vmatpush.msra.mxu0 %v1230
        %1648 = vmatmul.f32.gmra.mxu0 %v1221
        %v1649 = vpop.f32.mrf.mxu0
        %v1650 = vadd.f32 %v1514, %v1649
        %1651 = vmatmul.f32.gmra.mxu0 %v1223
        %v1652 = vpop.f32.mrf.mxu0
        %v1653 = vadd.f32 %v1517, %v1652
        %1654 = vmatmul.f32.gmra.mxu0 %v1225
        %v1655 = vpop.f32.mrf.mxu0
        %v1656 = vadd.f32 %v1520, %v1655
        %1657 = vdwg.mxu0
        %1658 = vmatpush.msra.mxu0 0.0
        %1659 = vmatpush.msra.mxu0 0.0
        %1660 = vmatpush.msra.mxu0 0.0
        %1661 = vmatpush.msra.mxu0 0.0
        %1662 = vmatpush.msra.mxu0 0.0
        %1663 = vmatpush.msra.mxu0 0.0
        %1664 = vmatpush.msra.mxu0 %v1305
        %1665 = vmatpush.msra.mxu0 %v1302
        %1666 = vmatpush.msra.mxu0 %v1299
        %1667 = vmatpush.msra.mxu0 %v1296
        %1668 = vmatpush.msra.mxu0 %v1293
        %1669 = vmatpush.msra.mxu0 %v1290
        %1670 = vmatpush.msra.mxu0 %v1287
        %1671 = vmatpush.msra.mxu0 %v1284
        %1672 = vmatpush.msra.mxu0 %v1281
        %1673 = vmatpush.msra.mxu0 %v1278
        %1674 = vmatmul.f32.gmra.mxu0 %v1574
        %v1675 = vpop.f32.mrf.mxu0
        %v1676 = vadd.f32 %v1650, %v1675
        %1677 = vmatmul.f32.gmra.mxu0 %v1576
        %v1678 = vpop.f32.mrf.mxu0
        %v1679 = vadd.f32 %v1653, %v1678
        %1680 = vmatmul.f32.gmra.mxu0 %v1578
        %v1681 = vpop.f32.mrf.mxu0
        %v1682 = vadd.f32 %v1656, %v1681
        %1683 = vdwg.mxu0
        %1684 = vmatpush.msra.mxu0 %v1276
        %1685 = vmatpush.msra.mxu0 %v1273
        %1686 = vmatpush.msra.mxu0 %v1270
        %1687 = vmatpush.msra.mxu0 %v1267
        %1688 = vmatpush.msra.mxu0 %v1264
        %1689 = vmatpush.msra.mxu0 %v1261
        %1690 = vmatpush.msra.mxu0 %v1258
        %1691 = vmatpush.msra.mxu0 %v1255
        %1692 = vmatpush.msra.mxu0 %v1252
        %1693 = vmatpush.msra.mxu0 %v1249
        %1694 = vmatpush.msra.mxu0 %v1246
        %1695 = vmatpush.msra.mxu0 %v1243
        %1696 = vmatpush.msra.mxu0 %v1240
        %1697 = vmatpush.msra.mxu0 %v1237
        %1698 = vmatpush.msra.mxu0 %v1234
        %1699 = vmatpush.msra.mxu0 %v1231
        %1700 = vmatmul.f32.gmra.mxu0 %v1221
        %v1701 = vpop.f32.mrf.mxu0
        %v1702 = vadd.f32 %v1566, %v1701
        %1703 = vmatmul.f32.gmra.mxu0 %v1223
        %v1704 = vpop.f32.mrf.mxu0
        %v1705 = vadd.f32 %v1569, %v1704
        %1706 = vmatmul.f32.gmra.mxu0 %v1225
        %v1707 = vpop.f32.mrf.mxu0
        %v1708 = vadd.f32 %v1572, %v1707
        %1709 = vdwg.mxu0
        %1710 = vmatpush.msra.mxu0 0.0
        %1711 = vmatpush.msra.mxu0 0.0
        %1712 = vmatpush.msra.mxu0 0.0
        %1713 = vmatpush.msra.mxu0 0.0
        %1714 = vmatpush.msra.mxu0 0.0
        %1715 = vmatpush.msra.mxu0 0.0
        %1716 = vmatpush.msra.mxu0 %v1306
        %1717 = vmatpush.msra.mxu0 %v1303
        %1718 = vmatpush.msra.mxu0 %v1300
        %1719 = vmatpush.msra.mxu0 %v1297
        %1720 = vmatpush.msra.mxu0 %v1294
        %1721 = vmatpush.msra.mxu0 %v1291
        %1722 = vmatpush.msra.mxu0 %v1288
        %1723 = vmatpush.msra.mxu0 %v1285
        %1724 = vmatpush.msra.mxu0 %v1282
        %1725 = vmatpush.msra.mxu0 %v1279
        %1726 = vmatmul.f32.gmra.mxu0 %v1574
        %v1727 = vpop.f32.mrf.mxu0
        %v1728 = vadd.f32 %v1702, %v1727
        %1729 = vmatmul.f32.gmra.mxu0 %v1576
        %v1730 = vpop.f32.mrf.mxu0
        %v1731 = vadd.f32 %v1705, %v1730
        %1732 = vmatmul.f32.gmra.mxu0 %v1578
        %v1733 = vpop.f32.mrf.mxu0
        %v1734 = vadd.f32 %v1708, %v1733
        %1735 = vdwg.mxu0
        %s1736 = scalar_lea.vmem [#allocation2], 1248
        %v1737 = vld [vmem:[%s1736] sm:$0xff]
        %v1738 = vld [vmem:[%s1736 + $0x8] sm:$0xff]
        %v1739 = vld [vmem:[%s1736 + $0x10] sm:$0xff]
        %v1740 = vld [vmem:[%s1736 + $0x18] sm:$0xff]
        %v1741 = vld [vmem:[%s1736 + $0x20] sm:$0xff]
        %v1742 = vld [vmem:[%s1736 + $0x28] sm:$0xff]
        %v1743 = vld [vmem:[%s1736 + $0x30] sm:$0xff]
        %v1744 = vld [vmem:[%s1736 + $0x38] sm:$0xff]
        %v1745 = vld [vmem:[%s1736 + $0x40] sm:$0xff]
        %v1746 = vld [vmem:[%s1736 + $0x48] sm:$0xff]
        %v1747 = vld [vmem:[%s1736 + $0x50] sm:$0xff]
        %v1748 = vld [vmem:[%s1736 + $0x58] sm:$0xff]
        %v1749 = vld [vmem:[%s1736 + $0x60] sm:$0xff]
        %v1750 = vld [vmem:[%s1736 + $0x68] sm:$0xff]
        %v1751 = vld [vmem:[%s1736 + $0x70] sm:$0xff]
        %v1752 = vld [vmem:[%s1736 + $0x78] sm:$0xff]
        %v1753 = vld [vmem:[%s1736 + $0x80] sm:$0xff]
        %v1754 = vld [vmem:[%s1736 + $0x88] sm:$0xff]
        %v1755 = vld [vmem:[%s1736 + $0x90] sm:$0xff]
        %v1756 = vld [vmem:[%s1736 + $0x98] sm:$0xff]
        %v1757 = vld [vmem:[%s1736 + $0xa0] sm:$0xff]
        %v1758 = vld [vmem:[%s1736 + $0xa8] sm:$0xff]
        %v1759 = vld [vmem:[%s1736 + $0xb0] sm:$0xff]
        %v1760 = vld [vmem:[%s1736 + $0xb8] sm:$0xff]
        %v1761 = vld [vmem:[%s1736 + $0xc0] sm:$0xff]
        %v1762 = vld [vmem:[%s1736 + $0xc8] sm:$0xff]
        %v1763 = vld [vmem:[%s1736 + $0xd0] sm:$0xff]
        %v1764 = vld [vmem:[%s1736 + $0xd8] sm:$0xff]
        %v1765 = vld [vmem:[%s1736 + $0xe0] sm:$0xff]
        %v1766 = vld [vmem:[%s1736 + $0xe8] sm:$0xff]
        %v1767 = vld [vmem:[%s1736 + $0xf0] sm:$0xff]
        %v1768 = vld [vmem:[%s1736 + $0xf8] sm:$0xff]
        %v1769 = vld [vmem:[%s1736 + $0x100] sm:$0xff]
        %v1770 = vld [vmem:[%s1736 + $0x108] sm:$0xff]
        %v1771 = vld [vmem:[%s1736 + $0x110] sm:$0xff]
        %v1772 = vld [vmem:[%s1736 + $0x118] sm:$0xff]
        %v1773 = vld [vmem:[%s1736 + $0x120] sm:$0xff]
        %v1774 = vld [vmem:[%s1736 + $0x128] sm:$0xff]
        %v1775 = vld [vmem:[%s1736 + $0x130] sm:$0xff]
        %v1776 = vld [vmem:[%s1736 + $0x138] sm:$0xff]
        %v1777 = vld [vmem:[%s1736 + $0x140] sm:$0xff]
        %v1778 = vld [vmem:[%s1736 + $0x148] sm:$0xff]
        %v1779 = vld [vmem:[%s1736 + $0x150] sm:$0xff]
        %v1780 = vld [vmem:[%s1736 + $0x158] sm:$0xff]
        %v1781 = vld [vmem:[%s1736 + $0x160] sm:$0xff]
        %v1782 = vld [vmem:[%s1736 + $0x168] sm:$0xff]
        %v1783 = vld [vmem:[%s1736 + $0x170] sm:$0xff]
        %v1784 = vld [vmem:[%s1736 + $0x178] sm:$0xff]
        %v1785 = vld [vmem:[%s1736 + $0x180] sm:$0xff]
        %v1786 = vld [vmem:[%s1736 + $0x188] sm:$0xff]
        %v1787 = vld [vmem:[%s1736 + $0x190] sm:$0xff]
        %v1788 = vld [vmem:[%s1736 + $0x198] sm:$0xff]
        %v1789 = vld [vmem:[%s1736 + $0x1a0] sm:$0xff]
        %v1790 = vld [vmem:[%s1736 + $0x1a8] sm:$0xff]
        %v1791 = vld [vmem:[%s1736 + $0x1b0] sm:$0xff]
        %v1792 = vld [vmem:[%s1736 + $0x1b8] sm:$0xff]
        %v1793 = vld [vmem:[%s1736 + $0x1c0] sm:$0xff]
        %v1794 = vld [vmem:[%s1736 + $0x1c8] sm:$0xff]
        %v1795 = vld [vmem:[%s1736 + $0x1d0] sm:$0xff]
        %v1796 = vld [vmem:[%s1736 + $0x1d8] sm:$0xff]
        %v1797 = vld [vmem:[%s1736 + $0x1e0] sm:$0xff]
        %v1798 = vld [vmem:[%s1736 + $0x1e8] sm:$0xff]
        %v1799 = vld [vmem:[%s1736 + $0x1f0] sm:$0xff]
        %v1800 = vld [vmem:[%s1736 + $0x1f8] sm:$0xff]
        %v1801 = vld [vmem:[%s1736 + $0x200] sm:$0xff]
        %v1802 = vld [vmem:[%s1736 + $0x208] sm:$0xff]
        %v1803 = vld [vmem:[%s1736 + $0x210] sm:$0xff]
        %v1804 = vld [vmem:[%s1736 + $0x218] sm:$0xff]
        %v1805 = vld [vmem:[%s1736 + $0x220] sm:$0xff]
        %v1806 = vld [vmem:[%s1736 + $0x228] sm:$0xff]
        %v1807 = vld [vmem:[%s1736 + $0x230] sm:$0xff]
        %v1808 = vld [vmem:[%s1736 + $0x238] sm:$0xff]
        %v1809 = vld [vmem:[%s1736 + $0x240] sm:$0xff]
        %v1810 = vld [vmem:[%s1736 + $0x248] sm:$0xff]
        %v1811 = vld [vmem:[%s1736 + $0x250] sm:$0xff]
        %v1812 = vld [vmem:[%s1736 + $0x258] sm:$0xff]
        %v1813 = vld [vmem:[%s1736 + $0x260] sm:$0xff]
        %v1814 = vld [vmem:[%s1736 + $0x268] sm:$0xff]
        %v1815 = vrot.slane %v1221, 2
        %v1816 = vrot.slane %v1223, 2
        %v1817 = vsel %vm1105, %v1815, %v1816
        %v1818 = vrot.slane %v1222, 2
        %v1819 = vrot.slane %v1224, 2
        %v1820 = vsel %vm1105, %v1818, %v1819
        %v1821 = vrot.slane %v1225, 2
        %v1822 = vsel %vm1105, %v1816, %v1821
        %v1823 = vrot.slane %v1226, 2
        %v1824 = vsel %vm1105, %v1819, %v1823
        %v1825 = vrot.slane %v1227, 2
        %v1826 = vsel %vm1105, %v1821, %v1825
        %v1827 = vrot.slane %v1228, 2
        %v1828 = vsel %vm1105, %v1823, %v1827
        %v1832 = vsel %vm1411, %v1820, 0
        %v1834 = vsel %vm1411, %v1824, 0
        %v1836 = vsel %vm1411, %v1828, 0
        %1838 = vmatpush.msra.mxu0 %v1782
        %1839 = vmatpush.msra.mxu0 %v1779
        %1840 = vmatpush.msra.mxu0 %v1776
        %1841 = vmatpush.msra.mxu0 %v1773
        %1842 = vmatpush.msra.mxu0 %v1770
        %1843 = vmatpush.msra.mxu0 %v1767
        %1844 = vmatpush.msra.mxu0 %v1764
        %1845 = vmatpush.msra.mxu0 %v1761
        %1846 = vmatpush.msra.mxu0 %v1758
        %1847 = vmatpush.msra.mxu0 %v1755
        %1848 = vmatpush.msra.mxu0 %v1752
        %1849 = vmatpush.msra.mxu0 %v1749
        %1850 = vmatpush.msra.mxu0 %v1746
        %1851 = vmatpush.msra.mxu0 %v1743
        %1852 = vmatpush.msra.mxu0 %v1740
        %1853 = vmatpush.msra.mxu0 %v1737
        %1854 = vmatmul.f32.gmra.mxu0 %v1817
        %v1855 = vpop.f32.mrf.mxu0
        %v1856 = vadd.f32 0.0, %v1855
        %1857 = vmatmul.f32.gmra.mxu0 %v1822
        %v1858 = vpop.f32.mrf.mxu0
        %v1859 = vadd.f32 0.0, %v1858
        %1860 = vmatmul.f32.gmra.mxu0 %v1826
        %v1861 = vpop.f32.mrf.mxu0
        %v1862 = vadd.f32 0.0, %v1861
        %1863 = vdwg.mxu0
        %1864 = vmatpush.msra.mxu0 0.0
        %1865 = vmatpush.msra.mxu0 0.0
        %1866 = vmatpush.msra.mxu0 0.0
        %1867 = vmatpush.msra.mxu0 0.0
        %1868 = vmatpush.msra.mxu0 0.0
        %1869 = vmatpush.msra.mxu0 0.0
        %1870 = vmatpush.msra.mxu0 %v1812
        %1871 = vmatpush.msra.mxu0 %v1809
        %1872 = vmatpush.msra.mxu0 %v1806
        %1873 = vmatpush.msra.mxu0 %v1803
        %1874 = vmatpush.msra.mxu0 %v1800
        %1875 = vmatpush.msra.mxu0 %v1797
        %1876 = vmatpush.msra.mxu0 %v1794
        %1877 = vmatpush.msra.mxu0 %v1791
        %1878 = vmatpush.msra.mxu0 %v1788
        %1879 = vmatpush.msra.mxu0 %v1785
        %1880 = vmatmul.f32.gmra.mxu0 %v1832
        %v1881 = vpop.f32.mrf.mxu0
        %v1882 = vadd.f32 %v1856, %v1881
        %1883 = vmatmul.f32.gmra.mxu0 %v1834
        %v1884 = vpop.f32.mrf.mxu0
        %v1885 = vadd.f32 %v1859, %v1884
        %1886 = vmatmul.f32.gmra.mxu0 %v1836
        %v1887 = vpop.f32.mrf.mxu0
        %v1888 = vadd.f32 %v1862, %v1887
        %1889 = vdwg.mxu0
        %1890 = vmatpush.msra.mxu0 %v1783
        %1891 = vmatpush.msra.mxu0 %v1780
        %1892 = vmatpush.msra.mxu0 %v1777
        %1893 = vmatpush.msra.mxu0 %v1774
        %1894 = vmatpush.msra.mxu0 %v1771
        %1895 = vmatpush.msra.mxu0 %v1768
        %1896 = vmatpush.msra.mxu0 %v1765
        %1897 = vmatpush.msra.mxu0 %v1762
        %1898 = vmatpush.msra.mxu0 %v1759
        %1899 = vmatpush.msra.mxu0 %v1756
        %1900 = vmatpush.msra.mxu0 %v1753
        %1901 = vmatpush.msra.mxu0 %v1750
        %1902 = vmatpush.msra.mxu0 %v1747
        %1903 = vmatpush.msra.mxu0 %v1744
        %1904 = vmatpush.msra.mxu0 %v1741
        %1905 = vmatpush.msra.mxu0 %v1738
        %1906 = vmatmul.f32.gmra.mxu0 %v1817
        %v1907 = vpop.f32.mrf.mxu0
        %v1908 = vadd.f32 0.0, %v1907
        %1909 = vmatmul.f32.gmra.mxu0 %v1822
        %v1910 = vpop.f32.mrf.mxu0
        %v1911 = vadd.f32 0.0, %v1910
        %1912 = vmatmul.f32.gmra.mxu0 %v1826
        %v1913 = vpop.f32.mrf.mxu0
        %v1914 = vadd.f32 0.0, %v1913
        %1915 = vdwg.mxu0
        %1916 = vmatpush.msra.mxu0 0.0
        %1917 = vmatpush.msra.mxu0 0.0
        %1918 = vmatpush.msra.mxu0 0.0
        %1919 = vmatpush.msra.mxu0 0.0
        %1920 = vmatpush.msra.mxu0 0.0
        %1921 = vmatpush.msra.mxu0 0.0
        %1922 = vmatpush.msra.mxu0 %v1813
        %1923 = vmatpush.msra.mxu0 %v1810
        %1924 = vmatpush.msra.mxu0 %v1807
        %1925 = vmatpush.msra.mxu0 %v1804
        %1926 = vmatpush.msra.mxu0 %v1801
        %1927 = vmatpush.msra.mxu0 %v1798
        %1928 = vmatpush.msra.mxu0 %v1795
        %1929 = vmatpush.msra.mxu0 %v1792
        %1930 = vmatpush.msra.mxu0 %v1789
        %1931 = vmatpush.msra.mxu0 %v1786
        %1932 = vmatmul.f32.gmra.mxu0 %v1832
        %v1933 = vpop.f32.mrf.mxu0
        %v1934 = vadd.f32 %v1908, %v1933
        %1935 = vmatmul.f32.gmra.mxu0 %v1834
        %v1936 = vpop.f32.mrf.mxu0
        %v1937 = vadd.f32 %v1911, %v1936
        %1938 = vmatmul.f32.gmra.mxu0 %v1836
        %v1939 = vpop.f32.mrf.mxu0
        %v1940 = vadd.f32 %v1914, %v1939
        %1941 = vdwg.mxu0
        %1942 = vmatpush.msra.mxu0 %v1784
        %1943 = vmatpush.msra.mxu0 %v1781
        %1944 = vmatpush.msra.mxu0 %v1778
        %1945 = vmatpush.msra.mxu0 %v1775
        %1946 = vmatpush.msra.mxu0 %v1772
        %1947 = vmatpush.msra.mxu0 %v1769
        %1948 = vmatpush.msra.mxu0 %v1766
        %1949 = vmatpush.msra.mxu0 %v1763
        %1950 = vmatpush.msra.mxu0 %v1760
        %1951 = vmatpush.msra.mxu0 %v1757
        %1952 = vmatpush.msra.mxu0 %v1754
        %1953 = vmatpush.msra.mxu0 %v1751
        %1954 = vmatpush.msra.mxu0 %v1748
        %1955 = vmatpush.msra.mxu0 %v1745
        %1956 = vmatpush.msra.mxu0 %v1742
        %1957 = vmatpush.msra.mxu0 %v1739
        %1958 = vmatmul.f32.gmra.mxu0 %v1817
        %v1959 = vpop.f32.mrf.mxu0
        %v1960 = vadd.f32 0.0, %v1959
        %1961 = vmatmul.f32.gmra.mxu0 %v1822
        %v1962 = vpop.f32.mrf.mxu0
        %v1963 = vadd.f32 0.0, %v1962
        %1964 = vmatmul.f32.gmra.mxu0 %v1826
        %v1965 = vpop.f32.mrf.mxu0
        %v1966 = vadd.f32 0.0, %v1965
        %1967 = vdwg.mxu0
        %1968 = vmatpush.msra.mxu0 0.0
        %1969 = vmatpush.msra.mxu0 0.0
        %1970 = vmatpush.msra.mxu0 0.0
        %1971 = vmatpush.msra.mxu0 0.0
        %1972 = vmatpush.msra.mxu0 0.0
        %1973 = vmatpush.msra.mxu0 0.0
        %1974 = vmatpush.msra.mxu0 %v1814
        %1975 = vmatpush.msra.mxu0 %v1811
        %1976 = vmatpush.msra.mxu0 %v1808
        %1977 = vmatpush.msra.mxu0 %v1805
        %1978 = vmatpush.msra.mxu0 %v1802
        %1979 = vmatpush.msra.mxu0 %v1799
        %1980 = vmatpush.msra.mxu0 %v1796
        %1981 = vmatpush.msra.mxu0 %v1793
        %1982 = vmatpush.msra.mxu0 %v1790
        %1983 = vmatpush.msra.mxu0 %v1787
        %1984 = vmatmul.f32.gmra.mxu0 %v1832
        %v1985 = vpop.f32.mrf.mxu0
        %v1986 = vadd.f32 %v1960, %v1985
        %1987 = vmatmul.f32.gmra.mxu0 %v1834
        %v1988 = vpop.f32.mrf.mxu0
        %v1989 = vadd.f32 %v1963, %v1988
        %1990 = vmatmul.f32.gmra.mxu0 %v1836
        %v1991 = vpop.f32.mrf.mxu0
        %v1992 = vadd.f32 %v1966, %v1991
        %1993 = vdwg.mxu0
        %v1994 = vadd.f32 %v1624, %v1882
        %v1995 = vadd.f32 %v1676, %v1934
        %v1996 = vadd.f32 %v1728, %v1986
        %v1997 = vadd.f32 %v1627, %v1885
        %v1998 = vadd.f32 %v1679, %v1937
        %v1999 = vadd.f32 %v1731, %v1989
        %v2000 = vadd.f32 %v1630, %v1888
        %v2001 = vadd.f32 %v1682, %v1940
        %v2002 = vadd.f32 %v1734, %v1992
        %v2003 = vmax.f32 %v1994, 0.0
        %v2004 = vmax.f32 %v1995, 0.0
        %v2005 = vmax.f32 %v1996, 0.0
        %v2006 = vmax.f32 %v1997, 0.0
        %v2007 = vmax.f32 %v1998, 0.0
        %v2008 = vmax.f32 %v1999, 0.0
        %v2009 = vmax.f32 %v2000, 0.0
        %v2010 = vmax.f32 %v2001, 0.0
        %v2011 = vmax.f32 %v2002, 0.0
        %v2012 = vld [vmem:[%s11] sm:$0x7]
        %v2014 = vperm.slane %v2012, 0
        %v2015 = vperm.slane %v2012, 1
        %v2016 = vperm.slane %v2012, 2
        %v2020 = vmul.f32 %v2003, %v2014
        %v2021 = vmul.f32 %v2004, %v2015
        %v2022 = vmul.f32 %v2005, %v2016
        %v2023 = vmul.f32 %v2006, %v2014
        %v2024 = vmul.f32 %v2007, %v2015
        %v2025 = vmul.f32 %v2008, %v2016
        %v2026 = vmul.f32 %v2009, %v2014
        %v2027 = vmul.f32 %v2010, %v2015
        %v2028 = vmul.f32 %v2011, %v2016
        %v2029 = vld [vmem:[%s13] sm:$0x7]
        %v2031 = vperm.slane %v2029, 0
        %v2032 = vperm.slane %v2029, 1
        %v2033 = vperm.slane %v2029, 2
        %v2037 = vadd.f32 %v2020, %v2031
        %v2038 = vadd.f32 %v2021, %v2032
        %v2039 = vadd.f32 %v2022, %v2033
        %v2040 = vadd.f32 %v2023, %v2031
        %v2041 = vadd.f32 %v2024, %v2032
        %v2042 = vadd.f32 %v2025, %v2033
        %v2043 = vadd.f32 %v2026, %v2031
        %v2044 = vadd.f32 %v2027, %v2032
        %v2045 = vadd.f32 %v2028, %v2033
        %v2046 = vld [vmem:[%s15] sm:$0xff]
        %v2047 = vld [vmem:[%s15 + $0x8] sm:$0xff]
        %v2048 = vld [vmem:[%s15 + $0x10] sm:$0xff]
        %v2049 = vld [vmem:[%s15 + $0x18] sm:$0xff]
        %v2050 = vld [vmem:[%s15 + $0x20] sm:$0xff]
        %v2051 = vld [vmem:[%s15 + $0x28] sm:$0xff]
        %v2052 = vld [vmem:[%s15 + $0x30] sm:$0xff]
        %v2053 = vld [vmem:[%s15 + $0x38] sm:$0xff]
        %v2054 = vld [vmem:[%s15 + $0x40] sm:$0xff]
        %v2055 = vld [vmem:[%s15 + $0x48] sm:$0xff]
        %v2056 = vld [vmem:[%s15 + $0x50] sm:$0xff]
        %v2057 = vld [vmem:[%s15 + $0x58] sm:$0xff]
        %v2058 = vld [vmem:[%s15 + $0x60] sm:$0xff]
        %v2059 = vld [vmem:[%s15 + $0x68] sm:$0xff]
        %v2060 = vld [vmem:[%s15 + $0x70] sm:$0xff]
        %v2061 = vld [vmem:[%s15 + $0x78] sm:$0xff]
        %v2062 = vld [vmem:[%s15 + $0x80] sm:$0xff]
        %v2063 = vld [vmem:[%s15 + $0x88] sm:$0xff]
        %v2064 = vld [vmem:[%s15 + $0x90] sm:$0xff]
        %v2065 = vld [vmem:[%s15 + $0x98] sm:$0xff]
        %v2066 = vld [vmem:[%s15 + $0xa0] sm:$0xff]
        %v2067 = vld [vmem:[%s15 + $0xa8] sm:$0xff]
        %v2068 = vld [vmem:[%s15 + $0xb0] sm:$0xff]
        %v2069 = vld [vmem:[%s15 + $0xb8] sm:$0xff]
        %v2070 = vld [vmem:[%s15 + $0xc0] sm:$0xff]
        %v2071 = vld [vmem:[%s15 + $0xc8] sm:$0xff]
        %v2072 = vld [vmem:[%s15 + $0xd0] sm:$0xff]
        %v2073 = vld [vmem:[%s15 + $0xd8] sm:$0xff]
        %v2074 = vld [vmem:[%s15 + $0xe0] sm:$0xff]
        %v2075 = vld [vmem:[%s15 + $0xe8] sm:$0xff]
        %v2076 = vld [vmem:[%s15 + $0xf0] sm:$0xff]
        %v2077 = vld [vmem:[%s15 + $0xf8] sm:$0xff]
        %v2078 = vld [vmem:[%s15 + $0x100] sm:$0xff]
        %v2079 = vld [vmem:[%s15 + $0x108] sm:$0xff]
        %v2080 = vld [vmem:[%s15 + $0x110] sm:$0xff]
        %v2081 = vld [vmem:[%s15 + $0x118] sm:$0xff]
        %v2082 = vld [vmem:[%s15 + $0x120] sm:$0xff]
        %v2083 = vld [vmem:[%s15 + $0x128] sm:$0xff]
        %v2084 = vld [vmem:[%s15 + $0x130] sm:$0xff]
        %v2085 = vld [vmem:[%s15 + $0x138] sm:$0xff]
        %v2086 = vld [vmem:[%s15 + $0x140] sm:$0xff]
        %v2087 = vld [vmem:[%s15 + $0x148] sm:$0xff]
        %v2088 = vld [vmem:[%s15 + $0x150] sm:$0xff]
        %v2089 = vld [vmem:[%s15 + $0x158] sm:$0xff]
        %v2090 = vld [vmem:[%s15 + $0x160] sm:$0xff]
        %v2091 = vld [vmem:[%s15 + $0x168] sm:$0xff]
        %v2092 = vld [vmem:[%s15 + $0x170] sm:$0xff]
        %v2093 = vld [vmem:[%s15 + $0x178] sm:$0xff]
        %v2094 = vld [vmem:[%s15 + $0x180] sm:$0xff]
        %v2095 = vld [vmem:[%s15 + $0x188] sm:$0xff]
        %v2096 = vld [vmem:[%s15 + $0x190] sm:$0xff]
        %v2097 = vld [vmem:[%s15 + $0x198] sm:$0xff]
        %v2098 = vld [vmem:[%s15 + $0x1a0] sm:$0xff]
        %v2099 = vld [vmem:[%s15 + $0x1a8] sm:$0xff]
        %v2100 = vld [vmem:[%s15 + $0x1b0] sm:$0xff]
        %v2101 = vld [vmem:[%s15 + $0x1b8] sm:$0xff]
        %v2102 = vld [vmem:[%s15 + $0x1c0] sm:$0xff]
        %v2103 = vld [vmem:[%s15 + $0x1c8] sm:$0xff]
        %v2104 = vld [vmem:[%s15 + $0x1d0] sm:$0xff]
        %v2105 = vld [vmem:[%s15 + $0x1d8] sm:$0xff]
        %v2106 = vld [vmem:[%s15 + $0x1e0] sm:$0xff]
        %v2107 = vld [vmem:[%s15 + $0x1e8] sm:$0xff]
        %v2108 = vld [vmem:[%s15 + $0x1f0] sm:$0xff]
        %v2109 = vld [vmem:[%s15 + $0x1f8] sm:$0xff]
        %v2110 = vld [vmem:[%s15 + $0x200] sm:$0xff]
        %v2111 = vld [vmem:[%s15 + $0x208] sm:$0xff]
        %v2112 = vld [vmem:[%s15 + $0x210] sm:$0xff]
        %v2113 = vld [vmem:[%s15 + $0x218] sm:$0xff]
        %v2114 = vld [vmem:[%s15 + $0x220] sm:$0xff]
        %v2115 = vld [vmem:[%s15 + $0x228] sm:$0xff]
        %v2116 = vld [vmem:[%s15 + $0x230] sm:$0xff]
        %v2117 = vld [vmem:[%s15 + $0x238] sm:$0xff]
        %v2118 = vld [vmem:[%s15 + $0x240] sm:$0xff]
        %v2119 = vld [vmem:[%s15 + $0x248] sm:$0xff]
        %v2120 = vld [vmem:[%s15 + $0x250] sm:$0xff]
        %v2121 = vld [vmem:[%s15 + $0x258] sm:$0xff]
        %v2122 = vld [vmem:[%s15 + $0x260] sm:$0xff]
        %v2123 = vld [vmem:[%s15 + $0x268] sm:$0xff]
        %v2124 = vld [vmem:[%s15 + $0x270] sm:$0xff]
        %v2125 = vld [vmem:[%s15 + $0x278] sm:$0xff]
        %v2126 = vld [vmem:[%s15 + $0x280] sm:$0xff]
        %v2127 = vld [vmem:[%s15 + $0x288] sm:$0xff]
        %v2128 = vld [vmem:[%s15 + $0x290] sm:$0xff]
        %v2129 = vld [vmem:[%s15 + $0x298] sm:$0xff]
        %v2130 = vld [vmem:[%s15 + $0x2a0] sm:$0xff]
        %v2131 = vld [vmem:[%s15 + $0x2a8] sm:$0xff]
        %v2132 = vld [vmem:[%s15 + $0x2b0] sm:$0xff]
        %v2133 = vld [vmem:[%s15 + $0x2b8] sm:$0xff]
        %v2134 = vld [vmem:[%s15 + $0x2c0] sm:$0xff]
        %v2135 = vld [vmem:[%s15 + $0x2c8] sm:$0xff]
        %v2136 = vld [vmem:[%s15 + $0x2d0] sm:$0xff]
        %v2137 = vld [vmem:[%s15 + $0x2d8] sm:$0xff]
        %v2138 = vld [vmem:[%s15 + $0x2e0] sm:$0xff]
        %v2139 = vld [vmem:[%s15 + $0x2e8] sm:$0xff]
        %v2140 = vld [vmem:[%s15 + $0x2f0] sm:$0xff]
        %v2141 = vld [vmem:[%s15 + $0x2f8] sm:$0xff]
        %2142 = vmatpush.msra.mxu0 %v2076
        %2143 = vmatpush.msra.mxu0 %v2074
        %2144 = vmatpush.msra.mxu0 %v2072
        %2145 = vmatpush.msra.mxu0 %v2070
        %2146 = vmatpush.msra.mxu0 %v2068
        %2147 = vmatpush.msra.mxu0 %v2066
        %2148 = vmatpush.msra.mxu0 %v2064
        %2149 = vmatpush.msra.mxu0 %v2062
        %2150 = vmatpush.msra.mxu0 %v2060
        %2151 = vmatpush.msra.mxu0 %v2058
        %2152 = vmatpush.msra.mxu0 %v2056
        %2153 = vmatpush.msra.mxu0 %v2054
        %2154 = vmatpush.msra.mxu0 %v2052
        %2155 = vmatpush.msra.mxu0 %v2050
        %2156 = vmatpush.msra.mxu0 %v2048
        %2157 = vmatpush.msra.mxu0 %v2046
        %2158 = vmatmul.f32.gmra.mxu0 %v2037
        %v2159 = vpop.f32.mrf.mxu0
        %v2160 = vadd.f32 0.0, %v2159
        %2161 = vmatmul.f32.gmra.mxu0 %v2040
        %v2162 = vpop.f32.mrf.mxu0
        %v2163 = vadd.f32 0.0, %v2162
        %2164 = vmatmul.f32.gmra.mxu0 %v2043
        %v2165 = vpop.f32.mrf.mxu0
        %v2166 = vadd.f32 0.0, %v2165
        %2167 = vdwg.mxu0
        %2168 = vmatpush.msra.mxu0 %v2108
        %2169 = vmatpush.msra.mxu0 %v2106
        %2170 = vmatpush.msra.mxu0 %v2104
        %2171 = vmatpush.msra.mxu0 %v2102
        %2172 = vmatpush.msra.mxu0 %v2100
        %2173 = vmatpush.msra.mxu0 %v2098
        %2174 = vmatpush.msra.mxu0 %v2096
        %2175 = vmatpush.msra.mxu0 %v2094
        %2176 = vmatpush.msra.mxu0 %v2092
        %2177 = vmatpush.msra.mxu0 %v2090
        %2178 = vmatpush.msra.mxu0 %v2088
        %2179 = vmatpush.msra.mxu0 %v2086
        %2180 = vmatpush.msra.mxu0 %v2084
        %2181 = vmatpush.msra.mxu0 %v2082
        %2182 = vmatpush.msra.mxu0 %v2080
        %2183 = vmatpush.msra.mxu0 %v2078
        %2184 = vmatmul.f32.gmra.mxu0 %v2038
        %v2185 = vpop.f32.mrf.mxu0
        %v2186 = vadd.f32 %v2160, %v2185
        %2187 = vmatmul.f32.gmra.mxu0 %v2041
        %v2188 = vpop.f32.mrf.mxu0
        %v2189 = vadd.f32 %v2163, %v2188
        %2190 = vmatmul.f32.gmra.mxu0 %v2044
        %v2191 = vpop.f32.mrf.mxu0
        %v2192 = vadd.f32 %v2166, %v2191
        %2193 = vdwg.mxu0
        %2194 = vmatpush.msra.mxu0 %v2140
        %2195 = vmatpush.msra.mxu0 %v2138
        %2196 = vmatpush.msra.mxu0 %v2136
        %2197 = vmatpush.msra.mxu0 %v2134
        %2198 = vmatpush.msra.mxu0 %v2132
        %2199 = vmatpush.msra.mxu0 %v2130
        %2200 = vmatpush.msra.mxu0 %v2128
        %2201 = vmatpush.msra.mxu0 %v2126
        %2202 = vmatpush.msra.mxu0 %v2124
        %2203 = vmatpush.msra.mxu0 %v2122
        %2204 = vmatpush.msra.mxu0 %v2120
        %2205 = vmatpush.msra.mxu0 %v2118
        %2206 = vmatpush.msra.mxu0 %v2116
        %2207 = vmatpush.msra.mxu0 %v2114
        %2208 = vmatpush.msra.mxu0 %v2112
        %2209 = vmatpush.msra.mxu0 %v2110
        %2210 = vmatmul.f32.gmra.mxu0 %v2039
        %v2211 = vpop.f32.mrf.mxu0
        %v2212 = vadd.f32 %v2186, %v2211
        %2213 = vmatmul.f32.gmra.mxu0 %v2042
        %v2214 = vpop.f32.mrf.mxu0
        %v2215 = vadd.f32 %v2189, %v2214
        %2216 = vmatmul.f32.gmra.mxu0 %v2045
        %v2217 = vpop.f32.mrf.mxu0
        %v2218 = vadd.f32 %v2192, %v2217
        %2219 = vdwg.mxu0
        %2220 = vmatpush.msra.mxu0 %v2077
        %2221 = vmatpush.msra.mxu0 %v2075
        %2222 = vmatpush.msra.mxu0 %v2073
        %2223 = vmatpush.msra.mxu0 %v2071
        %2224 = vmatpush.msra.mxu0 %v2069
        %2225 = vmatpush.msra.mxu0 %v2067
        %2226 = vmatpush.msra.mxu0 %v2065
        %2227 = vmatpush.msra.mxu0 %v2063
        %2228 = vmatpush.msra.mxu0 %v2061
        %2229 = vmatpush.msra.mxu0 %v2059
        %2230 = vmatpush.msra.mxu0 %v2057
        %2231 = vmatpush.msra.mxu0 %v2055
        %2232 = vmatpush.msra.mxu0 %v2053
        %2233 = vmatpush.msra.mxu0 %v2051
        %2234 = vmatpush.msra.mxu0 %v2049
        %2235 = vmatpush.msra.mxu0 %v2047
        %2236 = vmatmul.f32.gmra.mxu0 %v2037
        %v2237 = vpop.f32.mrf.mxu0
        %v2238 = vadd.f32 0.0, %v2237
        %2239 = vmatmul.f32.gmra.mxu0 %v2040
        %v2240 = vpop.f32.mrf.mxu0
        %v2241 = vadd.f32 0.0, %v2240
        %2242 = vmatmul.f32.gmra.mxu0 %v2043
        %v2243 = vpop.f32.mrf.mxu0
        %v2244 = vadd.f32 0.0, %v2243
        %2245 = vdwg.mxu0
        %2246 = vmatpush.msra.mxu0 %v2109
        %2247 = vmatpush.msra.mxu0 %v2107
        %2248 = vmatpush.msra.mxu0 %v2105
        %2249 = vmatpush.msra.mxu0 %v2103
        %2250 = vmatpush.msra.mxu0 %v2101
        %2251 = vmatpush.msra.mxu0 %v2099
        %2252 = vmatpush.msra.mxu0 %v2097
        %2253 = vmatpush.msra.mxu0 %v2095
        %2254 = vmatpush.msra.mxu0 %v2093
        %2255 = vmatpush.msra.mxu0 %v2091
        %2256 = vmatpush.msra.mxu0 %v2089
        %2257 = vmatpush.msra.mxu0 %v2087
        %2258 = vmatpush.msra.mxu0 %v2085
        %2259 = vmatpush.msra.mxu0 %v2083
        %2260 = vmatpush.msra.mxu0 %v2081
        %2261 = vmatpush.msra.mxu0 %v2079
        %2262 = vmatmul.f32.gmra.mxu0 %v2038
        %v2263 = vpop.f32.mrf.mxu0
        %v2264 = vadd.f32 %v2238, %v2263
        %2265 = vmatmul.f32.gmra.mxu0 %v2041
        %v2266 = vpop.f32.mrf.mxu0
        %v2267 = vadd.f32 %v2241, %v2266
        %2268 = vmatmul.f32.gmra.mxu0 %v2044
        %v2269 = vpop.f32.mrf.mxu0
        %v2270 = vadd.f32 %v2244, %v2269
        %2271 = vdwg.mxu0
        %2272 = vmatpush.msra.mxu0 %v2141
        %2273 = vmatpush.msra.mxu0 %v2139
        %2274 = vmatpush.msra.mxu0 %v2137
        %2275 = vmatpush.msra.mxu0 %v2135
        %2276 = vmatpush.msra.mxu0 %v2133
        %2277 = vmatpush.msra.mxu0 %v2131
        %2278 = vmatpush.msra.mxu0 %v2129
        %2279 = vmatpush.msra.mxu0 %v2127
        %2280 = vmatpush.msra.mxu0 %v2125
        %2281 = vmatpush.msra.mxu0 %v2123
        %2282 = vmatpush.msra.mxu0 %v2121
        %2283 = vmatpush.msra.mxu0 %v2119
        %2284 = vmatpush.msra.mxu0 %v2117
        %2285 = vmatpush.msra.mxu0 %v2115
        %2286 = vmatpush.msra.mxu0 %v2113
        %2287 = vmatpush.msra.mxu0 %v2111
        %2288 = vmatmul.f32.gmra.mxu0 %v2039
        %v2289 = vpop.f32.mrf.mxu0
        %v2290 = vadd.f32 %v2264, %v2289
        %2291 = vmatmul.f32.gmra.mxu0 %v2042
        %v2292 = vpop.f32.mrf.mxu0
        %v2293 = vadd.f32 %v2267, %v2292
        %2294 = vmatmul.f32.gmra.mxu0 %v2045
        %v2295 = vpop.f32.mrf.mxu0
        %v2296 = vadd.f32 %v2270, %v2295
        %2297 = vdwg.mxu0
        %v2298 = vld [vmem:[%s17] sm:$0xff]
        %v2299 = vld [vmem:[%s17 + $0x8] sm:$0xf]
        %vm2300 = vcmask 195584
        %v2302 = vsel %vm2300, %v2298, 0
        %v2305 = vsel %vm2300, %v2299, 0
        %2307 = vmatpush.msra.mxu0 0.0
        %2308 = vmatpush.msra.mxu0 0.0
        %2309 = vmatpush.msra.mxu0 0.0
        %2310 = vmatpush.msra.mxu0 0.0
        %2311 = vmatpush.msra.mxu0 0.0
        %2312 = vmatpush.msra.mxu0 0.0
        %2313 = vmatpush.msra.mxu0 0.0
        %2314 = vmatpush.msra.mxu0 0.0
        %2315 = vmatpush.msra.mxu0 0.0
        %2316 = vmatpush.msra.mxu0 0.0
        %2317 = vmatpush.msra.mxu0 0.0
        %2318 = vmatpush.msra.mxu0 0.0
        %2319 = vmatpush.msra.mxu0 0.0
        %2320 = vmatpush.msra.mxu0 %v2218
        %2321 = vmatpush.msra.mxu0 %v2215
        %2322 = vmatpush.msra.mxu0 %v2212
        %2323 = vmatmul.f32.gmra.mxu0 %v2302
        %v2324 = vpop.f32.mrf.mxu0
        %v2325 = vadd.f32 0.0, %v2324
        %2326 = vmatmul.f32.gmra.mxu0 %v2305
        %v2327 = vpop.f32.mrf.mxu0
        %v2328 = vadd.f32 0.0, %v2327
        %2329 = vdwg.mxu0
        %2330 = vmatpush.msra.mxu0 0.0
        %2331 = vmatpush.msra.mxu0 0.0
        %2332 = vmatpush.msra.mxu0 0.0
        %2333 = vmatpush.msra.mxu0 0.0
        %2334 = vmatpush.msra.mxu0 0.0
        %2335 = vmatpush.msra.mxu0 0.0
        %2336 = vmatpush.msra.mxu0 0.0
        %2337 = vmatpush.msra.mxu0 0.0
        %2338 = vmatpush.msra.mxu0 0.0
        %2339 = vmatpush.msra.mxu0 0.0
        %2340 = vmatpush.msra.mxu0 0.0
        %2341 = vmatpush.msra.mxu0 0.0
        %2342 = vmatpush.msra.mxu0 0.0
        %2343 = vmatpush.msra.mxu0 %v2296
        %2344 = vmatpush.msra.mxu0 %v2293
        %2345 = vmatpush.msra.mxu0 %v2290
        %2346 = vmatmul.f32.gmra.mxu0 %v2302
        %v2347 = vpop.f32.mrf.mxu0
        %v2348 = vadd.f32 0.0, %v2347
        %2349 = vmatmul.f32.gmra.mxu0 %v2305
        %v2350 = vpop.f32.mrf.mxu0
        %v2351 = vadd.f32 0.0, %v2350
        %2352 = vdwg.mxu0
        %v2353 = vld [vmem:[%s19] sm:$0xff]
        %v2354 = vld [vmem:[%s19 + $0x8] sm:$0xf]
        %v2356 = vsel %vm2300, %v2353, 0
        %v2359 = vsel %vm2300, %v2354, 0
        %2361 = vmatpush.msra.mxu0 0.0
        %2362 = vmatpush.msra.mxu0 0.0
        %2363 = vmatpush.msra.mxu0 0.0
        %2364 = vmatpush.msra.mxu0 0.0
        %2365 = vmatpush.msra.mxu0 0.0
        %2366 = vmatpush.msra.mxu0 0.0
        %2367 = vmatpush.msra.mxu0 0.0
        %2368 = vmatpush.msra.mxu0 0.0
        %2369 = vmatpush.msra.mxu0 0.0
        %2370 = vmatpush.msra.mxu0 0.0
        %2371 = vmatpush.msra.mxu0 0.0
        %2372 = vmatpush.msra.mxu0 0.0
        %2373 = vmatpush.msra.mxu0 0.0
        %2374 = vmatpush.msra.mxu0 %v2218
        %2375 = vmatpush.msra.mxu0 %v2215
        %2376 = vmatpush.msra.mxu0 %v2212
        %2377 = vmatmul.f32.gmra.mxu0 %v2356
        %v2378 = vpop.f32.mrf.mxu0
        %v2379 = vadd.f32 0.0, %v2378
        %2380 = vmatmul.f32.gmra.mxu0 %v2359
        %v2381 = vpop.f32.mrf.mxu0
        %v2382 = vadd.f32 0.0, %v2381
        %2383 = vdwg.mxu0
        %2384 = vmatpush.msra.mxu0 0.0
        %2385 = vmatpush.msra.mxu0 0.0
        %2386 = vmatpush.msra.mxu0 0.0
        %2387 = vmatpush.msra.mxu0 0.0
        %2388 = vmatpush.msra.mxu0 0.0
        %2389 = vmatpush.msra.mxu0 0.0
        %2390 = vmatpush.msra.mxu0 0.0
        %2391 = vmatpush.msra.mxu0 0.0
        %2392 = vmatpush.msra.mxu0 0.0
        %2393 = vmatpush.msra.mxu0 0.0
        %2394 = vmatpush.msra.mxu0 0.0
        %2395 = vmatpush.msra.mxu0 0.0
        %2396 = vmatpush.msra.mxu0 0.0
        %2397 = vmatpush.msra.mxu0 %v2296
        %2398 = vmatpush.msra.mxu0 %v2293
        %2399 = vmatpush.msra.mxu0 %v2290
        %2400 = vmatmul.f32.gmra.mxu0 %v2356
        %v2401 = vpop.f32.mrf.mxu0
        %v2402 = vadd.f32 0.0, %v2401
        %2403 = vmatmul.f32.gmra.mxu0 %v2359
        %v2404 = vpop.f32.mrf.mxu0
        %v2405 = vadd.f32 0.0, %v2404
        %2406 = vdwg.mxu0
        %v2407 = vmax.f32 %v2325, %v2379
        %v2408 = vmax.f32 %v2348, %v2402
        %v2409 = vmax.f32 %v2328, %v2382
        %v2410 = vmax.f32 %v2351, %v2405
        %v2411 = vld [vmem:[%s21] sm:$0xff]
        %v2412 = vld [vmem:[%s21 + $0x8] sm:$0xff]
        %v2413 = vld [vmem:[%s21 + $0x10] sm:$0xff]
        %v2414 = vld [vmem:[%s21 + $0x18] sm:$0xff]
        %v2415 = vld [vmem:[%s21 + $0x20] sm:$0xff]
        %v2416 = vld [vmem:[%s21 + $0x28] sm:$0xff]
        %v2417 = vld [vmem:[%s21 + $0x30] sm:$0xff]
        %v2418 = vld [vmem:[%s21 + $0x38] sm:$0xff]
        %v2419 = vld [vmem:[%s21 + $0x40] sm:$0xff]
        %v2420 = vld [vmem:[%s21 + $0x48] sm:$0xff]
        %v2421 = vld [vmem:[%s21 + $0x50] sm:$0xff]
        %v2422 = vld [vmem:[%s21 + $0x58] sm:$0xff]
        %v2423 = vld [vmem:[%s21 + $0x60] sm:$0xff]
        %v2424 = vld [vmem:[%s21 + $0x68] sm:$0xff]
        %v2425 = vld [vmem:[%s21 + $0x70] sm:$0xff]
        %v2426 = vld [vmem:[%s21 + $0x78] sm:$0xff]
        %v2427 = vld [vmem:[%s21 + $0x80] sm:$0xff]
        %v2428 = vld [vmem:[%s21 + $0x88] sm:$0xff]
        %v2429 = vld [vmem:[%s21 + $0x90] sm:$0xff]
        %v2430 = vld [vmem:[%s21 + $0x98] sm:$0xff]
        %v2431 = vld [vmem:[%s21 + $0xa0] sm:$0xff]
        %v2432 = vld [vmem:[%s21 + $0xa8] sm:$0xff]
        %v2433 = vld [vmem:[%s21 + $0xb0] sm:$0xff]
        %v2434 = vld [vmem:[%s21 + $0xb8] sm:$0xff]
        %vm2435 = vcmask 523264
        %v2437 = vsel %vm2435, %v2408, 0
        %v2440 = vsel %vm2435, %v2410, 0
        %2442 = vmatpush.msra.mxu0 %v2426
        %2443 = vmatpush.msra.mxu0 %v2425
        %2444 = vmatpush.msra.mxu0 %v2424
        %2445 = vmatpush.msra.mxu0 %v2423
        %2446 = vmatpush.msra.mxu0 %v2422
        %2447 = vmatpush.msra.mxu0 %v2421
        %2448 = vmatpush.msra.mxu0 %v2420
        %2449 = vmatpush.msra.mxu0 %v2419
        %2450 = vmatpush.msra.mxu0 %v2418
        %2451 = vmatpush.msra.mxu0 %v2417
        %2452 = vmatpush.msra.mxu0 %v2416
        %2453 = vmatpush.msra.mxu0 %v2415
        %2454 = vmatpush.msra.mxu0 %v2414
        %2455 = vmatpush.msra.mxu0 %v2413
        %2456 = vmatpush.msra.mxu0 %v2412
        %2457 = vmatpush.msra.mxu0 %v2411
        %2458 = vmatmul.f32.gmra.mxu0 %v2407
        %v2459 = vpop.f32.mrf.mxu0
        %v2460 = vadd.f32 0.0, %v2459
        %2461 = vmatmul.f32.gmra.mxu0 %v2409
        %v2462 = vpop.f32.mrf.mxu0
        %v2463 = vadd.f32 0.0, %v2462
        %2464 = vdwg.mxu0
        %2465 = vmatpush.msra.mxu0 0.0
        %2466 = vmatpush.msra.mxu0 0.0
        %2467 = vmatpush.msra.mxu0 0.0
        %2468 = vmatpush.msra.mxu0 0.0
        %2469 = vmatpush.msra.mxu0 0.0
        %2470 = vmatpush.msra.mxu0 0.0
        %2471 = vmatpush.msra.mxu0 0.0
        %2472 = vmatpush.msra.mxu0 0.0
        %2473 = vmatpush.msra.mxu0 %v2434
        %2474 = vmatpush.msra.mxu0 %v2433
        %2475 = vmatpush.msra.mxu0 %v2432
        %2476 = vmatpush.msra.mxu0 %v2431
        %2477 = vmatpush.msra.mxu0 %v2430
        %2478 = vmatpush.msra.mxu0 %v2429
        %2479 = vmatpush.msra.mxu0 %v2428
        %2480 = vmatpush.msra.mxu0 %v2427
        %2481 = vmatmul.f32.gmra.mxu0 %v2437
        %v2482 = vpop.f32.mrf.mxu0
        %v2483 = vadd.f32 %v2460, %v2482
        %2484 = vmatmul.f32.gmra.mxu0 %v2440
        %v2485 = vpop.f32.mrf.mxu0
        %v2486 = vadd.f32 %v2463, %v2485
        %2487 = vdwg.mxu0
        %v2488 = vld [vmem:[%s23] sm:$0xff]
        %v2489 = vld [vmem:[%s23 + $0x8] sm:$0xff]
        %v2490 = vld [vmem:[%s23 + $0x10] sm:$0xff]
        %v2491 = vld [vmem:[%s23 + $0x18] sm:$0xff]
        %v2492 = vld [vmem:[%s23 + $0x20] sm:$0xff]
        %v2493 = vld [vmem:[%s23 + $0x28] sm:$0xff]
        %v2494 = vld [vmem:[%s23 + $0x30] sm:$0xff]
        %v2495 = vld [vmem:[%s23 + $0x38] sm:$0xff]
        %v2496 = vld [vmem:[%s23 + $0x40] sm:$0xff]
        %v2497 = vld [vmem:[%s23 + $0x48] sm:$0xff]
        %v2498 = vld [vmem:[%s23 + $0x50] sm:$0xff]
        %v2499 = vld [vmem:[%s23 + $0x58] sm:$0xff]
        %v2500 = vld [vmem:[%s23 + $0x60] sm:$0xff]
        %v2501 = vld [vmem:[%s23 + $0x68] sm:$0xff]
        %v2502 = vld [vmem:[%s23 + $0x70] sm:$0xff]
        %v2503 = vld [vmem:[%s23 + $0x78] sm:$0xff]
        %v2504 = vld [vmem:[%s23 + $0x80] sm:$0xff]
        %v2505 = vld [vmem:[%s23 + $0x88] sm:$0xff]
        %v2506 = vld [vmem:[%s23 + $0x90] sm:$0xff]
        %v2507 = vld [vmem:[%s23 + $0x98] sm:$0xff]
        %v2508 = vld [vmem:[%s23 + $0xa0] sm:$0xff]
        %v2509 = vld [vmem:[%s23 + $0xa8] sm:$0xff]
        %v2510 = vld [vmem:[%s23 + $0xb0] sm:$0xff]
        %v2511 = vld [vmem:[%s23 + $0xb8] sm:$0xff]
        %2512 = vmatpush.msra.mxu0 %v2503
        %2513 = vmatpush.msra.mxu0 %v2502
        %2514 = vmatpush.msra.mxu0 %v2501
        %2515 = vmatpush.msra.mxu0 %v2500
        %2516 = vmatpush.msra.mxu0 %v2499
        %2517 = vmatpush.msra.mxu0 %v2498
        %2518 = vmatpush.msra.mxu0 %v2497
        %2519 = vmatpush.msra.mxu0 %v2496
        %2520 = vmatpush.msra.mxu0 %v2495
        %2521 = vmatpush.msra.mxu0 %v2494
        %2522 = vmatpush.msra.mxu0 %v2493
        %2523 = vmatpush.msra.mxu0 %v2492
        %2524 = vmatpush.msra.mxu0 %v2491
        %2525 = vmatpush.msra.mxu0 %v2490
        %2526 = vmatpush.msra.mxu0 %v2489
        %2527 = vmatpush.msra.mxu0 %v2488
        %2528 = vmatmul.f32.gmra.mxu0 %v2407
        %v2529 = vpop.f32.mrf.mxu0
        %v2530 = vadd.f32 0.0, %v2529
        %2531 = vmatmul.f32.gmra.mxu0 %v2409
        %v2532 = vpop.f32.mrf.mxu0
        %v2533 = vadd.f32 0.0, %v2532
        %2534 = vdwg.mxu0
        %2535 = vmatpush.msra.mxu0 0.0
        %2536 = vmatpush.msra.mxu0 0.0
        %2537 = vmatpush.msra.mxu0 0.0
        %2538 = vmatpush.msra.mxu0 0.0
        %2539 = vmatpush.msra.mxu0 0.0
        %2540 = vmatpush.msra.mxu0 0.0
        %2541 = vmatpush.msra.mxu0 0.0
        %2542 = vmatpush.msra.mxu0 0.0
        %2543 = vmatpush.msra.mxu0 %v2511
        %2544 = vmatpush.msra.mxu0 %v2510
        %2545 = vmatpush.msra.mxu0 %v2509
        %2546 = vmatpush.msra.mxu0 %v2508
        %2547 = vmatpush.msra.mxu0 %v2507
        %2548 = vmatpush.msra.mxu0 %v2506
        %2549 = vmatpush.msra.mxu0 %v2505
        %2550 = vmatpush.msra.mxu0 %v2504
        %2551 = vmatmul.f32.gmra.mxu0 %v2437
        %v2552 = vpop.f32.mrf.mxu0
        %v2553 = vadd.f32 %v2530, %v2552
        %2554 = vmatmul.f32.gmra.mxu0 %v2440
        %v2555 = vpop.f32.mrf.mxu0
        %v2556 = vadd.f32 %v2533, %v2555
        %2557 = vdwg.mxu0
        %v2558 = vmax.f32 %v2483, %v2553
        %v2559 = vmax.f32 %v2486, %v2556
        %v2560 = vld [vmem:[%s25] sm:$0xff]
        %v2561 = vld [vmem:[%s25 + $0x8] sm:$0xff]
        %v2562 = vld [vmem:[%s25 + $0x10] sm:$0xff]
        %v2563 = vld [vmem:[%s25 + $0x18] sm:$0xff]
        %v2564 = vld [vmem:[%s25 + $0x20] sm:$0xff]
        %v2565 = vld [vmem:[%s25 + $0x28] sm:$0xff]
        %v2566 = vld [vmem:[%s25 + $0x30] sm:$0xff]
        %v2567 = vld [vmem:[%s25 + $0x38] sm:$0xff]
        %v2568 = vld [vmem:[%s25 + $0x40] sm:$0xff]
        %v2569 = vld [vmem:[%s25 + $0x48] sm:$0xff]
        %v2570 = vld [vmem:[%s25 + $0x50] sm:$0xff]
        %v2571 = vld [vmem:[%s25 + $0x58] sm:$0xff]
        %v2572 = vld [vmem:[%s25 + $0x60] sm:$0xff]
        %v2573 = vld [vmem:[%s25 + $0x68] sm:$0xff]
        %v2574 = vld [vmem:[%s25 + $0x70] sm:$0xff]
        %v2575 = vld [vmem:[%s25 + $0x78] sm:$0xff]
        %v2576 = vld [vmem:[%s25 + $0x80] sm:$0xff]
        %v2577 = vld [vmem:[%s25 + $0x88] sm:$0xff]
        %v2578 = vld [vmem:[%s25 + $0x90] sm:$0xff]
        %v2579 = vld [vmem:[%s25 + $0x98] sm:$0xff]
        %v2580 = vld [vmem:[%s25 + $0xa0] sm:$0xff]
        %v2581 = vld [vmem:[%s25 + $0xa8] sm:$0xff]
        %v2582 = vld [vmem:[%s25 + $0xb0] sm:$0xff]
        %v2583 = vld [vmem:[%s25 + $0xb8] sm:$0xff]
        %s2584 = scalar_lea.vmem %s25, 192
        %v2585 = vld [vmem:[%s2584] sm:$0xff]
        %v2586 = vld [vmem:[%s2584 + $0x8] sm:$0xff]
        %v2587 = vld [vmem:[%s2584 + $0x10] sm:$0xff]
        %v2588 = vld [vmem:[%s2584 + $0x18] sm:$0xff]
        %v2589 = vld [vmem:[%s2584 + $0x20] sm:$0xff]
        %v2590 = vld [vmem:[%s2584 + $0x28] sm:$0xff]
        %v2591 = vld [vmem:[%s2584 + $0x30] sm:$0xff]
        %v2592 = vld [vmem:[%s2584 + $0x38] sm:$0xff]
        %v2593 = vld [vmem:[%s2584 + $0x40] sm:$0xff]
        %v2594 = vld [vmem:[%s2584 + $0x48] sm:$0xff]
        %v2595 = vld [vmem:[%s2584 + $0x50] sm:$0xff]
        %v2596 = vld [vmem:[%s2584 + $0x58] sm:$0xff]
        %v2597 = vld [vmem:[%s2584 + $0x60] sm:$0xff]
        %v2598 = vld [vmem:[%s2584 + $0x68] sm:$0xff]
        %v2599 = vld [vmem:[%s2584 + $0x70] sm:$0xff]
        %v2600 = vld [vmem:[%s2584 + $0x78] sm:$0xff]
        %v2601 = vld [vmem:[%s2584 + $0x80] sm:$0xff]
        %v2602 = vld [vmem:[%s2584 + $0x88] sm:$0xff]
        %v2603 = vld [vmem:[%s2584 + $0x90] sm:$0xff]
        %v2604 = vld [vmem:[%s2584 + $0x98] sm:$0xff]
        %v2605 = vld [vmem:[%s2584 + $0xa0] sm:$0xff]
        %v2606 = vld [vmem:[%s2584 + $0xa8] sm:$0xff]
        %v2607 = vld [vmem:[%s2584 + $0xb0] sm:$0xff]
        %v2608 = vld [vmem:[%s2584 + $0xb8] sm:$0xff]
        %v2611 = vrot.slane %v2558, 1
        %v2612 = vrot.slane %v2559, 1
        %v2613 = vsel %vm942, %v2611, %v2612
        %vm2614 = vcmask 785408
        %v2615 = vsel %vm2614, %v2613, 0
        %v2617 = vsel %vm2614, %v2612, 0
        %2619 = vmatpush.msra.mxu0 0.0
        %2620 = vmatpush.msra.mxu0 0.0
        %2621 = vmatpush.msra.mxu0 0.0
        %2622 = vmatpush.msra.mxu0 0.0
        %2623 = vmatpush.msra.mxu0 %v2607
        %2624 = vmatpush.msra.mxu0 %v2605
        %2625 = vmatpush.msra.mxu0 %v2603
        %2626 = vmatpush.msra.mxu0 %v2601
        %2627 = vmatpush.msra.mxu0 %v2599
        %2628 = vmatpush.msra.mxu0 %v2597
        %2629 = vmatpush.msra.mxu0 %v2595
        %2630 = vmatpush.msra.mxu0 %v2593
        %2631 = vmatpush.msra.mxu0 %v2591
        %2632 = vmatpush.msra.mxu0 %v2589
        %2633 = vmatpush.msra.mxu0 %v2587
        %2634 = vmatpush.msra.mxu0 %v2585
        %2635 = vmatmul.f32.gmra.mxu0 %v2615
        %v2636 = vpop.f32.mrf.mxu0
        %v2637 = vadd.f32 0.0, %v2636
        %2638 = vmatmul.f32.gmra.mxu0 %v2617
        %v2639 = vpop.f32.mrf.mxu0
        %v2640 = vadd.f32 0.0, %v2639
        %2641 = vdwg.mxu0
        %2642 = vmatpush.msra.mxu0 0.0
        %2643 = vmatpush.msra.mxu0 0.0
        %2644 = vmatpush.msra.mxu0 0.0
        %2645 = vmatpush.msra.mxu0 0.0
        %2646 = vmatpush.msra.mxu0 %v2608
        %2647 = vmatpush.msra.mxu0 %v2606
        %2648 = vmatpush.msra.mxu0 %v2604
        %2649 = vmatpush.msra.mxu0 %v2602
        %2650 = vmatpush.msra.mxu0 %v2600
        %2651 = vmatpush.msra.mxu0 %v2598
        %2652 = vmatpush.msra.mxu0 %v2596
        %2653 = vmatpush.msra.mxu0 %v2594
        %2654 = vmatpush.msra.mxu0 %v2592
        %2655 = vmatpush.msra.mxu0 %v2590
        %2656 = vmatpush.msra.mxu0 %v2588
        %2657 = vmatpush.msra.mxu0 %v2586
        %2658 = vmatmul.f32.gmra.mxu0 %v2615
        %v2659 = vpop.f32.mrf.mxu0
        %v2660 = vadd.f32 0.0, %v2659
        %2661 = vmatmul.f32.gmra.mxu0 %v2617
        %v2662 = vpop.f32.mrf.mxu0
        %v2663 = vadd.f32 0.0, %v2662
        %2664 = vdwg.mxu0
        %v2665 = vsel %vm2614, %v2558, 0
        %v2667 = vsel %vm2614, %v2559, 0
        %2669 = vmatpush.msra.mxu0 0.0
        %2670 = vmatpush.msra.mxu0 0.0
        %2671 = vmatpush.msra.mxu0 0.0
        %2672 = vmatpush.msra.mxu0 0.0
        %2673 = vmatpush.msra.mxu0 %v2582
        %2674 = vmatpush.msra.mxu0 %v2580
        %2675 = vmatpush.msra.mxu0 %v2578
        %2676 = vmatpush.msra.mxu0 %v2576
        %2677 = vmatpush.msra.mxu0 %v2574
        %2678 = vmatpush.msra.mxu0 %v2572
        %2679 = vmatpush.msra.mxu0 %v2570
        %2680 = vmatpush.msra.mxu0 %v2568
        %2681 = vmatpush.msra.mxu0 %v2566
        %2682 = vmatpush.msra.mxu0 %v2564
        %2683 = vmatpush.msra.mxu0 %v2562
        %2684 = vmatpush.msra.mxu0 %v2560
        %2685 = vmatmul.f32.gmra.mxu0 %v2665
        %v2686 = vpop.f32.mrf.mxu0
        %v2687 = vadd.f32 %v2637, %v2686
        %2688 = vmatmul.f32.gmra.mxu0 %v2667
        %v2689 = vpop.f32.mrf.mxu0
        %v2690 = vadd.f32 %v2640, %v2689
        %2691 = vdwg.mxu0
        %2692 = vmatpush.msra.mxu0 0.0
        %2693 = vmatpush.msra.mxu0 0.0
        %2694 = vmatpush.msra.mxu0 0.0
        %2695 = vmatpush.msra.mxu0 0.0
        %2696 = vmatpush.msra.mxu0 %v2583
        %2697 = vmatpush.msra.mxu0 %v2581
        %2698 = vmatpush.msra.mxu0 %v2579
        %2699 = vmatpush.msra.mxu0 %v2577
        %2700 = vmatpush.msra.mxu0 %v2575
        %2701 = vmatpush.msra.mxu0 %v2573
        %2702 = vmatpush.msra.mxu0 %v2571
        %2703 = vmatpush.msra.mxu0 %v2569
        %2704 = vmatpush.msra.mxu0 %v2567
        %2705 = vmatpush.msra.mxu0 %v2565
        %2706 = vmatpush.msra.mxu0 %v2563
        %2707 = vmatpush.msra.mxu0 %v2561
        %2708 = vmatmul.f32.gmra.mxu0 %v2665
        %v2709 = vpop.f32.mrf.mxu0
        %v2710 = vadd.f32 %v2660, %v2709
        %2711 = vmatmul.f32.gmra.mxu0 %v2667
        %v2712 = vpop.f32.mrf.mxu0
        %v2713 = vadd.f32 %v2663, %v2712
        %2714 = vdwg.mxu0
        %s2715 = scalar_lea.vmem %s25, 384
        %v2716 = vld [vmem:[%s2715] sm:$0xff]
        %v2717 = vld [vmem:[%s2715 + $0x8] sm:$0xff]
        %v2718 = vld [vmem:[%s2715 + $0x10] sm:$0xff]
        %v2719 = vld [vmem:[%s2715 + $0x18] sm:$0xff]
        %v2720 = vld [vmem:[%s2715 + $0x20] sm:$0xff]
        %v2721 = vld [vmem:[%s2715 + $0x28] sm:$0xff]
        %v2722 = vld [vmem:[%s2715 + $0x30] sm:$0xff]
        %v2723 = vld [vmem:[%s2715 + $0x38] sm:$0xff]
        %v2724 = vld [vmem:[%s2715 + $0x40] sm:$0xff]
        %v2725 = vld [vmem:[%s2715 + $0x48] sm:$0xff]
        %v2726 = vld [vmem:[%s2715 + $0x50] sm:$0xff]
        %v2727 = vld [vmem:[%s2715 + $0x58] sm:$0xff]
        %v2728 = vld [vmem:[%s2715 + $0x60] sm:$0xff]
        %v2729 = vld [vmem:[%s2715 + $0x68] sm:$0xff]
        %v2730 = vld [vmem:[%s2715 + $0x70] sm:$0xff]
        %v2731 = vld [vmem:[%s2715 + $0x78] sm:$0xff]
        %v2732 = vld [vmem:[%s2715 + $0x80] sm:$0xff]
        %v2733 = vld [vmem:[%s2715 + $0x88] sm:$0xff]
        %v2734 = vld [vmem:[%s2715 + $0x90] sm:$0xff]
        %v2735 = vld [vmem:[%s2715 + $0x98] sm:$0xff]
        %v2736 = vld [vmem:[%s2715 + $0xa0] sm:$0xff]
        %v2737 = vld [vmem:[%s2715 + $0xa8] sm:$0xff]
        %v2738 = vld [vmem:[%s2715 + $0xb0] sm:$0xff]
        %v2739 = vld [vmem:[%s2715 + $0xb8] sm:$0xff]
        %v2740 = vrot.slane %v2558, 2
        %v2741 = vrot.slane %v2559, 2
        %v2742 = vsel %vm1105, %v2740, %v2741
        %v2743 = vsel %vm2614, %v2742, 0
        %v2745 = vsel %vm2614, %v2741, 0
        %2747 = vmatpush.msra.mxu0 0.0
        %2748 = vmatpush.msra.mxu0 0.0
        %2749 = vmatpush.msra.mxu0 0.0
        %2750 = vmatpush.msra.mxu0 0.0
        %2751 = vmatpush.msra.mxu0 %v2738
        %2752 = vmatpush.msra.mxu0 %v2736
        %2753 = vmatpush.msra.mxu0 %v2734
        %2754 = vmatpush.msra.mxu0 %v2732
        %2755 = vmatpush.msra.mxu0 %v2730
        %2756 = vmatpush.msra.mxu0 %v2728
        %2757 = vmatpush.msra.mxu0 %v2726
        %2758 = vmatpush.msra.mxu0 %v2724
        %2759 = vmatpush.msra.mxu0 %v2722
        %2760 = vmatpush.msra.mxu0 %v2720
        %2761 = vmatpush.msra.mxu0 %v2718
        %2762 = vmatpush.msra.mxu0 %v2716
        %2763 = vmatmul.f32.gmra.mxu0 %v2743
        %v2764 = vpop.f32.mrf.mxu0
        %v2765 = vadd.f32 0.0, %v2764
        %2766 = vmatmul.f32.gmra.mxu0 %v2745
        %v2767 = vpop.f32.mrf.mxu0
        %v2768 = vadd.f32 0.0, %v2767
        %2769 = vdwg.mxu0
        %2770 = vmatpush.msra.mxu0 0.0
        %2771 = vmatpush.msra.mxu0 0.0
        %2772 = vmatpush.msra.mxu0 0.0
        %2773 = vmatpush.msra.mxu0 0.0
        %2774 = vmatpush.msra.mxu0 %v2739
        %2775 = vmatpush.msra.mxu0 %v2737
        %2776 = vmatpush.msra.mxu0 %v2735
        %2777 = vmatpush.msra.mxu0 %v2733
        %2778 = vmatpush.msra.mxu0 %v2731
        %2779 = vmatpush.msra.mxu0 %v2729
        %2780 = vmatpush.msra.mxu0 %v2727
        %2781 = vmatpush.msra.mxu0 %v2725
        %2782 = vmatpush.msra.mxu0 %v2723
        %2783 = vmatpush.msra.mxu0 %v2721
        %2784 = vmatpush.msra.mxu0 %v2719
        %2785 = vmatpush.msra.mxu0 %v2717
        %2786 = vmatmul.f32.gmra.mxu0 %v2743
        %v2787 = vpop.f32.mrf.mxu0
        %v2788 = vadd.f32 0.0, %v2787
        %2789 = vmatmul.f32.gmra.mxu0 %v2745
        %v2790 = vpop.f32.mrf.mxu0
        %v2791 = vadd.f32 0.0, %v2790
        %2792 = vdwg.mxu0
        %v2793 = vadd.f32 %v2687, %v2765
        %v2794 = vadd.f32 %v2710, %v2788
        %v2795 = vadd.f32 %v2690, %v2768
        %v2796 = vadd.f32 %v2713, %v2791
        %v2797 = vmax.f32 %v2793, 0.0
        %v2798 = vmax.f32 %v2794, 0.0
        %v2799 = vmax.f32 %v2795, 0.0
        %v2800 = vmax.f32 %v2796, 0.0
        %v2801 = vld [vmem:[%s27] sm:$0x3]
        %v2803 = vperm.slane %v2801, 0
        %v2804 = vperm.slane %v2801, 1
        %v2807 = vmul.f32 %v2797, %v2803
        %v2808 = vmul.f32 %v2798, %v2804
        %v2809 = vmul.f32 %v2799, %v2803
        %v2810 = vmul.f32 %v2800, %v2804
        %v2811 = vld [vmem:[%s29] sm:$0x3]
        %v2813 = vperm.slane %v2811, 0
        %v2814 = vperm.slane %v2811, 1
        %v2817 = vadd.f32 %v2807, %v2813
        %v2818 = vadd.f32 %v2808, %v2814
        %v2819 = vadd.f32 %v2809, %v2813
        %v2820 = vadd.f32 %v2810, %v2814
        %v2821 = vld [vmem:[%s31] sm:$0xff]
        %v2822 = vld [vmem:[%s31 + $0x8] sm:$0xff]
        %v2823 = vld [vmem:[%s31 + $0x10] sm:$0xff]
        %v2824 = vld [vmem:[%s31 + $0x18] sm:$0xff]
        %v2825 = vld [vmem:[%s31 + $0x20] sm:$0xff]
        %v2826 = vld [vmem:[%s31 + $0x28] sm:$0xff]
        %v2827 = vld [vmem:[%s31 + $0x30] sm:$0xff]
        %v2828 = vld [vmem:[%s31 + $0x38] sm:$0xff]
        %v2829 = vld [vmem:[%s31 + $0x40] sm:$0xff]
        %v2830 = vld [vmem:[%s31 + $0x48] sm:$0xff]
        %v2831 = vld [vmem:[%s31 + $0x50] sm:$0xff]
        %v2832 = vld [vmem:[%s31 + $0x58] sm:$0xff]
        %v2833 = vld [vmem:[%s31 + $0x60] sm:$0xff]
        %v2834 = vld [vmem:[%s31 + $0x68] sm:$0xff]
        %v2835 = vld [vmem:[%s31 + $0x70] sm:$0xff]
        %v2836 = vld [vmem:[%s31 + $0x78] sm:$0xff]
        %v2837 = vld [vmem:[%s31 + $0x80] sm:$0xff]
        %v2838 = vld [vmem:[%s31 + $0x88] sm:$0xff]
        %v2839 = vld [vmem:[%s31 + $0x90] sm:$0xff]
        %v2840 = vld [vmem:[%s31 + $0x98] sm:$0xff]
        %s2841 = scalar_lea.vmem %s31, 160
        %v2842 = vld [vmem:[%s2841] sm:$0xff]
        %v2843 = vld [vmem:[%s2841 + $0x8] sm:$0xff]
        %v2844 = vld [vmem:[%s2841 + $0x10] sm:$0xff]
        %v2845 = vld [vmem:[%s2841 + $0x18] sm:$0xff]
        %v2846 = vld [vmem:[%s2841 + $0x20] sm:$0xff]
        %v2847 = vld [vmem:[%s2841 + $0x28] sm:$0xff]
        %v2848 = vld [vmem:[%s2841 + $0x30] sm:$0xff]
        %v2849 = vld [vmem:[%s2841 + $0x38] sm:$0xff]
        %v2850 = vld [vmem:[%s2841 + $0x40] sm:$0xff]
        %v2851 = vld [vmem:[%s2841 + $0x48] sm:$0xff]
        %v2852 = vld [vmem:[%s2841 + $0x50] sm:$0xff]
        %v2853 = vld [vmem:[%s2841 + $0x58] sm:$0xff]
        %v2854 = vld [vmem:[%s2841 + $0x60] sm:$0xff]
        %v2855 = vld [vmem:[%s2841 + $0x68] sm:$0xff]
        %v2856 = vld [vmem:[%s2841 + $0x70] sm:$0xff]
        %v2857 = vld [vmem:[%s2841 + $0x78] sm:$0xff]
        %v2858 = vld [vmem:[%s2841 + $0x80] sm:$0xff]
        %v2859 = vld [vmem:[%s2841 + $0x88] sm:$0xff]
        %v2860 = vld [vmem:[%s2841 + $0x90] sm:$0xff]
        %v2861 = vld [vmem:[%s2841 + $0x98] sm:$0xff]
        %v2866 = vrot.slane %v2817, 1
        %v2867 = vrot.slane %v2819, 1
        %v2868 = vsel %vm942, %v2866, %v2867
        %v2869 = vrot.slane %v2818, 1
        %v2870 = vrot.slane %v2820, 1
        %v2871 = vsel %vm942, %v2869, %v2870
        %vm2873 = vcmask 261120
        %v2874 = vsel %vm2873, %v2871, 0
        %2876 = vmatpush.msra.mxu0 %v2857
        %2877 = vmatpush.msra.mxu0 %v2856
        %2878 = vmatpush.msra.mxu0 %v2855
        %2879 = vmatpush.msra.mxu0 %v2854
        %2880 = vmatpush.msra.mxu0 %v2853
        %2881 = vmatpush.msra.mxu0 %v2852
        %2882 = vmatpush.msra.mxu0 %v2851
        %2883 = vmatpush.msra.mxu0 %v2850
        %2884 = vmatpush.msra.mxu0 %v2849
        %2885 = vmatpush.msra.mxu0 %v2848
        %2886 = vmatpush.msra.mxu0 %v2847
        %2887 = vmatpush.msra.mxu0 %v2846
        %2888 = vmatpush.msra.mxu0 %v2845
        %2889 = vmatpush.msra.mxu0 %v2844
        %2890 = vmatpush.msra.mxu0 %v2843
        %2891 = vmatpush.msra.mxu0 %v2842
        %2892 = vmatmul.f32.gmra.mxu0 %v2868
        %v2893 = vpop.f32.mrf.mxu0
        %v2894 = vadd.f32 0.0, %v2893
        %2895 = vdwg.mxu0
        %2896 = vmatpush.msra.mxu0 0.0
        %2897 = vmatpush.msra.mxu0 0.0
        %2898 = vmatpush.msra.mxu0 0.0
        %2899 = vmatpush.msra.mxu0 0.0
        %2900 = vmatpush.msra.mxu0 0.0
        %2901 = vmatpush.msra.mxu0 0.0
        %2902 = vmatpush.msra.mxu0 0.0
        %2903 = vmatpush.msra.mxu0 0.0
        %2904 = vmatpush.msra.mxu0 0.0
        %2905 = vmatpush.msra.mxu0 0.0
        %2906 = vmatpush.msra.mxu0 0.0
        %2907 = vmatpush.msra.mxu0 0.0
        %2908 = vmatpush.msra.mxu0 %v2861
        %2909 = vmatpush.msra.mxu0 %v2860
        %2910 = vmatpush.msra.mxu0 %v2859
        %2911 = vmatpush.msra.mxu0 %v2858
        %2912 = vmatmul.f32.gmra.mxu0 %v2874
        %v2913 = vpop.f32.mrf.mxu0
        %v2914 = vadd.f32 %v2894, %v2913
        %2915 = vdwg.mxu0
        %v2916 = vsel %vm2873, %v2818, 0
        %2918 = vmatpush.msra.mxu0 %v2836
        %2919 = vmatpush.msra.mxu0 %v2835
        %2920 = vmatpush.msra.mxu0 %v2834
        %2921 = vmatpush.msra.mxu0 %v2833
        %2922 = vmatpush.msra.mxu0 %v2832
        %2923 = vmatpush.msra.mxu0 %v2831
        %2924 = vmatpush.msra.mxu0 %v2830
        %2925 = vmatpush.msra.mxu0 %v2829
        %2926 = vmatpush.msra.mxu0 %v2828
        %2927 = vmatpush.msra.mxu0 %v2827
        %2928 = vmatpush.msra.mxu0 %v2826
        %2929 = vmatpush.msra.mxu0 %v2825
        %2930 = vmatpush.msra.mxu0 %v2824
        %2931 = vmatpush.msra.mxu0 %v2823
        %2932 = vmatpush.msra.mxu0 %v2822
        %2933 = vmatpush.msra.mxu0 %v2821
        %2934 = vmatmul.f32.gmra.mxu0 %v2817
        %v2935 = vpop.f32.mrf.mxu0
        %v2936 = vadd.f32 %v2914, %v2935
        %2937 = vdwg.mxu0
        %2938 = vmatpush.msra.mxu0 0.0
        %2939 = vmatpush.msra.mxu0 0.0
        %2940 = vmatpush.msra.mxu0 0.0
        %2941 = vmatpush.msra.mxu0 0.0
        %2942 = vmatpush.msra.mxu0 0.0
        %2943 = vmatpush.msra.mxu0 0.0
        %2944 = vmatpush.msra.mxu0 0.0
        %2945 = vmatpush.msra.mxu0 0.0
        %2946 = vmatpush.msra.mxu0 0.0
        %2947 = vmatpush.msra.mxu0 0.0
        %2948 = vmatpush.msra.mxu0 0.0
        %2949 = vmatpush.msra.mxu0 0.0
        %2950 = vmatpush.msra.mxu0 %v2840
        %2951 = vmatpush.msra.mxu0 %v2839
        %2952 = vmatpush.msra.mxu0 %v2838
        %2953 = vmatpush.msra.mxu0 %v2837
        %2954 = vmatmul.f32.gmra.mxu0 %v2916
        %v2955 = vpop.f32.mrf.mxu0
        %v2956 = vadd.f32 %v2936, %v2955
        %2957 = vdwg.mxu0
        %s2958 = scalar_lea.vmem %s31, 320
        %v2959 = vld [vmem:[%s2958] sm:$0xff]
        %v2960 = vld [vmem:[%s2958 + $0x8] sm:$0xff]
        %v2961 = vld [vmem:[%s2958 + $0x10] sm:$0xff]
        %v2962 = vld [vmem:[%s2958 + $0x18] sm:$0xff]
        %v2963 = vld [vmem:[%s2958 + $0x20] sm:$0xff]
        %v2964 = vld [vmem:[%s2958 + $0x28] sm:$0xff]
        %v2965 = vld [vmem:[%s2958 + $0x30] sm:$0xff]
        %v2966 = vld [vmem:[%s2958 + $0x38] sm:$0xff]
        %v2967 = vld [vmem:[%s2958 + $0x40] sm:$0xff]
        %v2968 = vld [vmem:[%s2958 + $0x48] sm:$0xff]
        %v2969 = vld [vmem:[%s2958 + $0x50] sm:$0xff]
        %v2970 = vld [vmem:[%s2958 + $0x58] sm:$0xff]
        %v2971 = vld [vmem:[%s2958 + $0x60] sm:$0xff]
        %v2972 = vld [vmem:[%s2958 + $0x68] sm:$0xff]
        %v2973 = vld [vmem:[%s2958 + $0x70] sm:$0xff]
        %v2974 = vld [vmem:[%s2958 + $0x78] sm:$0xff]
        %v2975 = vld [vmem:[%s2958 + $0x80] sm:$0xff]
        %v2976 = vld [vmem:[%s2958 + $0x88] sm:$0xff]
        %v2977 = vld [vmem:[%s2958 + $0x90] sm:$0xff]
        %v2978 = vld [vmem:[%s2958 + $0x98] sm:$0xff]
        %v2979 = vrot.slane %v2817, 2
        %v2980 = vrot.slane %v2819, 2
        %v2981 = vsel %vm1105, %v2979, %v2980
        %v2982 = vrot.slane %v2818, 2
        %v2983 = vrot.slane %v2820, 2
        %v2984 = vsel %vm1105, %v2982, %v2983
        %v2986 = vsel %vm2873, %v2984, 0
        %2988 = vmatpush.msra.mxu0 %v2974
        %2989 = vmatpush.msra.mxu0 %v2973
        %2990 = vmatpush.msra.mxu0 %v2972
        %2991 = vmatpush.msra.mxu0 %v2971
        %2992 = vmatpush.msra.mxu0 %v2970
        %2993 = vmatpush.msra.mxu0 %v2969
        %2994 = vmatpush.msra.mxu0 %v2968
        %2995 = vmatpush.msra.mxu0 %v2967
        %2996 = vmatpush.msra.mxu0 %v2966
        %2997 = vmatpush.msra.mxu0 %v2965
        %2998 = vmatpush.msra.mxu0 %v2964
        %2999 = vmatpush.msra.mxu0 %v2963
        %3000 = vmatpush.msra.mxu0 %v2962
        %3001 = vmatpush.msra.mxu0 %v2961
        %3002 = vmatpush.msra.mxu0 %v2960
        %3003 = vmatpush.msra.mxu0 %v2959
        %3004 = vmatmul.f32.gmra.mxu0 %v2981
        %v3005 = vpop.f32.mrf.mxu0
        %v3006 = vadd.f32 0.0, %v3005
        %3007 = vdwg.mxu0
        %3008 = vmatpush.msra.mxu0 0.0
        %3009 = vmatpush.msra.mxu0 0.0
        %3010 = vmatpush.msra.mxu0 0.0
        %3011 = vmatpush.msra.mxu0 0.0
        %3012 = vmatpush.msra.mxu0 0.0
        %3013 = vmatpush.msra.mxu0 0.0
        %3014 = vmatpush.msra.mxu0 0.0
        %3015 = vmatpush.msra.mxu0 0.0
        %3016 = vmatpush.msra.mxu0 0.0
        %3017 = vmatpush.msra.mxu0 0.0
        %3018 = vmatpush.msra.mxu0 0.0
        %3019 = vmatpush.msra.mxu0 0.0
        %3020 = vmatpush.msra.mxu0 %v2978
        %3021 = vmatpush.msra.mxu0 %v2977
        %3022 = vmatpush.msra.mxu0 %v2976
        %3023 = vmatpush.msra.mxu0 %v2975
        %3024 = vmatmul.f32.gmra.mxu0 %v2986
        %v3025 = vpop.f32.mrf.mxu0
        %v3026 = vadd.f32 %v3006, %v3025
        %3027 = vdwg.mxu0
        %v3028 = vadd.f32 %v2956, %v3026
        %v3029 = vmax.f32 %v3028, 0.0
        %v3030 = vld [vmem:[%s33] sm:$0x1]
        %v3032 = vperm.slane %v3030, 0
        %v3034 = vmul.f32 %v3029, %v3032
        %v3035 = vld [vmem:[%s35] sm:$0x1]
        %v3037 = vperm.slane %v3035, 0
        %v3039 = vadd.f32 %v3034, %v3037
        %v3040 = vld [vmem:[%s37] sm:$0xff]
        %v3041 = vld [vmem:[%s37 + $0x8] sm:$0xff]
        %v3042 = vld [vmem:[%s37 + $0x10] sm:$0xff]
        %v3043 = vld [vmem:[%s37 + $0x18] sm:$0xff]
        %v3044 = vld [vmem:[%s37 + $0x20] sm:$0xff]
        %v3045 = vld [vmem:[%s37 + $0x28] sm:$0xff]
        %v3046 = vld [vmem:[%s37 + $0x30] sm:$0xff]
        %v3047 = vld [vmem:[%s37 + $0x38] sm:$0xff]
        %v3048 = vld [vmem:[%s37 + $0x40] sm:$0xff]
        %v3049 = vld [vmem:[%s37 + $0x48] sm:$0xff]
        %v3050 = vld [vmem:[%s37 + $0x50] sm:$0xff]
        %v3051 = vld [vmem:[%s37 + $0x58] sm:$0xff]
        %v3052 = vld [vmem:[%s37 + $0x60] sm:$0xff]
        %v3053 = vld [vmem:[%s37 + $0x68] sm:$0xff]
        %v3054 = vld [vmem:[%s37 + $0x70] sm:$0xff]
        %v3055 = vld [vmem:[%s37 + $0x78] sm:$0xff]
        %v3057 = vsel %vm2435, %v3039, 0
        %3059 = vmatpush.msra.mxu0 0.0
        %3060 = vmatpush.msra.mxu0 0.0
        %3061 = vmatpush.msra.mxu0 0.0
        %3062 = vmatpush.msra.mxu0 0.0
        %3063 = vmatpush.msra.mxu0 0.0
        %3064 = vmatpush.msra.mxu0 0.0
        %3065 = vmatpush.msra.mxu0 0.0
        %3066 = vmatpush.msra.mxu0 0.0
        %3067 = vmatpush.msra.mxu0 %v3054
        %3068 = vmatpush.msra.mxu0 %v3052
        %3069 = vmatpush.msra.mxu0 %v3050
        %3070 = vmatpush.msra.mxu0 %v3048
        %3071 = vmatpush.msra.mxu0 %v3046
        %3072 = vmatpush.msra.mxu0 %v3044
        %3073 = vmatpush.msra.mxu0 %v3042
        %3074 = vmatpush.msra.mxu0 %v3040
        %3075 = vmatmul.f32.gmra.mxu0 %v3057
        %v3076 = vpop.f32.mrf.mxu0
        %v3077 = vadd.f32 0.0, %v3076
        %3078 = vdwg.mxu0
        %3079 = vmatpush.msra.mxu0 0.0
        %3080 = vmatpush.msra.mxu0 0.0
        %3081 = vmatpush.msra.mxu0 0.0
        %3082 = vmatpush.msra.mxu0 0.0
        %3083 = vmatpush.msra.mxu0 0.0
        %3084 = vmatpush.msra.mxu0 0.0
        %3085 = vmatpush.msra.mxu0 0.0
        %3086 = vmatpush.msra.mxu0 0.0
        %3087 = vmatpush.msra.mxu0 %v3055
        %3088 = vmatpush.msra.mxu0 %v3053
        %3089 = vmatpush.msra.mxu0 %v3051
        %3090 = vmatpush.msra.mxu0 %v3049
        %3091 = vmatpush.msra.mxu0 %v3047
        %3092 = vmatpush.msra.mxu0 %v3045
        %3093 = vmatpush.msra.mxu0 %v3043
        %3094 = vmatpush.msra.mxu0 %v3041
        %3095 = vmatmul.f32.gmra.mxu0 %v3057
        %v3096 = vpop.f32.mrf.mxu0
        %v3097 = vadd.f32 0.0, %v3096
        %3098 = vdwg.mxu0
        %v3099 = vld [vmem:[%s39] sm:$0x1f]
        %vm3100 = vcmask 64512
        %v3102 = vsel %vm3100, %v3099, 0
        %3104 = vmatpush.msra.mxu0 0.0
        %3105 = vmatpush.msra.mxu0 0.0
        %3106 = vmatpush.msra.mxu0 0.0
        %3107 = vmatpush.msra.mxu0 0.0
        %3108 = vmatpush.msra.mxu0 0.0
        %3109 = vmatpush.msra.mxu0 0.0
        %3110 = vmatpush.msra.mxu0 0.0
        %3111 = vmatpush.msra.mxu0 0.0
        %3112 = vmatpush.msra.mxu0 0.0
        %3113 = vmatpush.msra.mxu0 0.0
        %3114 = vmatpush.msra.mxu0 0.0
        %3115 = vmatpush.msra.mxu0 0.0
        %3116 = vmatpush.msra.mxu0 0.0
        %3117 = vmatpush.msra.mxu0 0.0
        %3118 = vmatpush.msra.mxu0 0.0
        %3119 = vmatpush.msra.mxu0 %v3077
        %3120 = vmatmul.f32.gmra.mxu0 %v3102
        %v3121 = vpop.f32.mrf.mxu0
        %v3122 = vadd.f32 0.0, %v3121
        %3123 = vdwg.mxu0
        %3124 = vmatpush.msra.mxu0 0.0
        %3125 = vmatpush.msra.mxu0 0.0
        %3126 = vmatpush.msra.mxu0 0.0
        %3127 = vmatpush.msra.mxu0 0.0
        %3128 = vmatpush.msra.mxu0 0.0
        %3129 = vmatpush.msra.mxu0 0.0
        %3130 = vmatpush.msra.mxu0 0.0
        %3131 = vmatpush.msra.mxu0 0.0
        %3132 = vmatpush.msra.mxu0 0.0
        %3133 = vmatpush.msra.mxu0 0.0
        %3134 = vmatpush.msra.mxu0 0.0
        %3135 = vmatpush.msra.mxu0 0.0
        %3136 = vmatpush.msra.mxu0 0.0
        %3137 = vmatpush.msra.mxu0 0.0
        %3138 = vmatpush.msra.mxu0 0.0
        %3139 = vmatpush.msra.mxu0 %v3097
        %3140 = vmatmul.f32.gmra.mxu0 %v3102
        %v3141 = vpop.f32.mrf.mxu0
        %v3142 = vadd.f32 0.0, %v3141
        %3143 = vdwg.mxu0
        %v3144 = vld [vmem:[%s41] sm:$0x1f]
        %v3146 = vsel %vm3100, %v3144, 0
        %3148 = vmatpush.msra.mxu0 0.0
        %3149 = vmatpush.msra.mxu0 0.0
        %3150 = vmatpush.msra.mxu0 0.0
        %3151 = vmatpush.msra.mxu0 0.0
        %3152 = vmatpush.msra.mxu0 0.0
        %3153 = vmatpush.msra.mxu0 0.0
        %3154 = vmatpush.msra.mxu0 0.0
        %3155 = vmatpush.msra.mxu0 0.0
        %3156 = vmatpush.msra.mxu0 0.0
        %3157 = vmatpush.msra.mxu0 0.0
        %3158 = vmatpush.msra.mxu0 0.0
        %3159 = vmatpush.msra.mxu0 0.0
        %3160 = vmatpush.msra.mxu0 0.0
        %3161 = vmatpush.msra.mxu0 0.0
        %3162 = vmatpush.msra.mxu0 0.0
        %3163 = vmatpush.msra.mxu0 %v3077
        %3164 = vmatmul.f32.gmra.mxu0 %v3146
        %v3165 = vpop.f32.mrf.mxu0
        %v3166 = vadd.f32 0.0, %v3165
        %3167 = vdwg.mxu0
        %3168 = vmatpush.msra.mxu0 0.0
        %3169 = vmatpush.msra.mxu0 0.0
        %3170 = vmatpush.msra.mxu0 0.0
        %3171 = vmatpush.msra.mxu0 0.0
        %3172 = vmatpush.msra.mxu0 0.0
        %3173 = vmatpush.msra.mxu0 0.0
        %3174 = vmatpush.msra.mxu0 0.0
        %3175 = vmatpush.msra.mxu0 0.0
        %3176 = vmatpush.msra.mxu0 0.0
        %3177 = vmatpush.msra.mxu0 0.0
        %3178 = vmatpush.msra.mxu0 0.0
        %3179 = vmatpush.msra.mxu0 0.0
        %3180 = vmatpush.msra.mxu0 0.0
        %3181 = vmatpush.msra.mxu0 0.0
        %3182 = vmatpush.msra.mxu0 0.0
        %3183 = vmatpush.msra.mxu0 %v3097
        %3184 = vmatmul.f32.gmra.mxu0 %v3146
        %v3185 = vpop.f32.mrf.mxu0
        %v3186 = vadd.f32 0.0, %v3185
        %3187 = vdwg.mxu0
        %v3188 = vmax.f32 %v3122, %v3166
        %v3189 = vmax.f32 %v3142, %v3186
        %v3190 = vld [vmem:[%s43] sm:$0xff]
        %v3191 = vld [vmem:[%s43 + $0x8] sm:$0xff]
        %v3192 = vld [vmem:[%s43 + $0x10] sm:$0xff]
        %v3193 = vld [vmem:[%s43 + $0x18] sm:$0xff]
        %v3194 = vld [vmem:[%s43 + $0x20] sm:$0xff]
        %v3195 = vld [vmem:[%s43 + $0x28] sm:$0xff]
        %v3196 = vld [vmem:[%s43 + $0x30] sm:$0xff]
        %v3197 = vld [vmem:[%s43 + $0x38] sm:$0xff]
        %v3198 = vld [vmem:[%s43 + $0x40] sm:$0xff]
        %v3199 = vld [vmem:[%s43 + $0x48] sm:$0xff]
        %v3200 = vld [vmem:[%s43 + $0x50] sm:$0xff]
        %v3201 = vld [vmem:[%s43 + $0x58] sm:$0xff]
        %v3202 = vld [vmem:[%s43 + $0x60] sm:$0xff]
        %v3203 = vld [vmem:[%s43 + $0x68] sm:$0xff]
        %v3204 = vld [vmem:[%s43 + $0x70] sm:$0xff]
        %v3205 = vld [vmem:[%s43 + $0x78] sm:$0xff]
        %v3206 = vld [vmem:[%s43 + $0x80] sm:$0xff]
        %v3207 = vld [vmem:[%s43 + $0x88] sm:$0xff]
        %v3208 = vld [vmem:[%s43 + $0x90] sm:$0xff]
        %v3209 = vld [vmem:[%s43 + $0x98] sm:$0xff]
        %v3211 = vsel %vm2873, %v3189, 0
        %3213 = vmatpush.msra.mxu0 %v3205
        %3214 = vmatpush.msra.mxu0 %v3204
        %3215 = vmatpush.msra.mxu0 %v3203
        %3216 = vmatpush.msra.mxu0 %v3202
        %3217 = vmatpush.msra.mxu0 %v3201
        %3218 = vmatpush.msra.mxu0 %v3200
        %3219 = vmatpush.msra.mxu0 %v3199
        %3220 = vmatpush.msra.mxu0 %v3198
        %3221 = vmatpush.msra.mxu0 %v3197
        %3222 = vmatpush.msra.mxu0 %v3196
        %3223 = vmatpush.msra.mxu0 %v3195
        %3224 = vmatpush.msra.mxu0 %v3194
        %3225 = vmatpush.msra.mxu0 %v3193
        %3226 = vmatpush.msra.mxu0 %v3192
        %3227 = vmatpush.msra.mxu0 %v3191
        %3228 = vmatpush.msra.mxu0 %v3190
        %3229 = vmatmul.f32.gmra.mxu0 %v3188
        %v3230 = vpop.f32.mrf.mxu0
        %v3231 = vadd.f32 0.0, %v3230
        %3232 = vdwg.mxu0
        %3233 = vmatpush.msra.mxu0 0.0
        %3234 = vmatpush.msra.mxu0 0.0
        %3235 = vmatpush.msra.mxu0 0.0
        %3236 = vmatpush.msra.mxu0 0.0
        %3237 = vmatpush.msra.mxu0 0.0
        %3238 = vmatpush.msra.mxu0 0.0
        %3239 = vmatpush.msra.mxu0 0.0
        %3240 = vmatpush.msra.mxu0 0.0
        %3241 = vmatpush.msra.mxu0 0.0
        %3242 = vmatpush.msra.mxu0 0.0
        %3243 = vmatpush.msra.mxu0 0.0
        %3244 = vmatpush.msra.mxu0 0.0
        %3245 = vmatpush.msra.mxu0 %v3209
        %3246 = vmatpush.msra.mxu0 %v3208
        %3247 = vmatpush.msra.mxu0 %v3207
        %3248 = vmatpush.msra.mxu0 %v3206
        %3249 = vmatmul.f32.gmra.mxu0 %v3211
        %v3250 = vpop.f32.mrf.mxu0
        %v3251 = vadd.f32 %v3231, %v3250
        %3252 = vdwg.mxu0
        %v3253 = vld [vmem:[%s45] sm:$0xff]
        %v3254 = vld [vmem:[%s45 + $0x8] sm:$0xff]
        %v3255 = vld [vmem:[%s45 + $0x10] sm:$0xff]
        %v3256 = vld [vmem:[%s45 + $0x18] sm:$0xff]
        %v3257 = vld [vmem:[%s45 + $0x20] sm:$0xff]
        %v3258 = vld [vmem:[%s45 + $0x28] sm:$0xff]
        %v3259 = vld [vmem:[%s45 + $0x30] sm:$0xff]
        %v3260 = vld [vmem:[%s45 + $0x38] sm:$0xff]
        %v3261 = vld [vmem:[%s45 + $0x40] sm:$0xff]
        %v3262 = vld [vmem:[%s45 + $0x48] sm:$0xff]
        %v3263 = vld [vmem:[%s45 + $0x50] sm:$0xff]
        %v3264 = vld [vmem:[%s45 + $0x58] sm:$0xff]
        %v3265 = vld [vmem:[%s45 + $0x60] sm:$0xff]
        %v3266 = vld [vmem:[%s45 + $0x68] sm:$0xff]
        %v3267 = vld [vmem:[%s45 + $0x70] sm:$0xff]
        %v3268 = vld [vmem:[%s45 + $0x78] sm:$0xff]
        %v3269 = vld [vmem:[%s45 + $0x80] sm:$0xff]
        %v3270 = vld [vmem:[%s45 + $0x88] sm:$0xff]
        %v3271 = vld [vmem:[%s45 + $0x90] sm:$0xff]
        %v3272 = vld [vmem:[%s45 + $0x98] sm:$0xff]
        %3273 = vmatpush.msra.mxu0 %v3268
        %3274 = vmatpush.msra.mxu0 %v3267
        %3275 = vmatpush.msra.mxu0 %v3266
        %3276 = vmatpush.msra.mxu0 %v3265
        %3277 = vmatpush.msra.mxu0 %v3264
        %3278 = vmatpush.msra.mxu0 %v3263
        %3279 = vmatpush.msra.mxu0 %v3262
        %3280 = vmatpush.msra.mxu0 %v3261
        %3281 = vmatpush.msra.mxu0 %v3260
        %3282 = vmatpush.msra.mxu0 %v3259
        %3283 = vmatpush.msra.mxu0 %v3258
        %3284 = vmatpush.msra.mxu0 %v3257
        %3285 = vmatpush.msra.mxu0 %v3256
        %3286 = vmatpush.msra.mxu0 %v3255
        %3287 = vmatpush.msra.mxu0 %v3254
        %3288 = vmatpush.msra.mxu0 %v3253
        %3289 = vmatmul.f32.gmra.mxu0 %v3188
        %v3290 = vpop.f32.mrf.mxu0
        %v3291 = vadd.f32 0.0, %v3290
        %3292 = vdwg.mxu0
        %3293 = vmatpush.msra.mxu0 0.0
        %3294 = vmatpush.msra.mxu0 0.0
        %3295 = vmatpush.msra.mxu0 0.0
        %3296 = vmatpush.msra.mxu0 0.0
        %3297 = vmatpush.msra.mxu0 0.0
        %3298 = vmatpush.msra.mxu0 0.0
        %3299 = vmatpush.msra.mxu0 0.0
        %3300 = vmatpush.msra.mxu0 0.0
        %3301 = vmatpush.msra.mxu0 0.0
        %3302 = vmatpush.msra.mxu0 0.0
        %3303 = vmatpush.msra.mxu0 0.0
        %3304 = vmatpush.msra.mxu0 0.0
        %3305 = vmatpush.msra.mxu0 %v3272
        %3306 = vmatpush.msra.mxu0 %v3271
        %3307 = vmatpush.msra.mxu0 %v3270
        %3308 = vmatpush.msra.mxu0 %v3269
        %3309 = vmatmul.f32.gmra.mxu0 %v3211
        %v3310 = vpop.f32.mrf.mxu0
        %v3311 = vadd.f32 %v3291, %v3310
        %3312 = vdwg.mxu0
        %v3313 = vmax.f32 %v3251, %v3311
        %v3314 = vld [vmem:[%s47] sm:$0xff]
        %v3315 = vld [vmem:[%s47 + $0x8] sm:$0xff]
        %v3316 = vld [vmem:[%s47 + $0x10] sm:$0xff]
        %v3317 = vld [vmem:[%s47 + $0x18] sm:$0xff]
        %v3318 = vld [vmem:[%s47 + $0x20] sm:$0xff]
        %v3319 = vld [vmem:[%s47 + $0x28] sm:$0xff]
        %v3320 = vld [vmem:[%s47 + $0x30] sm:$0xff]
        %v3321 = vld [vmem:[%s47 + $0x38] sm:$0xff]
        %v3322 = vld [vmem:[%s47 + $0x40] sm:$0xff]
        %v3323 = vld [vmem:[%s47 + $0x48] sm:$0xff]
        %s3324 = scalar_lea.vmem %s47, 80
        %v3325 = vld [vmem:[%s3324] sm:$0xff]
        %v3326 = vld [vmem:[%s3324 + $0x8] sm:$0xff]
        %v3327 = vld [vmem:[%s3324 + $0x10] sm:$0xff]
        %v3328 = vld [vmem:[%s3324 + $0x18] sm:$0xff]
        %v3329 = vld [vmem:[%s3324 + $0x20] sm:$0xff]
        %v3330 = vld [vmem:[%s3324 + $0x28] sm:$0xff]
        %v3331 = vld [vmem:[%s3324 + $0x30] sm:$0xff]
        %v3332 = vld [vmem:[%s3324 + $0x38] sm:$0xff]
        %v3333 = vld [vmem:[%s3324 + $0x40] sm:$0xff]
        %v3334 = vld [vmem:[%s3324 + $0x48] sm:$0xff]
        %v3336 = vrot.slane %v3313, 1
        %v3337 = vsel %vm1411, %v3336, 0
        %3339 = vmatpush.msra.mxu0 0.0
        %3340 = vmatpush.msra.mxu0 0.0
        %3341 = vmatpush.msra.mxu0 0.0
        %3342 = vmatpush.msra.mxu0 0.0
        %3343 = vmatpush.msra.mxu0 0.0
        %3344 = vmatpush.msra.mxu0 0.0
        %3345 = vmatpush.msra.mxu0 %v3334
        %3346 = vmatpush.msra.mxu0 %v3333
        %3347 = vmatpush.msra.mxu0 %v3332
        %3348 = vmatpush.msra.mxu0 %v3331
        %3349 = vmatpush.msra.mxu0 %v3330
        %3350 = vmatpush.msra.mxu0 %v3329
        %3351 = vmatpush.msra.mxu0 %v3328
        %3352 = vmatpush.msra.mxu0 %v3327
        %3353 = vmatpush.msra.mxu0 %v3326
        %3354 = vmatpush.msra.mxu0 %v3325
        %3355 = vmatmul.f32.gmra.mxu0 %v3337
        %v3356 = vpop.f32.mrf.mxu0
        %v3357 = vadd.f32 0.0, %v3356
        %3358 = vdwg.mxu0
        %v3359 = vsel %vm1411, %v3313, 0
        %3361 = vmatpush.msra.mxu0 0.0
        %3362 = vmatpush.msra.mxu0 0.0
        %3363 = vmatpush.msra.mxu0 0.0
        %3364 = vmatpush.msra.mxu0 0.0
        %3365 = vmatpush.msra.mxu0 0.0
        %3366 = vmatpush.msra.mxu0 0.0
        %3367 = vmatpush.msra.mxu0 %v3323
        %3368 = vmatpush.msra.mxu0 %v3322
        %3369 = vmatpush.msra.mxu0 %v3321
        %3370 = vmatpush.msra.mxu0 %v3320
        %3371 = vmatpush.msra.mxu0 %v3319
        %3372 = vmatpush.msra.mxu0 %v3318
        %3373 = vmatpush.msra.mxu0 %v3317
        %3374 = vmatpush.msra.mxu0 %v3316
        %3375 = vmatpush.msra.mxu0 %v3315
        %3376 = vmatpush.msra.mxu0 %v3314
        %3377 = vmatmul.f32.gmra.mxu0 %v3359
        %v3378 = vpop.f32.mrf.mxu0
        %v3379 = vadd.f32 %v3357, %v3378
        %3380 = vdwg.mxu0
        %s3381 = scalar_lea.vmem %s47, 160
        %v3382 = vld [vmem:[%s3381] sm:$0xff]
        %v3383 = vld [vmem:[%s3381 + $0x8] sm:$0xff]
        %v3384 = vld [vmem:[%s3381 + $0x10] sm:$0xff]
        %v3385 = vld [vmem:[%s3381 + $0x18] sm:$0xff]
        %v3386 = vld [vmem:[%s3381 + $0x20] sm:$0xff]
        %v3387 = vld [vmem:[%s3381 + $0x28] sm:$0xff]
        %v3388 = vld [vmem:[%s3381 + $0x30] sm:$0xff]
        %v3389 = vld [vmem:[%s3381 + $0x38] sm:$0xff]
        %v3390 = vld [vmem:[%s3381 + $0x40] sm:$0xff]
        %v3391 = vld [vmem:[%s3381 + $0x48] sm:$0xff]
        %v3392 = vrot.slane %v3313, 2
        %v3393 = vsel %vm1411, %v3392, 0
        %3395 = vmatpush.msra.mxu0 0.0
        %3396 = vmatpush.msra.mxu0 0.0
        %3397 = vmatpush.msra.mxu0 0.0
        %3398 = vmatpush.msra.mxu0 0.0
        %3399 = vmatpush.msra.mxu0 0.0
        %3400 = vmatpush.msra.mxu0 0.0
        %3401 = vmatpush.msra.mxu0 %v3391
        %3402 = vmatpush.msra.mxu0 %v3390
        %3403 = vmatpush.msra.mxu0 %v3389
        %3404 = vmatpush.msra.mxu0 %v3388
        %3405 = vmatpush.msra.mxu0 %v3387
        %3406 = vmatpush.msra.mxu0 %v3386
        %3407 = vmatpush.msra.mxu0 %v3385
        %3408 = vmatpush.msra.mxu0 %v3384
        %3409 = vmatpush.msra.mxu0 %v3383
        %3410 = vmatpush.msra.mxu0 %v3382
        %3411 = vmatmul.f32.gmra.mxu0 %v3393
        %v3412 = vpop.f32.mrf.mxu0
        %v3413 = vadd.f32 0.0, %v3412
        %3414 = vdwg.mxu0
        %v3415 = vadd.f32 %v3379, %v3413
        %v3416 = vmax.f32 %v3415, 0.0
        %v3417 = vld [vmem:[%s49] sm:$0x1]
        %v3419 = vperm.slane %v3417, 0
        %v3421 = vmul.f32 %v3416, %v3419
        %v3422 = vld [vmem:[%s51] sm:$0x1]
        %v3424 = vperm.slane %v3422, 0
        %v3426 = vadd.f32 %v3421, %v3424
        %v3427 = vld [vmem:[%s53] sm:$0xff]
        %v3428 = vld [vmem:[%s53 + $0x8] sm:$0xff]
        %v3429 = vld [vmem:[%s53 + $0x10] sm:$0xff]
        %v3431 = vsel %vm2300, %v3426, 0
        %3433 = vmatpush.msra.mxu0 0.0
        %3434 = vmatpush.msra.mxu0 0.0
        %3435 = vmatpush.msra.mxu0 0.0
        %3436 = vmatpush.msra.mxu0 0.0
        %3437 = vmatpush.msra.mxu0 0.0
        %3438 = vmatpush.msra.mxu0 0.0
        %3439 = vmatpush.msra.mxu0 0.0
        %3440 = vmatpush.msra.mxu0 0.0
        %3441 = vmatpush.msra.mxu0 0.0
        %3442 = vmatpush.msra.mxu0 0.0
        %3443 = vmatpush.msra.mxu0 0.0
        %3444 = vmatpush.msra.mxu0 0.0
        %3445 = vmatpush.msra.mxu0 0.0
        %3446 = vmatpush.msra.mxu0 %v3429
        %3447 = vmatpush.msra.mxu0 %v3428
        %3448 = vmatpush.msra.mxu0 %v3427
        %3449 = vmatmul.f32.gmra.mxu0 %v3431
        %v3450 = vpop.f32.mrf.mxu0
        %v3451 = vadd.f32 0.0, %v3450
        %3452 = vdwg.mxu0
        %v3453 = vld [vmem:[%s57] sm:$0x1]
        %v3454 = vld [vmem:[%s55] sm:$0xff]
        %v3455 = vld [vmem:[%s55 + $0x8] sm:$0xff]
        %v3456 = vld [vmem:[%s55 + $0x10] sm:$0xff]
        %v3457 = vld [vmem:[%s55 + $0x18] sm:$0x3f]
        %vm3458 = vcmask 244736
        %v3460 = vsel %vm3458, %v3451, 0
        %v3463 = vsel %vm1105, %v3457, 0
        %3465 = vmatpush.msra.mxu0 0.0
        %3466 = vmatpush.msra.mxu0 0.0
        %3467 = vmatpush.msra.mxu0 0.0
        %3468 = vmatpush.msra.mxu0 0.0
        %3469 = vmatpush.msra.mxu0 0.0
        %3470 = vmatpush.msra.mxu0 0.0
        %3471 = vmatpush.msra.mxu0 0.0
        %3472 = vmatpush.msra.mxu0 0.0
        %3473 = vmatpush.msra.mxu0 0.0
        %3474 = vmatpush.msra.mxu0 0.0
        %3475 = vmatpush.msra.mxu0 0.0
        %3476 = vmatpush.msra.mxu0 0.0
        %3477 = vmatpush.msra.mxu0 %v3463
        %3478 = vmatpush.msra.mxu0 %v3456
        %3479 = vmatpush.msra.mxu0 %v3455
        %3480 = vmatpush.msra.mxu0 %v3454
        %3481 = vmatmul.f32.gmra.mxu0 %v3460
        %v3482 = vpop.f32.mrf.mxu0
        %v3483 = vadd.f32 0.0, %v3482
        %3484 = vdwg.mxu0
        %v3485 = vadd.f32 %v3453, %v3483
        %s3486 = scalar_lea.vmem %s55, 32
        %v3487 = vld [vmem:[%s3486] sm:$0xff]
        %v3488 = vld [vmem:[%s3486 + $0x8] sm:$0xff]
        %v3489 = vld [vmem:[%s3486 + $0x10] sm:$0xff]
        %v3490 = vld [vmem:[%s3486 + $0x18] sm:$0x3f]
        %v3491 = vrot.slane %v3451, 1
        %v3492 = vsel %vm3458, %v3491, 0
        %v3495 = vsel %vm1105, %v3490, 0
        %3497 = vmatpush.msra.mxu0 0.0
        %3498 = vmatpush.msra.mxu0 0.0
        %3499 = vmatpush.msra.mxu0 0.0
        %3500 = vmatpush.msra.mxu0 0.0
        %3501 = vmatpush.msra.mxu0 0.0
        %3502 = vmatpush.msra.mxu0 0.0
        %3503 = vmatpush.msra.mxu0 0.0
        %3504 = vmatpush.msra.mxu0 0.0
        %3505 = vmatpush.msra.mxu0 0.0
        %3506 = vmatpush.msra.mxu0 0.0
        %3507 = vmatpush.msra.mxu0 0.0
        %3508 = vmatpush.msra.mxu0 0.0
        %3509 = vmatpush.msra.mxu0 %v3495
        %3510 = vmatpush.msra.mxu0 %v3489
        %3511 = vmatpush.msra.mxu0 %v3488
        %3512 = vmatpush.msra.mxu0 %v3487
        %3513 = vmatmul.f32.gmra.mxu0 %v3492
        %v3514 = vpop.f32.mrf.mxu0
        %v3515 = vadd.f32 0.0, %v3514
        %3516 = vdwg.mxu0
        %v3517 = vadd.f32 %v3485, %v3515
        %s3518 = scalar_lea.vmem %s55, 64
        %v3519 = vld [vmem:[%s3518] sm:$0xff]
        %v3520 = vld [vmem:[%s3518 + $0x8] sm:$0xff]
        %v3521 = vld [vmem:[%s3518 + $0x10] sm:$0xff]
        %v3522 = vld [vmem:[%s3518 + $0x18] sm:$0x3f]
        %v3523 = vrot.slane %v3451, 2
        %v3524 = vsel %vm3458, %v3523, 0
        %v3527 = vsel %vm1105, %v3522, 0
        %3529 = vmatpush.msra.mxu0 0.0
        %3530 = vmatpush.msra.mxu0 0.0
        %3531 = vmatpush.msra.mxu0 0.0
        %3532 = vmatpush.msra.mxu0 0.0
        %3533 = vmatpush.msra.mxu0 0.0
        %3534 = vmatpush.msra.mxu0 0.0
        %3535 = vmatpush.msra.mxu0 0.0
        %3536 = vmatpush.msra.mxu0 0.0
        %3537 = vmatpush.msra.mxu0 0.0
        %3538 = vmatpush.msra.mxu0 0.0
        %3539 = vmatpush.msra.mxu0 0.0
        %3540 = vmatpush.msra.mxu0 0.0
        %3541 = vmatpush.msra.mxu0 %v3527
        %3542 = vmatpush.msra.mxu0 %v3521
        %3543 = vmatpush.msra.mxu0 %v3520
        %3544 = vmatpush.msra.mxu0 %v3519
        %3545 = vmatmul.f32.gmra.mxu0 %v3524
        %v3546 = vpop.f32.mrf.mxu0
        %v3547 = vadd.f32 0.0, %v3546
        %3548 = vdwg.mxu0
        %v3549 = vadd.f32 %v3517, %v3547
        %vm3550 = vcmask 73728
        %v3551 = vsel %vm3550, %v3549, -inf
        %3552 = vmax.xlane.f32.xlu0 %v3551
        %v3553 = vpop.xlane.xlu0 %3552
        %v3554 = vsub.f32 %v3549, %v3553
        %v3555 = vmul.f32 %v3554, 1.442695
        %v3556 = vpow.pop %v3555
        %v3557 = vsel %vm3550, %v3556, 0.0
        %3558 = vadd.xlane.f32.xlu0 %v3557
        %v3559 = vpop.xlane.xlu0 %3558
        %v3560 = vlog2.pop %v3559
        %v3561 = vmul.f32 %v3560, 0.6931472
        %v3562 = vsub.f32 %v3554, %v3561
        %3563 = vst.msk [vmem:[%s911] sm:$0x1] %vm3550, %v3562
        %s3564 = sand.u32 %s696, 1
        %s3565 = scalar_lea.sflag [#allocation4], %s3564
        %s3566 = sand.u32 %s696, 1
        %s3567 = scalar_lea.vmem [#allocation5], %s3566
        // Predicated region
        $region141: #{model1_forward.1} parent=135 // pred_check
          %p3568 = pneg %p706
        $region142: #{model1_forward.1} parent=135 // pred_check_branch
          %3570 = sbr.rel (%p3568) target = $region144
        $region143: #{model1_forward.1} parent=135 // pred_region
          %3572 = vsyncadd %s3565, 0
          %s3573 = scalar_lea.hbm %s59, %s74
          %s3575 = sshll.u32 %s3567, 4
          %s3576 = int_to_ptr.vmem [resolvable:$true] %s3575
          %s3577 = sshll.u32 %s3573, 4
          %s3578 = int_to_ptr.hbm [resolvable:$true] %s3577
          %3580 = dma.vmem_to_hbm [thread:$0]  %s3576, 16, %s3578, %s3565
        $region144: #{model1_forward.1} parent=135 // pred_fallthru
          _
      $region136: #{model1_forward.1} parent=5 // pred_fallthru
        _
      %p3581 = scmp.le.s32.totalorder 2, %s69
      // Predicated region
      $region145: #{model1_forward.1} parent=5 // pred_check
        %p3582 = pneg %p3581
      $region146: #{model1_forward.1} parent=5 // pred_check_branch
        %3584 = sbr.rel (%p3582) target = $region148
      $region147: #{model1_forward.1} parent=5 // pred_region
        %s3585 = ssub.s32 %s69, 2
        // Predicated region
        $region149: #{model1_forward.1} parent=147 // pred_check
          %p3586 = pneg %p712
        $region150: #{model1_forward.1} parent=147 // pred_check_branch
          %3588 = sbr.rel (%p3586) target = $region152
        $region151: #{model1_forward.1} parent=147 // pred_region
          %s3589 = sand.u32 %s697, 1
          %s3590 = scalar_lea.sflag [#allocation4], %s3589
          %s3591 = sand.u32 %s697, 1
          %s3592 = scalar_lea.vmem [#allocation5], %s3591
          %3594 = dma.done %s3590, 16
        $region152: #{model1_forward.1} parent=147 // pred_fallthru
          _
      $region148: #{model1_forward.1} parent=5 // pred_fallthru
        _
    $region6: #{model1_forward.1} parent=1 // loop_footer
      %s73 = sadd.s32 1, %s69
    $region7: #{model1_forward.1} parent=1 // loop_footer_branch
      %68 = sbr.rel target = $region3
    $region8: #{model1_forward.1} parent=1 // loop_exit
      _
    %3595 = vsyncpa [#allocation3], 1
    %s3596 = scalar_lea.sflag [#allocation3], 1
    %3597 = vsyncpa %s3596, 1
    %3598 = vsyncpa [#allocation4], 1
    %s3599 = scalar_lea.sflag [#allocation4], 1
    %3600 = vsyncpa %s3599, 1

</llo_original>
